<compile_context>
chip_gen: v6e
topology: v6e:2x2x1
jax: 0.10.0
libtpu: 0.0.40
codegen_flags: <defaults>
</compile_context>

<pallas_src>
import numpy as np
import jax
import jax.numpy as jnp
from jax.experimental import pallas as pl
from jax.experimental.pallas import tpu as pltpu

NUM_ITERATIONS = 3


def _squash_elementwise(s):
    # torch: sq*s / ((1+sq)*sqrt(sq)) with sq = s*s (trailing dim is a singleton,
    # so the "norm" is per-element).  Equals s*|s| / (1 + s*s); well-defined at 0.
    return s * jnp.abs(s) / (1.0 + s * s)


def digitcaps_kernel(x_ref, w_ref, v_ref, u_ref):
    # x_ref : (B, R, C)  -- module-native layout, R=128 routes on sublanes
    # w_ref : (C, R, L)  -- weights pre-permuted once at init
    # v_ref : (B, L)     -- squashed output capsule
    # u_ref : (B, R, L)  -- c_ij * u_hat, already in the module's output order
    B, R, C = x_ref.shape
    L = w_ref.shape[2]

    # ---- u_hat[b, r, l] = sum_c x[b, r, c] * W[c, r, l] ------------------
    # Accumulate over C (unrolled, C=16) instead of materializing the
    # (B, R, L, C) product: live set ~ a few tens of vregs, no spills.
    u_hat = x_ref[:, :, pl.ds(0, 1)] * w_ref[0][None, :, :]          # (B, R, L)
    for c in range(1, C):
        u_hat = u_hat + x_ref[:, :, pl.ds(c, 1)] * w_ref[c][None, :, :]

    inv_R = 1.0 / R
    b_ij = jnp.zeros((R, 1), jnp.float32)        # routing logits, shared over batch

    for it in range(NUM_ITERATIONS):
        last = it == NUM_ITERATIONS - 1
        if it == 0:
            # softmax(zeros) == uniform 1/R exactly -> skip exp/reduce/div and
            # fold the constant into the reduction.
            s_j = jnp.sum(u_hat, axis=1) * inv_R                      # (B, L)
            weighted = None
        else:
            # softmax over routes (sublane axis); keep the max-subtraction —
            # b_ij reaches O(10s) after the batch-mean agreement updates.
            m = jnp.max(b_ij, axis=0, keepdims=True)                  # (1, 1)
            e = jnp.exp(b_ij - m)                                     # (R, 1)
            c_ij = e / jnp.sum(e, axis=0, keepdims=True)              # (R, 1)
            weighted = c_ij[None, :, :] * u_hat                       # (B, R, L)
            s_j = jnp.sum(weighted, axis=1)                           # (B, L)

        v_j = _squash_elementwise(s_j)                                # (B, L)

        if not last:
            # a_ij[b, r] = <u_hat[b, r, :], v_j[b, :]>   (lane reduce over L)
            a_ij = jnp.sum(u_hat * v_j[:, None, :], axis=2, keepdims=True)  # (B, R, 1)
            upd = a_ij[0]
            for b in range(1, B):                # explicit mean over the batch dim
                upd = upd + a_ij[b]
            b_ij = b_ij + upd * (1.0 / B)
        else:
            u_ref[...] = weighted                # already (B, R, L): free reshape later
            v_ref[...] = v_j


def prepare_digitcaps_weights(W_param):
    """One-time, init-time relayout of the torch parameter.

    W_param: (R, L, C)  == torch.randn(1, R, 1, L, C) squeezed.
    Returns  (C, R, L)  so the kernel reads w_ref[c] as a natural (R, L) slice.
    """
    return jnp.transpose(W_param, (2, 0, 1)).astype(jnp.float32)


@jax.jit
def digitcaps_forward(x, W_kernel):
    """x: (B, R, C) f32 (module-native), W_kernel: (C, R, L) from prepare_digitcaps_weights.

    Returns (v, u_j) with the PyTorch module's output shapes:
      v   : (B, 1, L, 1)
      u_j : (B, R, 1, L, 1)          (num_copies == 1 in the reference module)
    """
    B, R, C = x.shape
    Cw, Rw, L = W_kernel.shape
    assert R == Rw and C == Cw

    v_flat, u_flat = pl.pallas_call(
        digitcaps_kernel,
        out_shape=(
            jax.ShapeDtypeStruct((B, L), jnp.float32),
            jax.ShapeDtypeStruct((B, R, L), jnp.float32),
        ),
        in_specs=[
            pl.BlockSpec(memory_space=pltpu.MemorySpace.VMEM),
            pl.BlockSpec(memory_space=pltpu.MemorySpace.VMEM),
        ],
        out_specs=(
            pl.BlockSpec(memory_space=pltpu.MemorySpace.VMEM),
            pl.BlockSpec(memory_space=pltpu.MemorySpace.VMEM),
        ),
    )(x.astype(jnp.float32), W_kernel)

    # Pure metadata reshapes — no transposes left in the wrapper.
    v = v_flat.reshape(B, 1, L, 1)
    u_j = u_flat.reshape(B, R, 1, L, 1)
    return v, u_j


def digitcaps_reference(x, W):
    """Pure-JAX reference mirroring the torch code (5-D shapes).

    x: (B, R, C), W: (R, L, C) (the raw parameter layout).
    """
    B, R, C = x.shape
    L = W.shape[1]
    x5 = x[:, :, None, :, None]                                       # (B, R, 1, C, 1)
    W5 = jnp.broadcast_to(W[None, :, None, :, :], (B, R, 1, L, C))
    u_hat = jnp.matmul(W5, x5)                                        # (B, R, 1, L, 1)
    b_ij = jnp.zeros((1, R, 1, 1), jnp.float32)
    for it in range(NUM_ITERATIONS):
        c_ij = jax.nn.softmax(b_ij, axis=1)
        c_ij_b = jnp.broadcast_to(c_ij, (B, R, 1, 1))[..., None]      # (B, R, 1, 1, 1)
        s_j = jnp.sum(c_ij_b * u_hat, axis=1, keepdims=True)          # (B, 1, 1, L, 1)
        sq = jnp.sum(s_j ** 2, axis=-1, keepdims=True)
        v_j = sq * s_j / ((1.0 + sq) * jnp.sqrt(sq))
        if it < NUM_ITERATIONS - 1:
            v_tiled = jnp.broadcast_to(v_j, (B, R, 1, L, 1))
            a_ij = jnp.matmul(jnp.swapaxes(u_hat, 3, 4), v_tiled)     # (B, R, 1, 1, 1)
            b_ij = b_ij + jnp.mean(a_ij[..., 0], axis=0, keepdims=True)
        else:
            u_j = c_ij_b * u_hat
    return jnp.squeeze(v_j, axis=1), u_j


if __name__ == "__main__":
    # Small shapes consistent with the module: num_routes=(8, 4, 4) -> R=128,
    # logits_num L=32, num_capsules C=16, batch B=2.
    B, R, L, C = 2, 128, 32, 16

    key = jax.random.PRNGKey(0)
    kx, kw = jax.random.split(key)
    x = jax.random.normal(kx, (B, R, C), dtype=jnp.float32)
    W_param = jax.random.normal(kw, (R, L, C), dtype=jnp.float32)  # == torch.randn(1,R,1,L,C)

    # One-time, init-time weight relayout (not part of the per-call forward).
    W_kernel = prepare_digitcaps_weights(W_param)

    v, u_j = digitcaps_forward(x, W_kernel)
    jax.block_until_ready((v, u_j))

    v_ref, u_ref = digitcaps_reference(x, W_param)
    assert v.shape == (B, 1, L, 1) and u_j.shape == (B, R, 1, L, 1)
    np.testing.assert_allclose(np.asarray(v), np.asarray(v_ref), rtol=2e-4, atol=2e-4)
    np.testing.assert_allclose(np.asarray(u_j), np.asarray(u_ref), rtol=2e-4, atol=2e-4)

    print("KERNEL_OK")
</pallas_src>

<mosaic_0001>
module attributes {stable_mosaic.version = 11 : i64} {
  func.func @digitcaps_kernel(%arg0: memref<2x128x16xf32, #tpu.memory_space<vmem>>, %arg1: memref<16x128x32xf32, #tpu.memory_space<vmem>>, %arg2: memref<2x32xf32, #tpu.memory_space<vmem>>, %arg3: memref<2x128x32xf32, #tpu.memory_space<vmem>>) attributes {dimension_semantics = [], scalar_prefetch = 0 : i64, scratch_operands = 0 : i64, tpu.core_type = #tpu.core_type<tc>} {
    %c0 = arith.constant 0 : index
    %c0_0 = arith.constant 0 : index
    %c0_1 = arith.constant 0 : index
    %0 = vector.load %arg0[%c0, %c0_0, %c0_1] : memref<2x128x16xf32, #tpu.memory_space<vmem>>, vector<2x128x1xf32>
    %c0_2 = arith.constant 0 : index
    %c0_3 = arith.constant 0 : index
    %c0_4 = arith.constant 0 : index
    %1 = vector.load %arg1[%c0_2, %c0_3, %c0_4] : memref<16x128x32xf32, #tpu.memory_space<vmem>>, vector<1x128x32xf32>
    %2 = vector.shape_cast %1 : vector<1x128x32xf32> to vector<128x32xf32>
    %3 = vector.shape_cast %2 : vector<128x32xf32> to vector<1x128x32xf32>
    %4 = vector.broadcast %0 : vector<2x128x1xf32> to vector<2x128x32xf32>
    %5 = vector.broadcast %3 : vector<1x128x32xf32> to vector<2x128x32xf32>
    %6 = arith.mulf %4, %5 : vector<2x128x32xf32>
    %c0_5 = arith.constant 0 : index
    %c0_6 = arith.constant 0 : index
    %c1 = arith.constant 1 : index
    %7 = vector.load %arg0[%c0_5, %c0_6, %c1] : memref<2x128x16xf32, #tpu.memory_space<vmem>>, vector<2x128x1xf32>
    %c1_7 = arith.constant 1 : index
    %c0_8 = arith.constant 0 : index
    %c0_9 = arith.constant 0 : index
    %8 = vector.load %arg1[%c1_7, %c0_8, %c0_9] : memref<16x128x32xf32, #tpu.memory_space<vmem>>, vector<1x128x32xf32>
    %9 = vector.shape_cast %8 : vector<1x128x32xf32> to vector<128x32xf32>
    %10 = vector.shape_cast %9 : vector<128x32xf32> to vector<1x128x32xf32>
    %11 = vector.broadcast %7 : vector<2x128x1xf32> to vector<2x128x32xf32>
    %12 = vector.broadcast %10 : vector<1x128x32xf32> to vector<2x128x32xf32>
    %13 = arith.mulf %11, %12 : vector<2x128x32xf32>
    %14 = arith.addf %6, %13 : vector<2x128x32xf32>
    %c0_10 = arith.constant 0 : index
    %c0_11 = arith.constant 0 : index
    %c2 = arith.constant 2 : index
    %15 = vector.load %arg0[%c0_10, %c0_11, %c2] : memref<2x128x16xf32, #tpu.memory_space<vmem>>, vector<2x128x1xf32>
    %c2_12 = arith.constant 2 : index
    %c0_13 = arith.constant 0 : index
    %c0_14 = arith.constant 0 : index
    %16 = vector.load %arg1[%c2_12, %c0_13, %c0_14] : memref<16x128x32xf32, #tpu.memory_space<vmem>>, vector<1x128x32xf32>
    %17 = vector.shape_cast %16 : vector<1x128x32xf32> to vector<128x32xf32>
    %18 = vector.shape_cast %17 : vector<128x32xf32> to vector<1x128x32xf32>
    %19 = vector.broadcast %15 : vector<2x128x1xf32> to vector<2x128x32xf32>
    %20 = vector.broadcast %18 : vector<1x128x32xf32> to vector<2x128x32xf32>
    %21 = arith.mulf %19, %20 : vector<2x128x32xf32>
    %22 = arith.addf %14, %21 : vector<2x128x32xf32>
    %c0_15 = arith.constant 0 : index
    %c0_16 = arith.constant 0 : index
    %c3 = arith.constant 3 : index
    %23 = vector.load %arg0[%c0_15, %c0_16, %c3] : memref<2x128x16xf32, #tpu.memory_space<vmem>>, vector<2x128x1xf32>
    %c3_17 = arith.constant 3 : index
    %c0_18 = arith.constant 0 : index
    %c0_19 = arith.constant 0 : index
    %24 = vector.load %arg1[%c3_17, %c0_18, %c0_19] : memref<16x128x32xf32, #tpu.memory_space<vmem>>, vector<1x128x32xf32>
    %25 = vector.shape_cast %24 : vector<1x128x32xf32> to vector<128x32xf32>
    %26 = vector.shape_cast %25 : vector<128x32xf32> to vector<1x128x32xf32>
    %27 = vector.broadcast %23 : vector<2x128x1xf32> to vector<2x128x32xf32>
    %28 = vector.broadcast %26 : vector<1x128x32xf32> to vector<2x128x32xf32>
    %29 = arith.mulf %27, %28 : vector<2x128x32xf32>
    %30 = arith.addf %22, %29 : vector<2x128x32xf32>
    %c0_20 = arith.constant 0 : index
    %c0_21 = arith.constant 0 : index
    %c4 = arith.constant 4 : index
    %31 = vector.load %arg0[%c0_20, %c0_21, %c4] : memref<2x128x16xf32, #tpu.memory_space<vmem>>, vector<2x128x1xf32>
    %c4_22 = arith.constant 4 : index
    %c0_23 = arith.constant 0 : index
    %c0_24 = arith.constant 0 : index
    %32 = vector.load %arg1[%c4_22, %c0_23, %c0_24] : memref<16x128x32xf32, #tpu.memory_space<vmem>>, vector<1x128x32xf32>
    %33 = vector.shape_cast %32 : vector<1x128x32xf32> to vector<128x32xf32>
    %34 = vector.shape_cast %33 : vector<128x32xf32> to vector<1x128x32xf32>
    %35 = vector.broadcast %31 : vector<2x128x1xf32> to vector<2x128x32xf32>
    %36 = vector.broadcast %34 : vector<1x128x32xf32> to vector<2x128x32xf32>
    %37 = arith.mulf %35, %36 : vector<2x128x32xf32>
    %38 = arith.addf %30, %37 : vector<2x128x32xf32>
    %c0_25 = arith.constant 0 : index
    %c0_26 = arith.constant 0 : index
    %c5 = arith.constant 5 : index
    %39 = vector.load %arg0[%c0_25, %c0_26, %c5] : memref<2x128x16xf32, #tpu.memory_space<vmem>>, vector<2x128x1xf32>
    %c5_27 = arith.constant 5 : index
    %c0_28 = arith.constant 0 : index
    %c0_29 = arith.constant 0 : index
    %40 = vector.load %arg1[%c5_27, %c0_28, %c0_29] : memref<16x128x32xf32, #tpu.memory_space<vmem>>, vector<1x128x32xf32>
    %41 = vector.shape_cast %40 : vector<1x128x32xf32> to vector<128x32xf32>
    %42 = vector.shape_cast %41 : vector<128x32xf32> to vector<1x128x32xf32>
    %43 = vector.broadcast %39 : vector<2x128x1xf32> to vector<2x128x32xf32>
    %44 = vector.broadcast %42 : vector<1x128x32xf32> to vector<2x128x32xf32>
    %45 = arith.mulf %43, %44 : vector<2x128x32xf32>
    %46 = arith.addf %38, %45 : vector<2x128x32xf32>
    %c0_30 = arith.constant 0 : index
    %c0_31 = arith.constant 0 : index
    %c6 = arith.constant 6 : index
    %47 = vector.load %arg0[%c0_30, %c0_31, %c6] : memref<2x128x16xf32, #tpu.memory_space<vmem>>, vector<2x128x1xf32>
    %c6_32 = arith.constant 6 : index
    %c0_33 = arith.constant 0 : index
    %c0_34 = arith.constant 0 : index
    %48 = vector.load %arg1[%c6_32, %c0_33, %c0_34] : memref<16x128x32xf32, #tpu.memory_space<vmem>>, vector<1x128x32xf32>
    %49 = vector.shape_cast %48 : vector<1x128x32xf32> to vector<128x32xf32>
    %50 = vector.shape_cast %49 : vector<128x32xf32> to vector<1x128x32xf32>
    %51 = vector.broadcast %47 : vector<2x128x1xf32> to vector<2x128x32xf32>
    %52 = vector.broadcast %50 : vector<1x128x32xf32> to vector<2x128x32xf32>
    %53 = arith.mulf %51, %52 : vector<2x128x32xf32>
    %54 = arith.addf %46, %53 : vector<2x128x32xf32>
    %c0_35 = arith.constant 0 : index
    %c0_36 = arith.constant 0 : index
    %c7 = arith.constant 7 : index
    %55 = vector.load %arg0[%c0_35, %c0_36, %c7] : memref<2x128x16xf32, #tpu.memory_space<vmem>>, vector<2x128x1xf32>
    %c7_37 = arith.constant 7 : index
    %c0_38 = arith.constant 0 : index
    %c0_39 = arith.constant 0 : index
    %56 = vector.load %arg1[%c7_37, %c0_38, %c0_39] : memref<16x128x32xf32, #tpu.memory_space<vmem>>, vector<1x128x32xf32>
    %57 = vector.shape_cast %56 : vector<1x128x32xf32> to vector<128x32xf32>
    %58 = vector.shape_cast %57 : vector<128x32xf32> to vector<1x128x32xf32>
    %59 = vector.broadcast %55 : vector<2x128x1xf32> to vector<2x128x32xf32>
    %60 = vector.broadcast %58 : vector<1x128x32xf32> to vector<2x128x32xf32>
    %61 = arith.mulf %59, %60 : vector<2x128x32xf32>
    %62 = arith.addf %54, %61 : vector<2x128x32xf32>
    %c0_40 = arith.constant 0 : index
    %c0_41 = arith.constant 0 : index
    %c8 = arith.constant 8 : index
    %63 = vector.load %arg0[%c0_40, %c0_41, %c8] : memref<2x128x16xf32, #tpu.memory_space<vmem>>, vector<2x128x1xf32>
    %c8_42 = arith.constant 8 : index
    %c0_43 = arith.constant 0 : index
    %c0_44 = arith.constant 0 : index
    %64 = vector.load %arg1[%c8_42, %c0_43, %c0_44] : memref<16x128x32xf32, #tpu.memory_space<vmem>>, vector<1x128x32xf32>
    %65 = vector.shape_cast %64 : vector<1x128x32xf32> to vector<128x32xf32>
    %66 = vector.shape_cast %65 : vector<128x32xf32> to vector<1x128x32xf32>
    %67 = vector.broadcast %63 : vector<2x128x1xf32> to vector<2x128x32xf32>
    %68 = vector.broadcast %66 : vector<1x128x32xf32> to vector<2x128x32xf32>
    %69 = arith.mulf %67, %68 : vector<2x128x32xf32>
    %70 = arith.addf %62, %69 : vector<2x128x32xf32>
    %c0_45 = arith.constant 0 : index
    %c0_46 = arith.constant 0 : index
    %c9 = arith.constant 9 : index
    %71 = vector.load %arg0[%c0_45, %c0_46, %c9] : memref<2x128x16xf32, #tpu.memory_space<vmem>>, vector<2x128x1xf32>
    %c9_47 = arith.constant 9 : index
    %c0_48 = arith.constant 0 : index
    %c0_49 = arith.constant 0 : index
    %72 = vector.load %arg1[%c9_47, %c0_48, %c0_49] : memref<16x128x32xf32, #tpu.memory_space<vmem>>, vector<1x128x32xf32>
    %73 = vector.shape_cast %72 : vector<1x128x32xf32> to vector<128x32xf32>
    %74 = vector.shape_cast %73 : vector<128x32xf32> to vector<1x128x32xf32>
    %75 = vector.broadcast %71 : vector<2x128x1xf32> to vector<2x128x32xf32>
    %76 = vector.broadcast %74 : vector<1x128x32xf32> to vector<2x128x32xf32>
    %77 = arith.mulf %75, %76 : vector<2x128x32xf32>
    %78 = arith.addf %70, %77 : vector<2x128x32xf32>
    %c0_50 = arith.constant 0 : index
    %c0_51 = arith.constant 0 : index
    %c10 = arith.constant 10 : index
    %79 = vector.load %arg0[%c0_50, %c0_51, %c10] : memref<2x128x16xf32, #tpu.memory_space<vmem>>, vector<2x128x1xf32>
    %c10_52 = arith.constant 10 : index
    %c0_53 = arith.constant 0 : index
    %c0_54 = arith.constant 0 : index
    %80 = vector.load %arg1[%c10_52, %c0_53, %c0_54] : memref<16x128x32xf32, #tpu.memory_space<vmem>>, vector<1x128x32xf32>
    %81 = vector.shape_cast %80 : vector<1x128x32xf32> to vector<128x32xf32>
    %82 = vector.shape_cast %81 : vector<128x32xf32> to vector<1x128x32xf32>
    %83 = vector.broadcast %79 : vector<2x128x1xf32> to vector<2x128x32xf32>
    %84 = vector.broadcast %82 : vector<1x128x32xf32> to vector<2x128x32xf32>
    %85 = arith.mulf %83, %84 : vector<2x128x32xf32>
    %86 = arith.addf %78, %85 : vector<2x128x32xf32>
    %c0_55 = arith.constant 0 : index
    %c0_56 = arith.constant 0 : index
    %c11 = arith.constant 11 : index
    %87 = vector.load %arg0[%c0_55, %c0_56, %c11] : memref<2x128x16xf32, #tpu.memory_space<vmem>>, vector<2x128x1xf32>
    %c11_57 = arith.constant 11 : index
    %c0_58 = arith.constant 0 : index
    %c0_59 = arith.constant 0 : index
    %88 = vector.load %arg1[%c11_57, %c0_58, %c0_59] : memref<16x128x32xf32, #tpu.memory_space<vmem>>, vector<1x128x32xf32>
    %89 = vector.shape_cast %88 : vector<1x128x32xf32> to vector<128x32xf32>
    %90 = vector.shape_cast %89 : vector<128x32xf32> to vector<1x128x32xf32>
    %91 = vector.broadcast %87 : vector<2x128x1xf32> to vector<2x128x32xf32>
    %92 = vector.broadcast %90 : vector<1x128x32xf32> to vector<2x128x32xf32>
    %93 = arith.mulf %91, %92 : vector<2x128x32xf32>
    %94 = arith.addf %86, %93 : vector<2x128x32xf32>
    %c0_60 = arith.constant 0 : index
    %c0_61 = arith.constant 0 : index
    %c12 = arith.constant 12 : index
    %95 = vector.load %arg0[%c0_60, %c0_61, %c12] : memref<2x128x16xf32, #tpu.memory_space<vmem>>, vector<2x128x1xf32>
    %c12_62 = arith.constant 12 : index
    %c0_63 = arith.constant 0 : index
    %c0_64 = arith.constant 0 : index
    %96 = vector.load %arg1[%c12_62, %c0_63, %c0_64] : memref<16x128x32xf32, #tpu.memory_space<vmem>>, vector<1x128x32xf32>
    %97 = vector.shape_cast %96 : vector<1x128x32xf32> to vector<128x32xf32>
    %98 = vector.shape_cast %97 : vector<128x32xf32> to vector<1x128x32xf32>
    %99 = vector.broadcast %95 : vector<2x128x1xf32> to vector<2x128x32xf32>
    %100 = vector.broadcast %98 : vector<1x128x32xf32> to vector<2x128x32xf32>
    %101 = arith.mulf %99, %100 : vector<2x128x32xf32>
    %102 = arith.addf %94, %101 : vector<2x128x32xf32>
    %c0_65 = arith.constant 0 : index
    %c0_66 = arith.constant 0 : index
    %c13 = arith.constant 13 : index
    %103 = vector.load %arg0[%c0_65, %c0_66, %c13] : memref<2x128x16xf32, #tpu.memory_space<vmem>>, vector<2x128x1xf32>
    %c13_67 = arith.constant 13 : index
    %c0_68 = arith.constant 0 : index
    %c0_69 = arith.constant 0 : index
    %104 = vector.load %arg1[%c13_67, %c0_68, %c0_69] : memref<16x128x32xf32, #tpu.memory_space<vmem>>, vector<1x128x32xf32>
    %105 = vector.shape_cast %104 : vector<1x128x32xf32> to vector<128x32xf32>
    %106 = vector.shape_cast %105 : vector<128x32xf32> to vector<1x128x32xf32>
    %107 = vector.broadcast %103 : vector<2x128x1xf32> to vector<2x128x32xf32>
    %108 = vector.broadcast %106 : vector<1x128x32xf32> to vector<2x128x32xf32>
    %109 = arith.mulf %107, %108 : vector<2x128x32xf32>
    %110 = arith.addf %102, %109 : vector<2x128x32xf32>
    %c0_70 = arith.constant 0 : index
    %c0_71 = arith.constant 0 : index
    %c14 = arith.constant 14 : index
    %111 = vector.load %arg0[%c0_70, %c0_71, %c14] : memref<2x128x16xf32, #tpu.memory_space<vmem>>, vector<2x128x1xf32>
    %c14_72 = arith.constant 14 : index
    %c0_73 = arith.constant 0 : index
    %c0_74 = arith.constant 0 : index
    %112 = vector.load %arg1[%c14_72, %c0_73, %c0_74] : memref<16x128x32xf32, #tpu.memory_space<vmem>>, vector<1x128x32xf32>
    %113 = vector.shape_cast %112 : vector<1x128x32xf32> to vector<128x32xf32>
    %114 = vector.shape_cast %113 : vector<128x32xf32> to vector<1x128x32xf32>
    %115 = vector.broadcast %111 : vector<2x128x1xf32> to vector<2x128x32xf32>
    %116 = vector.broadcast %114 : vector<1x128x32xf32> to vector<2x128x32xf32>
    %117 = arith.mulf %115, %116 : vector<2x128x32xf32>
    %118 = arith.addf %110, %117 : vector<2x128x32xf32>
    %c0_75 = arith.constant 0 : index
    %c0_76 = arith.constant 0 : index
    %c15 = arith.constant 15 : index
    %119 = vector.load %arg0[%c0_75, %c0_76, %c15] : memref<2x128x16xf32, #tpu.memory_space<vmem>>, vector<2x128x1xf32>
    %c15_77 = arith.constant 15 : index
    %c0_78 = arith.constant 0 : index
    %c0_79 = arith.constant 0 : index
    %120 = vector.load %arg1[%c15_77, %c0_78, %c0_79] : memref<16x128x32xf32, #tpu.memory_space<vmem>>, vector<1x128x32xf32>
    %121 = vector.shape_cast %120 : vector<1x128x32xf32> to vector<128x32xf32>
    %122 = vector.shape_cast %121 : vector<128x32xf32> to vector<1x128x32xf32>
    %123 = vector.broadcast %119 : vector<2x128x1xf32> to vector<2x128x32xf32>
    %124 = vector.broadcast %122 : vector<1x128x32xf32> to vector<2x128x32xf32>
    %125 = arith.mulf %123, %124 : vector<2x128x32xf32>
    %126 = arith.addf %118, %125 : vector<2x128x32xf32>
    %cst = arith.constant 0.000000e+00 : f32
    %127 = vector.broadcast %cst : f32 to vector<128x1xf32>
    %cst_80 = arith.constant dense<0.000000e+00> : vector<2x32xf32>
    %128 = vector.multi_reduction <add>, %126, %cst_80 [1] : vector<2x128x32xf32> to vector<2x32xf32>
    %cst_81 = arith.constant 7.812500e-03 : f32
    %129 = vector.broadcast %cst_81 : f32 to vector<2x32xf32>
    %130 = arith.mulf %128, %129 : vector<2x32xf32>
    %131 = math.absf %130 : vector<2x32xf32>
    %132 = arith.mulf %130, %131 : vector<2x32xf32>
    %133 = arith.mulf %130, %130 : vector<2x32xf32>
    %cst_82 = arith.constant 1.000000e+00 : f32
    %134 = vector.broadcast %cst_82 : f32 to vector<2x32xf32>
    %135 = arith.addf %134, %133 : vector<2x32xf32>
    %136 = arith.divf %132, %135 : vector<2x32xf32>
    %137 = vector.shape_cast %136 : vector<2x32xf32> to vector<2x1x32xf32>
    %138 = vector.broadcast %137 : vector<2x1x32xf32> to vector<2x128x32xf32>
    %139 = arith.mulf %126, %138 : vector<2x128x32xf32>
    %cst_83 = arith.constant dense<0.000000e+00> : vector<2x128xf32>
    %140 = vector.multi_reduction <add>, %139, %cst_83 [2] : vector<2x128x32xf32> to vector<2x128xf32>
    %141 = vector.shape_cast %140 : vector<2x128xf32> to vector<2x128x1xf32>
    %142 = vector.extract_strided_slice %141 {offsets = [0, 0, 0], sizes = [1, 128, 1], strides = [1, 1, 1]} : vector<2x128x1xf32> to vector<1x128x1xf32>
    %143 = vector.shape_cast %142 : vector<1x128x1xf32> to vector<128x1xf32>
    %144 = vector.extract_strided_slice %141 {offsets = [1, 0, 0], sizes = [1, 128, 1], strides = [1, 1, 1]} : vector<2x128x1xf32> to vector<1x128x1xf32>
    %145 = vector.shape_cast %144 : vector<1x128x1xf32> to vector<128x1xf32>
    %146 = arith.addf %143, %145 : vector<128x1xf32>
    %cst_84 = arith.constant 5.000000e-01 : f32
    %147 = vector.broadcast %cst_84 : f32 to vector<128x1xf32>
    %148 = arith.mulf %146, %147 : vector<128x1xf32>
    %149 = arith.addf %127, %148 : vector<128x1xf32>
    %cst_85 = arith.constant dense<0xFF800000> : vector<1xf32>
    %150 = vector.multi_reduction <maximumf>, %149, %cst_85 [0] : vector<128x1xf32> to vector<1xf32>
    %151 = vector.shape_cast %150 : vector<1xf32> to vector<1x1xf32>
    %152 = vector.broadcast %151 : vector<1x1xf32> to vector<128x1xf32>
    %153 = arith.subf %149, %152 : vector<128x1xf32>
    %154 = math.exp %153 : vector<128x1xf32>
    %cst_86 = arith.constant dense<0.000000e+00> : vector<1xf32>
    %155 = vector.multi_reduction <add>, %154, %cst_86 [0] : vector<128x1xf32> to vector<1xf32>
    %156 = vector.shape_cast %155 : vector<1xf32> to vector<1x1xf32>
    %157 = vector.broadcast %156 : vector<1x1xf32> to vector<128x1xf32>
    %158 = arith.divf %154, %157 : vector<128x1xf32>
    %159 = vector.shape_cast %158 : vector<128x1xf32> to vector<1x128x1xf32>
    %160 = vector.broadcast %159 : vector<1x128x1xf32> to vector<2x128x32xf32>
    %161 = arith.mulf %160, %126 : vector<2x128x32xf32>
    %cst_87 = arith.constant dense<0.000000e+00> : vector<2x32xf32>
    %162 = vector.multi_reduction <add>, %161, %cst_87 [1] : vector<2x128x32xf32> to vector<2x32xf32>
    %163 = math.absf %162 : vector<2x32xf32>
    %164 = arith.mulf %162, %163 : vector<2x32xf32>
    %165 = arith.mulf %162, %162 : vector<2x32xf32>
    %cst_88 = arith.constant 1.000000e+00 : f32
    %166 = vector.broadcast %cst_88 : f32 to vector<2x32xf32>
    %167 = arith.addf %166, %165 : vector<2x32xf32>
    %168 = arith.divf %164, %167 : vector<2x32xf32>
    %169 = vector.shape_cast %168 : vector<2x32xf32> to vector<2x1x32xf32>
    %170 = vector.broadcast %169 : vector<2x1x32xf32> to vector<2x128x32xf32>
    %171 = arith.mulf %126, %170 : vector<2x128x32xf32>
    %cst_89 = arith.constant dense<0.000000e+00> : vector<2x128xf32>
    %172 = vector.multi_reduction <add>, %171, %cst_89 [2] : vector<2x128x32xf32> to vector<2x128xf32>
    %173 = vector.shape_cast %172 : vector<2x128xf32> to vector<2x128x1xf32>
    %174 = vector.extract_strided_slice %173 {offsets = [0, 0, 0], sizes = [1, 128, 1], strides = [1, 1, 1]} : vector<2x128x1xf32> to vector<1x128x1xf32>
    %175 = vector.shape_cast %174 : vector<1x128x1xf32> to vector<128x1xf32>
    %176 = vector.extract_strided_slice %173 {offsets = [1, 0, 0], sizes = [1, 128, 1], strides = [1, 1, 1]} : vector<2x128x1xf32> to vector<1x128x1xf32>
    %177 = vector.shape_cast %176 : vector<1x128x1xf32> to vector<128x1xf32>
    %178 = arith.addf %175, %177 : vector<128x1xf32>
    %cst_90 = arith.constant 5.000000e-01 : f32
    %179 = vector.broadcast %cst_90 : f32 to vector<128x1xf32>
    %180 = arith.mulf %178, %179 : vector<128x1xf32>
    %181 = arith.addf %149, %180 : vector<128x1xf32>
    %cst_91 = arith.constant dense<0xFF800000> : vector<1xf32>
    %182 = vector.multi_reduction <maximumf>, %181, %cst_91 [0] : vector<128x1xf32> to vector<1xf32>
    %183 = vector.shape_cast %182 : vector<1xf32> to vector<1x1xf32>
    %184 = vector.broadcast %183 : vector<1x1xf32> to vector<128x1xf32>
    %185 = arith.subf %181, %184 : vector<128x1xf32>
    %186 = math.exp %185 : vector<128x1xf32>
    %cst_92 = arith.constant dense<0.000000e+00> : vector<1xf32>
    %187 = vector.multi_reduction <add>, %186, %cst_92 [0] : vector<128x1xf32> to vector<1xf32>
    %188 = vector.shape_cast %187 : vector<1xf32> to vector<1x1xf32>
    %189 = vector.broadcast %188 : vector<1x1xf32> to vector<128x1xf32>
    %190 = arith.divf %186, %189 : vector<128x1xf32>
    %191 = vector.shape_cast %190 : vector<128x1xf32> to vector<1x128x1xf32>
    %192 = vector.broadcast %191 : vector<1x128x1xf32> to vector<2x128x32xf32>
    %193 = arith.mulf %192, %126 : vector<2x128x32xf32>
    %cst_93 = arith.constant dense<0.000000e+00> : vector<2x32xf32>
    %194 = vector.multi_reduction <add>, %193, %cst_93 [1] : vector<2x128x32xf32> to vector<2x32xf32>
    %195 = math.absf %194 : vector<2x32xf32>
    %196 = arith.mulf %194, %195 : vector<2x32xf32>
    %197 = arith.mulf %194, %194 : vector<2x32xf32>
    %cst_94 = arith.constant 1.000000e+00 : f32
    %198 = vector.broadcast %cst_94 : f32 to vector<2x32xf32>
    %199 = arith.addf %198, %197 : vector<2x32xf32>
    %200 = arith.divf %196, %199 : vector<2x32xf32>
    %c0_95 = arith.constant 0 : index
    %c0_96 = arith.constant 0 : index
    %c0_97 = arith.constant 0 : index
    %201 = vector.load %arg3[%c0_95, %c0_96, %c0_97] : memref<2x128x32xf32, #tpu.memory_space<vmem>>, vector<2x128x32xf32>
    tpu.vector_store %arg3[%c0_95, %c0_96, %c0_97], %193 {strides = array<i32>} : memref<2x128x32xf32, #tpu.memory_space<vmem>>, vector<2x128x32xf32>,
    %c0_98 = arith.constant 0 : index
    %c0_99 = arith.constant 0 : index
    %202 = vector.load %arg2[%c0_98, %c0_99] : memref<2x32xf32, #tpu.memory_space<vmem>>, vector<2x32xf32>
    tpu.vector_store %arg2[%c0_98, %c0_99], %200 {strides = array<i32>} : memref<2x32xf32, #tpu.memory_space<vmem>>, vector<2x32xf32>,
    return
  }
}

</mosaic_0001>

<llo_original>
// kernel: digitcaps_forward.1
$region0: #{digitcaps_forward.1}
  #allocation0 [shape = 'u32[]', space=smem, size = 0x4, offset = 0x4, fixed_abs, tag = 'smem constant byte address 0x4 - core index']
  #allocation1 [shape = 'u32[144,128]{1,0:T(1,128)}', space=vmem, size = 0x12000, scoped, tag = 'internal scratch']
  %s0 = inlined_call_operand.vmem [shape: f32[2,128,16], index: 0, kind: input, shape index: {}]
  %s1 = inlined_call_operand.vmem [shape: f32[16,128,32], index: 1, kind: input, shape index: {}]
  %s2 = inlined_call_operand.hbm [shape: f32[2,32], index: 2, kind: output, shape index: {0}]
  %s3 = inlined_call_operand.vmem [shape: f32[2,128,32], index: 3, kind: output, shape index: {1}]
  %4 = xla_tuple %s2, %s3
  %s5 = sld [smem:[#allocation0]]
  $region26: #{digitcaps_forward.1} parent=0
    _
  %s7 = ssub.s32 1, %s5
  %s8 = scalar_select 0, %s7, %s5
  $region1: #{digitcaps_forward.1} parent=0
    #allocation2 [shape = 'u8[1024]{0}', space=vmem, size = 0x400, scoped, tag = 'output window, operand 0, single buffered']
    #allocation3 [shape = 's32[1]{0}', space=sflag, size = 0x4, scoped, tag = 'scoped memory for digitcaps_forward.1']
    %9 = vsyncpa [#allocation3], 0
    // Predicated region
    $region2: #{digitcaps_forward.1} parent=1 // pred_check
      _
    $region3: #{digitcaps_forward.1} parent=1 // pred_check_branch
      %11 = sbr.rel (0) target = $region5
    $region4: #{digitcaps_forward.1} parent=1 // pred_region
      _
    $region5: #{digitcaps_forward.1} parent=1 // pred_fallthru
      _
    // Predicated region
    $region6: #{digitcaps_forward.1} parent=1 // pred_check
      _
    $region7: #{digitcaps_forward.1} parent=1 // pred_check_branch
      %13 = sbr.rel (0) target = $region9
    $region8: #{digitcaps_forward.1} parent=1 // pred_region
      _
    $region9: #{digitcaps_forward.1} parent=1 // pred_fallthru
      _
    %v14 = vld [vmem:[%s0] sm:$0xff]
    %v15 = vld [vmem:[%s0 + $0x8] sm:$0xff]
    %v16 = vld [vmem:[%s0 + $0x10] sm:$0xff]
    %v17 = vld [vmem:[%s0 + $0x18] sm:$0xff]
    %v18 = vld [vmem:[%s0 + $0x20] sm:$0xff]
    %v19 = vld [vmem:[%s0 + $0x28] sm:$0xff]
    %v20 = vld [vmem:[%s0 + $0x30] sm:$0xff]
    %v21 = vld [vmem:[%s0 + $0x38] sm:$0xff]
    %v22 = vld [vmem:[%s0 + $0x40] sm:$0xff]
    %v23 = vld [vmem:[%s0 + $0x48] sm:$0xff]
    %v24 = vld [vmem:[%s0 + $0x50] sm:$0xff]
    %v25 = vld [vmem:[%s0 + $0x58] sm:$0xff]
    %v26 = vld [vmem:[%s0 + $0x60] sm:$0xff]
    %v27 = vld [vmem:[%s0 + $0x68] sm:$0xff]
    %v28 = vld [vmem:[%s0 + $0x70] sm:$0xff]
    %v29 = vld [vmem:[%s0 + $0x78] sm:$0xff]
    %v30 = vld [vmem:[%s0 + $0x80] sm:$0xff]
    %v31 = vld [vmem:[%s0 + $0x88] sm:$0xff]
    %v32 = vld [vmem:[%s0 + $0x90] sm:$0xff]
    %v33 = vld [vmem:[%s0 + $0x98] sm:$0xff]
    %v34 = vld [vmem:[%s0 + $0xa0] sm:$0xff]
    %v35 = vld [vmem:[%s0 + $0xa8] sm:$0xff]
    %v36 = vld [vmem:[%s0 + $0xb0] sm:$0xff]
    %v37 = vld [vmem:[%s0 + $0xb8] sm:$0xff]
    %v38 = vld [vmem:[%s0 + $0xc0] sm:$0xff]
    %v39 = vld [vmem:[%s0 + $0xc8] sm:$0xff]
    %v40 = vld [vmem:[%s0 + $0xd0] sm:$0xff]
    %v41 = vld [vmem:[%s0 + $0xd8] sm:$0xff]
    %v42 = vld [vmem:[%s0 + $0xe0] sm:$0xff]
    %v43 = vld [vmem:[%s0 + $0xe8] sm:$0xff]
    %v44 = vld [vmem:[%s0 + $0xf0] sm:$0xff]
    %v45 = vld [vmem:[%s0 + $0xf8] sm:$0xff]
    %v46 = vld [vmem:[%s1] sm:$0xff]
    %v47 = vld [vmem:[%s1 + $0x8] sm:$0xff]
    %v48 = vld [vmem:[%s1 + $0x10] sm:$0xff]
    %v49 = vld [vmem:[%s1 + $0x18] sm:$0xff]
    %v50 = vld [vmem:[%s1 + $0x20] sm:$0xff]
    %v51 = vld [vmem:[%s1 + $0x28] sm:$0xff]
    %v52 = vld [vmem:[%s1 + $0x30] sm:$0xff]
    %v53 = vld [vmem:[%s1 + $0x38] sm:$0xff]
    %v54 = vld [vmem:[%s1 + $0x40] sm:$0xff]
    %v55 = vld [vmem:[%s1 + $0x48] sm:$0xff]
    %v56 = vld [vmem:[%s1 + $0x50] sm:$0xff]
    %v57 = vld [vmem:[%s1 + $0x58] sm:$0xff]
    %v58 = vld [vmem:[%s1 + $0x60] sm:$0xff]
    %v59 = vld [vmem:[%s1 + $0x68] sm:$0xff]
    %v60 = vld [vmem:[%s1 + $0x70] sm:$0xff]
    %v61 = vld [vmem:[%s1 + $0x78] sm:$0xff]
    %63 = vset.pattern.permute.xlu0 0
    %64 = vperm.xlu0 %63, %v14
    %v65 = vpop.permute.xlu0 %64
    %68 = vset.pattern.permute.xlu0 0
    %69 = vperm.xlu0 %68, %v15
    %v70 = vpop.permute.xlu0 %69
    %73 = vset.pattern.permute.xlu0 0
    %74 = vperm.xlu0 %73, %v16
    %v75 = vpop.permute.xlu0 %74
    %78 = vset.pattern.permute.xlu0 0
    %79 = vperm.xlu0 %78, %v17
    %v80 = vpop.permute.xlu0 %79
    %83 = vset.pattern.permute.xlu0 0
    %84 = vperm.xlu0 %83, %v18
    %v85 = vpop.permute.xlu0 %84
    %88 = vset.pattern.permute.xlu0 0
    %89 = vperm.xlu0 %88, %v19
    %v90 = vpop.permute.xlu0 %89
    %93 = vset.pattern.permute.xlu0 0
    %94 = vperm.xlu0 %93, %v20
    %v95 = vpop.permute.xlu0 %94
    %98 = vset.pattern.permute.xlu0 0
    %99 = vperm.xlu0 %98, %v21
    %v100 = vpop.permute.xlu0 %99
    %103 = vset.pattern.permute.xlu0 0
    %104 = vperm.xlu0 %103, %v22
    %v105 = vpop.permute.xlu0 %104
    %108 = vset.pattern.permute.xlu0 0
    %109 = vperm.xlu0 %108, %v23
    %v110 = vpop.permute.xlu0 %109
    %113 = vset.pattern.permute.xlu0 0
    %114 = vperm.xlu0 %113, %v24
    %v115 = vpop.permute.xlu0 %114
    %118 = vset.pattern.permute.xlu0 0
    %119 = vperm.xlu0 %118, %v25
    %v120 = vpop.permute.xlu0 %119
    %123 = vset.pattern.permute.xlu0 0
    %124 = vperm.xlu0 %123, %v26
    %v125 = vpop.permute.xlu0 %124
    %128 = vset.pattern.permute.xlu0 0
    %129 = vperm.xlu0 %128, %v27
    %v130 = vpop.permute.xlu0 %129
    %133 = vset.pattern.permute.xlu0 0
    %134 = vperm.xlu0 %133, %v28
    %v135 = vpop.permute.xlu0 %134
    %138 = vset.pattern.permute.xlu0 0
    %139 = vperm.xlu0 %138, %v29
    %v140 = vpop.permute.xlu0 %139
    %143 = vset.pattern.permute.xlu0 0
    %144 = vperm.xlu0 %143, %v30
    %v145 = vpop.permute.xlu0 %144
    %148 = vset.pattern.permute.xlu0 0
    %149 = vperm.xlu0 %148, %v31
    %v150 = vpop.permute.xlu0 %149
    %153 = vset.pattern.permute.xlu0 0
    %154 = vperm.xlu0 %153, %v32
    %v155 = vpop.permute.xlu0 %154
    %158 = vset.pattern.permute.xlu0 0
    %159 = vperm.xlu0 %158, %v33
    %v160 = vpop.permute.xlu0 %159
    %163 = vset.pattern.permute.xlu0 0
    %164 = vperm.xlu0 %163, %v34
    %v165 = vpop.permute.xlu0 %164
    %168 = vset.pattern.permute.xlu0 0
    %169 = vperm.xlu0 %168, %v35
    %v170 = vpop.permute.xlu0 %169
    %173 = vset.pattern.permute.xlu0 0
    %174 = vperm.xlu0 %173, %v36
    %v175 = vpop.permute.xlu0 %174
    %178 = vset.pattern.permute.xlu0 0
    %179 = vperm.xlu0 %178, %v37
    %v180 = vpop.permute.xlu0 %179
    %183 = vset.pattern.permute.xlu0 0
    %184 = vperm.xlu0 %183, %v38
    %v185 = vpop.permute.xlu0 %184
    %188 = vset.pattern.permute.xlu0 0
    %189 = vperm.xlu0 %188, %v39
    %v190 = vpop.permute.xlu0 %189
    %193 = vset.pattern.permute.xlu0 0
    %194 = vperm.xlu0 %193, %v40
    %v195 = vpop.permute.xlu0 %194
    %198 = vset.pattern.permute.xlu0 0
    %199 = vperm.xlu0 %198, %v41
    %v200 = vpop.permute.xlu0 %199
    %203 = vset.pattern.permute.xlu0 0
    %204 = vperm.xlu0 %203, %v42
    %v205 = vpop.permute.xlu0 %204
    %208 = vset.pattern.permute.xlu0 0
    %209 = vperm.xlu0 %208, %v43
    %v210 = vpop.permute.xlu0 %209
    %213 = vset.pattern.permute.xlu0 0
    %214 = vperm.xlu0 %213, %v44
    %v215 = vpop.permute.xlu0 %214
    %218 = vset.pattern.permute.xlu0 0
    %219 = vperm.xlu0 %218, %v45
    %v220 = vpop.permute.xlu0 %219
    %v222 = vmul.f32 %v65, %v46
    %v223 = vmul.f32 %v70, %v47
    %v224 = vmul.f32 %v75, %v48
    %v225 = vmul.f32 %v80, %v49
    %v226 = vmul.f32 %v85, %v50
    %v227 = vmul.f32 %v90, %v51
    %v228 = vmul.f32 %v95, %v52
    %v229 = vmul.f32 %v100, %v53
    %v230 = vmul.f32 %v105, %v54
    %v231 = vmul.f32 %v110, %v55
    %v232 = vmul.f32 %v115, %v56
    %v233 = vmul.f32 %v120, %v57
    %v234 = vmul.f32 %v125, %v58
    %v235 = vmul.f32 %v130, %v59
    %v236 = vmul.f32 %v135, %v60
    %v237 = vmul.f32 %v140, %v61
    %v238 = vmul.f32 %v145, %v46
    %v239 = vmul.f32 %v150, %v47
    %v240 = vmul.f32 %v155, %v48
    %v241 = vmul.f32 %v160, %v49
    %v242 = vmul.f32 %v165, %v50
    %v243 = vmul.f32 %v170, %v51
    %v244 = vmul.f32 %v175, %v52
    %v245 = vmul.f32 %v180, %v53
    %v246 = vmul.f32 %v185, %v54
    %v247 = vmul.f32 %v190, %v55
    %v248 = vmul.f32 %v195, %v56
    %v249 = vmul.f32 %v200, %v57
    %v250 = vmul.f32 %v205, %v58
    %v251 = vmul.f32 %v210, %v59
    %v252 = vmul.f32 %v215, %v60
    %v253 = vmul.f32 %v220, %v61
    %s254 = scalar_lea.vmem %s1, 128
    %v255 = vld [vmem:[%s254] sm:$0xff]
    %v256 = vld [vmem:[%s254 + $0x8] sm:$0xff]
    %v257 = vld [vmem:[%s254 + $0x10] sm:$0xff]
    %v258 = vld [vmem:[%s254 + $0x18] sm:$0xff]
    %v259 = vld [vmem:[%s254 + $0x20] sm:$0xff]
    %v260 = vld [vmem:[%s254 + $0x28] sm:$0xff]
    %v261 = vld [vmem:[%s254 + $0x30] sm:$0xff]
    %v262 = vld [vmem:[%s254 + $0x38] sm:$0xff]
    %v263 = vld [vmem:[%s254 + $0x40] sm:$0xff]
    %v264 = vld [vmem:[%s254 + $0x48] sm:$0xff]
    %v265 = vld [vmem:[%s254 + $0x50] sm:$0xff]
    %v266 = vld [vmem:[%s254 + $0x58] sm:$0xff]
    %v267 = vld [vmem:[%s254 + $0x60] sm:$0xff]
    %v268 = vld [vmem:[%s254 + $0x68] sm:$0xff]
    %v269 = vld [vmem:[%s254 + $0x70] sm:$0xff]
    %v270 = vld [vmem:[%s254 + $0x78] sm:$0xff]
    %271 = vset.pattern.permute.xlu0 1
    %272 = vperm.xlu0 %271, %v14
    %v273 = vpop.permute.xlu0 %272
    %275 = vset.pattern.permute.xlu0 1
    %276 = vperm.xlu0 %275, %v15
    %v277 = vpop.permute.xlu0 %276
    %279 = vset.pattern.permute.xlu0 1
    %280 = vperm.xlu0 %279, %v16
    %v281 = vpop.permute.xlu0 %280
    %283 = vset.pattern.permute.xlu0 1
    %284 = vperm.xlu0 %283, %v17
    %v285 = vpop.permute.xlu0 %284
    %287 = vset.pattern.permute.xlu0 1
    %288 = vperm.xlu0 %287, %v18
    %v289 = vpop.permute.xlu0 %288
    %291 = vset.pattern.permute.xlu0 1
    %292 = vperm.xlu0 %291, %v19
    %v293 = vpop.permute.xlu0 %292
    %295 = vset.pattern.permute.xlu0 1
    %296 = vperm.xlu0 %295, %v20
    %v297 = vpop.permute.xlu0 %296
    %299 = vset.pattern.permute.xlu0 1
    %300 = vperm.xlu0 %299, %v21
    %v301 = vpop.permute.xlu0 %300
    %303 = vset.pattern.permute.xlu0 1
    %304 = vperm.xlu0 %303, %v22
    %v305 = vpop.permute.xlu0 %304
    %307 = vset.pattern.permute.xlu0 1
    %308 = vperm.xlu0 %307, %v23
    %v309 = vpop.permute.xlu0 %308
    %311 = vset.pattern.permute.xlu0 1
    %312 = vperm.xlu0 %311, %v24
    %v313 = vpop.permute.xlu0 %312
    %315 = vset.pattern.permute.xlu0 1
    %316 = vperm.xlu0 %315, %v25
    %v317 = vpop.permute.xlu0 %316
    %319 = vset.pattern.permute.xlu0 1
    %320 = vperm.xlu0 %319, %v26
    %v321 = vpop.permute.xlu0 %320
    %323 = vset.pattern.permute.xlu0 1
    %324 = vperm.xlu0 %323, %v27
    %v325 = vpop.permute.xlu0 %324
    %327 = vset.pattern.permute.xlu0 1
    %328 = vperm.xlu0 %327, %v28
    %v329 = vpop.permute.xlu0 %328
    %331 = vset.pattern.permute.xlu0 1
    %332 = vperm.xlu0 %331, %v29
    %v333 = vpop.permute.xlu0 %332
    %335 = vset.pattern.permute.xlu0 1
    %336 = vperm.xlu0 %335, %v30
    %v337 = vpop.permute.xlu0 %336
    %339 = vset.pattern.permute.xlu0 1
    %340 = vperm.xlu0 %339, %v31
    %v341 = vpop.permute.xlu0 %340
    %343 = vset.pattern.permute.xlu0 1
    %344 = vperm.xlu0 %343, %v32
    %v345 = vpop.permute.xlu0 %344
    %347 = vset.pattern.permute.xlu0 1
    %348 = vperm.xlu0 %347, %v33
    %v349 = vpop.permute.xlu0 %348
    %351 = vset.pattern.permute.xlu0 1
    %352 = vperm.xlu0 %351, %v34
    %v353 = vpop.permute.xlu0 %352
    %355 = vset.pattern.permute.xlu0 1
    %356 = vperm.xlu0 %355, %v35
    %v357 = vpop.permute.xlu0 %356
    %359 = vset.pattern.permute.xlu0 1
    %360 = vperm.xlu0 %359, %v36
    %v361 = vpop.permute.xlu0 %360
    %363 = vset.pattern.permute.xlu0 1
    %364 = vperm.xlu0 %363, %v37
    %v365 = vpop.permute.xlu0 %364
    %367 = vset.pattern.permute.xlu0 1
    %368 = vperm.xlu0 %367, %v38
    %v369 = vpop.permute.xlu0 %368
    %371 = vset.pattern.permute.xlu0 1
    %372 = vperm.xlu0 %371, %v39
    %v373 = vpop.permute.xlu0 %372
    %375 = vset.pattern.permute.xlu0 1
    %376 = vperm.xlu0 %375, %v40
    %v377 = vpop.permute.xlu0 %376
    %379 = vset.pattern.permute.xlu0 1
    %380 = vperm.xlu0 %379, %v41
    %v381 = vpop.permute.xlu0 %380
    %383 = vset.pattern.permute.xlu0 1
    %384 = vperm.xlu0 %383, %v42
    %v385 = vpop.permute.xlu0 %384
    %387 = vset.pattern.permute.xlu0 1
    %388 = vperm.xlu0 %387, %v43
    %v389 = vpop.permute.xlu0 %388
    %391 = vset.pattern.permute.xlu0 1
    %392 = vperm.xlu0 %391, %v44
    %v393 = vpop.permute.xlu0 %392
    %395 = vset.pattern.permute.xlu0 1
    %396 = vperm.xlu0 %395, %v45
    %v397 = vpop.permute.xlu0 %396
    %v399 = vmul.f32 %v273, %v255
    %v400 = vmul.f32 %v277, %v256
    %v401 = vmul.f32 %v281, %v257
    %v402 = vmul.f32 %v285, %v258
    %v403 = vmul.f32 %v289, %v259
    %v404 = vmul.f32 %v293, %v260
    %v405 = vmul.f32 %v297, %v261
    %v406 = vmul.f32 %v301, %v262
    %v407 = vmul.f32 %v305, %v263
    %v408 = vmul.f32 %v309, %v264
    %v409 = vmul.f32 %v313, %v265
    %v410 = vmul.f32 %v317, %v266
    %v411 = vmul.f32 %v321, %v267
    %v412 = vmul.f32 %v325, %v268
    %v413 = vmul.f32 %v329, %v269
    %v414 = vmul.f32 %v333, %v270
    %v415 = vmul.f32 %v337, %v255
    %v416 = vmul.f32 %v341, %v256
    %v417 = vmul.f32 %v345, %v257
    %v418 = vmul.f32 %v349, %v258
    %v419 = vmul.f32 %v353, %v259
    %v420 = vmul.f32 %v357, %v260
    %v421 = vmul.f32 %v361, %v261
    %v422 = vmul.f32 %v365, %v262
    %v423 = vmul.f32 %v369, %v263
    %v424 = vmul.f32 %v373, %v264
    %v425 = vmul.f32 %v377, %v265
    %v426 = vmul.f32 %v381, %v266
    %v427 = vmul.f32 %v385, %v267
    %v428 = vmul.f32 %v389, %v268
    %v429 = vmul.f32 %v393, %v269
    %v430 = vmul.f32 %v397, %v270
    %v431 = vadd.f32 %v222, %v399
    %v432 = vadd.f32 %v223, %v400
    %v433 = vadd.f32 %v224, %v401
    %v434 = vadd.f32 %v225, %v402
    %v435 = vadd.f32 %v226, %v403
    %v436 = vadd.f32 %v227, %v404
    %v437 = vadd.f32 %v228, %v405
    %v438 = vadd.f32 %v229, %v406
    %v439 = vadd.f32 %v230, %v407
    %v440 = vadd.f32 %v231, %v408
    %v441 = vadd.f32 %v232, %v409
    %v442 = vadd.f32 %v233, %v410
    %v443 = vadd.f32 %v234, %v411
    %v444 = vadd.f32 %v235, %v412
    %v445 = vadd.f32 %v236, %v413
    %v446 = vadd.f32 %v237, %v414
    %v447 = vadd.f32 %v238, %v415
    %v448 = vadd.f32 %v239, %v416
    %v449 = vadd.f32 %v240, %v417
    %v450 = vadd.f32 %v241, %v418
    %v451 = vadd.f32 %v242, %v419
    %v452 = vadd.f32 %v243, %v420
    %v453 = vadd.f32 %v244, %v421
    %v454 = vadd.f32 %v245, %v422
    %v455 = vadd.f32 %v246, %v423
    %v456 = vadd.f32 %v247, %v424
    %v457 = vadd.f32 %v248, %v425
    %v458 = vadd.f32 %v249, %v426
    %v459 = vadd.f32 %v250, %v427
    %v460 = vadd.f32 %v251, %v428
    %v461 = vadd.f32 %v252, %v429
    %v462 = vadd.f32 %v253, %v430
    %s463 = scalar_lea.vmem %s1, 256
    %v464 = vld [vmem:[%s463] sm:$0xff]
    %v465 = vld [vmem:[%s463 + $0x8] sm:$0xff]
    %v466 = vld [vmem:[%s463 + $0x10] sm:$0xff]
    %v467 = vld [vmem:[%s463 + $0x18] sm:$0xff]
    %v468 = vld [vmem:[%s463 + $0x20] sm:$0xff]
    %v469 = vld [vmem:[%s463 + $0x28] sm:$0xff]
    %v470 = vld [vmem:[%s463 + $0x30] sm:$0xff]
    %v471 = vld [vmem:[%s463 + $0x38] sm:$0xff]
    %v472 = vld [vmem:[%s463 + $0x40] sm:$0xff]
    %v473 = vld [vmem:[%s463 + $0x48] sm:$0xff]
    %v474 = vld [vmem:[%s463 + $0x50] sm:$0xff]
    %v475 = vld [vmem:[%s463 + $0x58] sm:$0xff]
    %v476 = vld [vmem:[%s463 + $0x60] sm:$0xff]
    %v477 = vld [vmem:[%s463 + $0x68] sm:$0xff]
    %v478 = vld [vmem:[%s463 + $0x70] sm:$0xff]
    %v479 = vld [vmem:[%s463 + $0x78] sm:$0xff]
    %480 = vset.pattern.permute.xlu0 2
    %481 = vperm.xlu0 %480, %v14
    %v482 = vpop.permute.xlu0 %481
    %484 = vset.pattern.permute.xlu0 2
    %485 = vperm.xlu0 %484, %v15
    %v486 = vpop.permute.xlu0 %485
    %488 = vset.pattern.permute.xlu0 2
    %489 = vperm.xlu0 %488, %v16
    %v490 = vpop.permute.xlu0 %489
    %492 = vset.pattern.permute.xlu0 2
    %493 = vperm.xlu0 %492, %v17
    %v494 = vpop.permute.xlu0 %493
    %496 = vset.pattern.permute.xlu0 2
    %497 = vperm.xlu0 %496, %v18
    %v498 = vpop.permute.xlu0 %497
    %500 = vset.pattern.permute.xlu0 2
    %501 = vperm.xlu0 %500, %v19
    %v502 = vpop.permute.xlu0 %501
    %504 = vset.pattern.permute.xlu0 2
    %505 = vperm.xlu0 %504, %v20
    %v506 = vpop.permute.xlu0 %505
    %508 = vset.pattern.permute.xlu0 2
    %509 = vperm.xlu0 %508, %v21
    %v510 = vpop.permute.xlu0 %509
    %512 = vset.pattern.permute.xlu0 2
    %513 = vperm.xlu0 %512, %v22
    %v514 = vpop.permute.xlu0 %513
    %516 = vset.pattern.permute.xlu0 2
    %517 = vperm.xlu0 %516, %v23
    %v518 = vpop.permute.xlu0 %517
    %520 = vset.pattern.permute.xlu0 2
    %521 = vperm.xlu0 %520, %v24
    %v522 = vpop.permute.xlu0 %521
    %524 = vset.pattern.permute.xlu0 2
    %525 = vperm.xlu0 %524, %v25
    %v526 = vpop.permute.xlu0 %525
    %528 = vset.pattern.permute.xlu0 2
    %529 = vperm.xlu0 %528, %v26
    %v530 = vpop.permute.xlu0 %529
    %532 = vset.pattern.permute.xlu0 2
    %533 = vperm.xlu0 %532, %v27
    %v534 = vpop.permute.xlu0 %533
    %536 = vset.pattern.permute.xlu0 2
    %537 = vperm.xlu0 %536, %v28
    %v538 = vpop.permute.xlu0 %537
    %540 = vset.pattern.permute.xlu0 2
    %541 = vperm.xlu0 %540, %v29
    %v542 = vpop.permute.xlu0 %541
    %544 = vset.pattern.permute.xlu0 2
    %545 = vperm.xlu0 %544, %v30
    %v546 = vpop.permute.xlu0 %545
    %548 = vset.pattern.permute.xlu0 2
    %549 = vperm.xlu0 %548, %v31
    %v550 = vpop.permute.xlu0 %549
    %552 = vset.pattern.permute.xlu0 2
    %553 = vperm.xlu0 %552, %v32
    %v554 = vpop.permute.xlu0 %553
    %556 = vset.pattern.permute.xlu0 2
    %557 = vperm.xlu0 %556, %v33
    %v558 = vpop.permute.xlu0 %557
    %560 = vset.pattern.permute.xlu0 2
    %561 = vperm.xlu0 %560, %v34
    %v562 = vpop.permute.xlu0 %561
    %564 = vset.pattern.permute.xlu0 2
    %565 = vperm.xlu0 %564, %v35
    %v566 = vpop.permute.xlu0 %565
    %568 = vset.pattern.permute.xlu0 2
    %569 = vperm.xlu0 %568, %v36
    %v570 = vpop.permute.xlu0 %569
    %572 = vset.pattern.permute.xlu0 2
    %573 = vperm.xlu0 %572, %v37
    %v574 = vpop.permute.xlu0 %573
    %576 = vset.pattern.permute.xlu0 2
    %577 = vperm.xlu0 %576, %v38
    %v578 = vpop.permute.xlu0 %577
    %580 = vset.pattern.permute.xlu0 2
    %581 = vperm.xlu0 %580, %v39
    %v582 = vpop.permute.xlu0 %581
    %584 = vset.pattern.permute.xlu0 2
    %585 = vperm.xlu0 %584, %v40
    %v586 = vpop.permute.xlu0 %585
    %588 = vset.pattern.permute.xlu0 2
    %589 = vperm.xlu0 %588, %v41
    %v590 = vpop.permute.xlu0 %589
    %592 = vset.pattern.permute.xlu0 2
    %593 = vperm.xlu0 %592, %v42
    %v594 = vpop.permute.xlu0 %593
    %596 = vset.pattern.permute.xlu0 2
    %597 = vperm.xlu0 %596, %v43
    %v598 = vpop.permute.xlu0 %597
    %600 = vset.pattern.permute.xlu0 2
    %601 = vperm.xlu0 %600, %v44
    %v602 = vpop.permute.xlu0 %601
    %604 = vset.pattern.permute.xlu0 2
    %605 = vperm.xlu0 %604, %v45
    %v606 = vpop.permute.xlu0 %605
    %v608 = vmul.f32 %v482, %v464
    %v609 = vmul.f32 %v486, %v465
    %v610 = vmul.f32 %v490, %v466
    %v611 = vmul.f32 %v494, %v467
    %v612 = vmul.f32 %v498, %v468
    %v613 = vmul.f32 %v502, %v469
    %v614 = vmul.f32 %v506, %v470
    %v615 = vmul.f32 %v510, %v471
    %v616 = vmul.f32 %v514, %v472
    %v617 = vmul.f32 %v518, %v473
    %v618 = vmul.f32 %v522, %v474
    %v619 = vmul.f32 %v526, %v475
    %v620 = vmul.f32 %v530, %v476
    %v621 = vmul.f32 %v534, %v477
    %v622 = vmul.f32 %v538, %v478
    %v623 = vmul.f32 %v542, %v479
    %v624 = vmul.f32 %v546, %v464
    %v625 = vmul.f32 %v550, %v465
    %v626 = vmul.f32 %v554, %v466
    %v627 = vmul.f32 %v558, %v467
    %v628 = vmul.f32 %v562, %v468
    %v629 = vmul.f32 %v566, %v469
    %v630 = vmul.f32 %v570, %v470
    %v631 = vmul.f32 %v574, %v471
    %v632 = vmul.f32 %v578, %v472
    %v633 = vmul.f32 %v582, %v473
    %v634 = vmul.f32 %v586, %v474
    %v635 = vmul.f32 %v590, %v475
    %v636 = vmul.f32 %v594, %v476
    %v637 = vmul.f32 %v598, %v477
    %v638 = vmul.f32 %v602, %v478
    %v639 = vmul.f32 %v606, %v479
    %v640 = vadd.f32 %v431, %v608
    %v641 = vadd.f32 %v432, %v609
    %v642 = vadd.f32 %v433, %v610
    %v643 = vadd.f32 %v434, %v611
    %v644 = vadd.f32 %v435, %v612
    %v645 = vadd.f32 %v436, %v613
    %v646 = vadd.f32 %v437, %v614
    %v647 = vadd.f32 %v438, %v615
    %v648 = vadd.f32 %v439, %v616
    %v649 = vadd.f32 %v440, %v617
    %v650 = vadd.f32 %v441, %v618
    %v651 = vadd.f32 %v442, %v619
    %v652 = vadd.f32 %v443, %v620
    %v653 = vadd.f32 %v444, %v621
    %v654 = vadd.f32 %v445, %v622
    %v655 = vadd.f32 %v446, %v623
    %v656 = vadd.f32 %v447, %v624
    %v657 = vadd.f32 %v448, %v625
    %v658 = vadd.f32 %v449, %v626
    %v659 = vadd.f32 %v450, %v627
    %v660 = vadd.f32 %v451, %v628
    %v661 = vadd.f32 %v452, %v629
    %v662 = vadd.f32 %v453, %v630
    %v663 = vadd.f32 %v454, %v631
    %v664 = vadd.f32 %v455, %v632
    %v665 = vadd.f32 %v456, %v633
    %v666 = vadd.f32 %v457, %v634
    %v667 = vadd.f32 %v458, %v635
    %v668 = vadd.f32 %v459, %v636
    %v669 = vadd.f32 %v460, %v637
    %v670 = vadd.f32 %v461, %v638
    %v671 = vadd.f32 %v462, %v639
    %s672 = scalar_lea.vmem %s1, 384
    %v673 = vld [vmem:[%s672] sm:$0xff]
    %v674 = vld [vmem:[%s672 + $0x8] sm:$0xff]
    %v675 = vld [vmem:[%s672 + $0x10] sm:$0xff]
    %v676 = vld [vmem:[%s672 + $0x18] sm:$0xff]
    %v677 = vld [vmem:[%s672 + $0x20] sm:$0xff]
    %v678 = vld [vmem:[%s672 + $0x28] sm:$0xff]
    %v679 = vld [vmem:[%s672 + $0x30] sm:$0xff]
    %v680 = vld [vmem:[%s672 + $0x38] sm:$0xff]
    %v681 = vld [vmem:[%s672 + $0x40] sm:$0xff]
    %v682 = vld [vmem:[%s672 + $0x48] sm:$0xff]
    %v683 = vld [vmem:[%s672 + $0x50] sm:$0xff]
    %v684 = vld [vmem:[%s672 + $0x58] sm:$0xff]
    %v685 = vld [vmem:[%s672 + $0x60] sm:$0xff]
    %v686 = vld [vmem:[%s672 + $0x68] sm:$0xff]
    %v687 = vld [vmem:[%s672 + $0x70] sm:$0xff]
    %v688 = vld [vmem:[%s672 + $0x78] sm:$0xff]
    %689 = vset.pattern.permute.xlu0 3
    %690 = vperm.xlu0 %689, %v14
    %v691 = vpop.permute.xlu0 %690
    %693 = vset.pattern.permute.xlu0 3
    %694 = vperm.xlu0 %693, %v15
    %v695 = vpop.permute.xlu0 %694
    %697 = vset.pattern.permute.xlu0 3
    %698 = vperm.xlu0 %697, %v16
    %v699 = vpop.permute.xlu0 %698
    %701 = vset.pattern.permute.xlu0 3
    %702 = vperm.xlu0 %701, %v17
    %v703 = vpop.permute.xlu0 %702
    %705 = vset.pattern.permute.xlu0 3
    %706 = vperm.xlu0 %705, %v18
    %v707 = vpop.permute.xlu0 %706
    %709 = vset.pattern.permute.xlu0 3
    %710 = vperm.xlu0 %709, %v19
    %v711 = vpop.permute.xlu0 %710
    %713 = vset.pattern.permute.xlu0 3
    %714 = vperm.xlu0 %713, %v20
    %v715 = vpop.permute.xlu0 %714
    %717 = vset.pattern.permute.xlu0 3
    %718 = vperm.xlu0 %717, %v21
    %v719 = vpop.permute.xlu0 %718
    %721 = vset.pattern.permute.xlu0 3
    %722 = vperm.xlu0 %721, %v22
    %v723 = vpop.permute.xlu0 %722
    %725 = vset.pattern.permute.xlu0 3
    %726 = vperm.xlu0 %725, %v23
    %v727 = vpop.permute.xlu0 %726
    %729 = vset.pattern.permute.xlu0 3
    %730 = vperm.xlu0 %729, %v24
    %v731 = vpop.permute.xlu0 %730
    %733 = vset.pattern.permute.xlu0 3
    %734 = vperm.xlu0 %733, %v25
    %v735 = vpop.permute.xlu0 %734
    %737 = vset.pattern.permute.xlu0 3
    %738 = vperm.xlu0 %737, %v26
    %v739 = vpop.permute.xlu0 %738
    %741 = vset.pattern.permute.xlu0 3
    %742 = vperm.xlu0 %741, %v27
    %v743 = vpop.permute.xlu0 %742
    %745 = vset.pattern.permute.xlu0 3
    %746 = vperm.xlu0 %745, %v28
    %v747 = vpop.permute.xlu0 %746
    %749 = vset.pattern.permute.xlu0 3
    %750 = vperm.xlu0 %749, %v29
    %v751 = vpop.permute.xlu0 %750
    %753 = vset.pattern.permute.xlu0 3
    %754 = vperm.xlu0 %753, %v30
    %v755 = vpop.permute.xlu0 %754
    %757 = vset.pattern.permute.xlu0 3
    %758 = vperm.xlu0 %757, %v31
    %v759 = vpop.permute.xlu0 %758
    %761 = vset.pattern.permute.xlu0 3
    %762 = vperm.xlu0 %761, %v32
    %v763 = vpop.permute.xlu0 %762
    %765 = vset.pattern.permute.xlu0 3
    %766 = vperm.xlu0 %765, %v33
    %v767 = vpop.permute.xlu0 %766
    %769 = vset.pattern.permute.xlu0 3
    %770 = vperm.xlu0 %769, %v34
    %v771 = vpop.permute.xlu0 %770
    %773 = vset.pattern.permute.xlu0 3
    %774 = vperm.xlu0 %773, %v35
    %v775 = vpop.permute.xlu0 %774
    %777 = vset.pattern.permute.xlu0 3
    %778 = vperm.xlu0 %777, %v36
    %v779 = vpop.permute.xlu0 %778
    %781 = vset.pattern.permute.xlu0 3
    %782 = vperm.xlu0 %781, %v37
    %v783 = vpop.permute.xlu0 %782
    %785 = vset.pattern.permute.xlu0 3
    %786 = vperm.xlu0 %785, %v38
    %v787 = vpop.permute.xlu0 %786
    %789 = vset.pattern.permute.xlu0 3
    %790 = vperm.xlu0 %789, %v39
    %v791 = vpop.permute.xlu0 %790
    %793 = vset.pattern.permute.xlu0 3
    %794 = vperm.xlu0 %793, %v40
    %v795 = vpop.permute.xlu0 %794
    %797 = vset.pattern.permute.xlu0 3
    %798 = vperm.xlu0 %797, %v41
    %v799 = vpop.permute.xlu0 %798
    %801 = vset.pattern.permute.xlu0 3
    %802 = vperm.xlu0 %801, %v42
    %v803 = vpop.permute.xlu0 %802
    %805 = vset.pattern.permute.xlu0 3
    %806 = vperm.xlu0 %805, %v43
    %v807 = vpop.permute.xlu0 %806
    %809 = vset.pattern.permute.xlu0 3
    %810 = vperm.xlu0 %809, %v44
    %v811 = vpop.permute.xlu0 %810
    %813 = vset.pattern.permute.xlu0 3
    %814 = vperm.xlu0 %813, %v45
    %v815 = vpop.permute.xlu0 %814
    %v817 = vmul.f32 %v691, %v673
    %v818 = vmul.f32 %v695, %v674
    %v819 = vmul.f32 %v699, %v675
    %v820 = vmul.f32 %v703, %v676
    %v821 = vmul.f32 %v707, %v677
    %v822 = vmul.f32 %v711, %v678
    %v823 = vmul.f32 %v715, %v679
    %v824 = vmul.f32 %v719, %v680
    %v825 = vmul.f32 %v723, %v681
    %v826 = vmul.f32 %v727, %v682
    %v827 = vmul.f32 %v731, %v683
    %v828 = vmul.f32 %v735, %v684
    %v829 = vmul.f32 %v739, %v685
    %v830 = vmul.f32 %v743, %v686
    %v831 = vmul.f32 %v747, %v687
    %v832 = vmul.f32 %v751, %v688
    %v833 = vmul.f32 %v755, %v673
    %v834 = vmul.f32 %v759, %v674
    %v835 = vmul.f32 %v763, %v675
    %v836 = vmul.f32 %v767, %v676
    %v837 = vmul.f32 %v771, %v677
    %v838 = vmul.f32 %v775, %v678
    %v839 = vmul.f32 %v779, %v679
    %v840 = vmul.f32 %v783, %v680
    %v841 = vmul.f32 %v787, %v681
    %v842 = vmul.f32 %v791, %v682
    %v843 = vmul.f32 %v795, %v683
    %v844 = vmul.f32 %v799, %v684
    %v845 = vmul.f32 %v803, %v685
    %v846 = vmul.f32 %v807, %v686
    %v847 = vmul.f32 %v811, %v687
    %v848 = vmul.f32 %v815, %v688
    %v849 = vadd.f32 %v640, %v817
    %v850 = vadd.f32 %v641, %v818
    %v851 = vadd.f32 %v642, %v819
    %v852 = vadd.f32 %v643, %v820
    %v853 = vadd.f32 %v644, %v821
    %v854 = vadd.f32 %v645, %v822
    %v855 = vadd.f32 %v646, %v823
    %v856 = vadd.f32 %v647, %v824
    %v857 = vadd.f32 %v648, %v825
    %v858 = vadd.f32 %v649, %v826
    %v859 = vadd.f32 %v650, %v827
    %v860 = vadd.f32 %v651, %v828
    %v861 = vadd.f32 %v652, %v829
    %v862 = vadd.f32 %v653, %v830
    %v863 = vadd.f32 %v654, %v831
    %v864 = vadd.f32 %v655, %v832
    %v865 = vadd.f32 %v656, %v833
    %v866 = vadd.f32 %v657, %v834
    %v867 = vadd.f32 %v658, %v835
    %v868 = vadd.f32 %v659, %v836
    %v869 = vadd.f32 %v660, %v837
    %v870 = vadd.f32 %v661, %v838
    %v871 = vadd.f32 %v662, %v839
    %v872 = vadd.f32 %v663, %v840
    %v873 = vadd.f32 %v664, %v841
    %v874 = vadd.f32 %v665, %v842
    %v875 = vadd.f32 %v666, %v843
    %v876 = vadd.f32 %v667, %v844
    %v877 = vadd.f32 %v668, %v845
    %v878 = vadd.f32 %v669, %v846
    %v879 = vadd.f32 %v670, %v847
    %v880 = vadd.f32 %v671, %v848
    %s881 = scalar_lea.vmem %s1, 512
    %v882 = vld [vmem:[%s881] sm:$0xff]
    %v883 = vld [vmem:[%s881 + $0x8] sm:$0xff]
    %v884 = vld [vmem:[%s881 + $0x10] sm:$0xff]
    %v885 = vld [vmem:[%s881 + $0x18] sm:$0xff]
    %v886 = vld [vmem:[%s881 + $0x20] sm:$0xff]
    %v887 = vld [vmem:[%s881 + $0x28] sm:$0xff]
    %v888 = vld [vmem:[%s881 + $0x30] sm:$0xff]
    %v889 = vld [vmem:[%s881 + $0x38] sm:$0xff]
    %v890 = vld [vmem:[%s881 + $0x40] sm:$0xff]
    %v891 = vld [vmem:[%s881 + $0x48] sm:$0xff]
    %v892 = vld [vmem:[%s881 + $0x50] sm:$0xff]
    %v893 = vld [vmem:[%s881 + $0x58] sm:$0xff]
    %v894 = vld [vmem:[%s881 + $0x60] sm:$0xff]
    %v895 = vld [vmem:[%s881 + $0x68] sm:$0xff]
    %v896 = vld [vmem:[%s881 + $0x70] sm:$0xff]
    %v897 = vld [vmem:[%s881 + $0x78] sm:$0xff]
    %898 = vset.pattern.permute.xlu0 4
    %899 = vperm.xlu0 %898, %v14
    %v900 = vpop.permute.xlu0 %899
    %902 = vset.pattern.permute.xlu0 4
    %903 = vperm.xlu0 %902, %v15
    %v904 = vpop.permute.xlu0 %903
    %906 = vset.pattern.permute.xlu0 4
    %907 = vperm.xlu0 %906, %v16
    %v908 = vpop.permute.xlu0 %907
    %910 = vset.pattern.permute.xlu0 4
    %911 = vperm.xlu0 %910, %v17
    %v912 = vpop.permute.xlu0 %911
    %914 = vset.pattern.permute.xlu0 4
    %915 = vperm.xlu0 %914, %v18
    %v916 = vpop.permute.xlu0 %915
    %918 = vset.pattern.permute.xlu0 4
    %919 = vperm.xlu0 %918, %v19
    %v920 = vpop.permute.xlu0 %919
    %922 = vset.pattern.permute.xlu0 4
    %923 = vperm.xlu0 %922, %v20
    %v924 = vpop.permute.xlu0 %923
    %926 = vset.pattern.permute.xlu0 4
    %927 = vperm.xlu0 %926, %v21
    %v928 = vpop.permute.xlu0 %927
    %930 = vset.pattern.permute.xlu0 4
    %931 = vperm.xlu0 %930, %v22
    %v932 = vpop.permute.xlu0 %931
    %934 = vset.pattern.permute.xlu0 4
    %935 = vperm.xlu0 %934, %v23
    %v936 = vpop.permute.xlu0 %935
    %938 = vset.pattern.permute.xlu0 4
    %939 = vperm.xlu0 %938, %v24
    %v940 = vpop.permute.xlu0 %939
    %942 = vset.pattern.permute.xlu0 4
    %943 = vperm.xlu0 %942, %v25
    %v944 = vpop.permute.xlu0 %943
    %946 = vset.pattern.permute.xlu0 4
    %947 = vperm.xlu0 %946, %v26
    %v948 = vpop.permute.xlu0 %947
    %950 = vset.pattern.permute.xlu0 4
    %951 = vperm.xlu0 %950, %v27
    %v952 = vpop.permute.xlu0 %951
    %954 = vset.pattern.permute.xlu0 4
    %955 = vperm.xlu0 %954, %v28
    %v956 = vpop.permute.xlu0 %955
    %958 = vset.pattern.permute.xlu0 4
    %959 = vperm.xlu0 %958, %v29
    %v960 = vpop.permute.xlu0 %959
    %962 = vset.pattern.permute.xlu0 4
    %963 = vperm.xlu0 %962, %v30
    %v964 = vpop.permute.xlu0 %963
    %966 = vset.pattern.permute.xlu0 4
    %967 = vperm.xlu0 %966, %v31
    %v968 = vpop.permute.xlu0 %967
    %970 = vset.pattern.permute.xlu0 4
    %971 = vperm.xlu0 %970, %v32
    %v972 = vpop.permute.xlu0 %971
    %974 = vset.pattern.permute.xlu0 4
    %975 = vperm.xlu0 %974, %v33
    %v976 = vpop.permute.xlu0 %975
    %978 = vset.pattern.permute.xlu0 4
    %979 = vperm.xlu0 %978, %v34
    %v980 = vpop.permute.xlu0 %979
    %982 = vset.pattern.permute.xlu0 4
    %983 = vperm.xlu0 %982, %v35
    %v984 = vpop.permute.xlu0 %983
    %986 = vset.pattern.permute.xlu0 4
    %987 = vperm.xlu0 %986, %v36
    %v988 = vpop.permute.xlu0 %987
    %990 = vset.pattern.permute.xlu0 4
    %991 = vperm.xlu0 %990, %v37
    %v992 = vpop.permute.xlu0 %991
    %994 = vset.pattern.permute.xlu0 4
    %995 = vperm.xlu0 %994, %v38
    %v996 = vpop.permute.xlu0 %995
    %998 = vset.pattern.permute.xlu0 4
    %999 = vperm.xlu0 %998, %v39
    %v1000 = vpop.permute.xlu0 %999
    %1002 = vset.pattern.permute.xlu0 4
    %1003 = vperm.xlu0 %1002, %v40
    %v1004 = vpop.permute.xlu0 %1003
    %1006 = vset.pattern.permute.xlu0 4
    %1007 = vperm.xlu0 %1006, %v41
    %v1008 = vpop.permute.xlu0 %1007
    %1010 = vset.pattern.permute.xlu0 4
    %1011 = vperm.xlu0 %1010, %v42
    %v1012 = vpop.permute.xlu0 %1011
    %1014 = vset.pattern.permute.xlu0 4
    %1015 = vperm.xlu0 %1014, %v43
    %v1016 = vpop.permute.xlu0 %1015
    %1018 = vset.pattern.permute.xlu0 4
    %1019 = vperm.xlu0 %1018, %v44
    %v1020 = vpop.permute.xlu0 %1019
    %1022 = vset.pattern.permute.xlu0 4
    %1023 = vperm.xlu0 %1022, %v45
    %v1024 = vpop.permute.xlu0 %1023
    %v1026 = vmul.f32 %v900, %v882
    %v1027 = vmul.f32 %v904, %v883
    %v1028 = vmul.f32 %v908, %v884
    %v1029 = vmul.f32 %v912, %v885
    %v1030 = vmul.f32 %v916, %v886
    %v1031 = vmul.f32 %v920, %v887
    %v1032 = vmul.f32 %v924, %v888
    %v1033 = vmul.f32 %v928, %v889
    %v1034 = vmul.f32 %v932, %v890
    %v1035 = vmul.f32 %v936, %v891
    %v1036 = vmul.f32 %v940, %v892
    %v1037 = vmul.f32 %v944, %v893
    %v1038 = vmul.f32 %v948, %v894
    %v1039 = vmul.f32 %v952, %v895
    %v1040 = vmul.f32 %v956, %v896
    %v1041 = vmul.f32 %v960, %v897
    %v1042 = vmul.f32 %v964, %v882
    %v1043 = vmul.f32 %v968, %v883
    %v1044 = vmul.f32 %v972, %v884
    %v1045 = vmul.f32 %v976, %v885
    %v1046 = vmul.f32 %v980, %v886
    %v1047 = vmul.f32 %v984, %v887
    %v1048 = vmul.f32 %v988, %v888
    %v1049 = vmul.f32 %v992, %v889
    %v1050 = vmul.f32 %v996, %v890
    %v1051 = vmul.f32 %v1000, %v891
    %v1052 = vmul.f32 %v1004, %v892
    %v1053 = vmul.f32 %v1008, %v893
    %v1054 = vmul.f32 %v1012, %v894
    %v1055 = vmul.f32 %v1016, %v895
    %v1056 = vmul.f32 %v1020, %v896
    %v1057 = vmul.f32 %v1024, %v897
    %v1058 = vadd.f32 %v849, %v1026
    %v1059 = vadd.f32 %v850, %v1027
    %v1060 = vadd.f32 %v851, %v1028
    %v1061 = vadd.f32 %v852, %v1029
    %v1062 = vadd.f32 %v853, %v1030
    %v1063 = vadd.f32 %v854, %v1031
    %v1064 = vadd.f32 %v855, %v1032
    %v1065 = vadd.f32 %v856, %v1033
    %v1066 = vadd.f32 %v857, %v1034
    %v1067 = vadd.f32 %v858, %v1035
    %v1068 = vadd.f32 %v859, %v1036
    %v1069 = vadd.f32 %v860, %v1037
    %v1070 = vadd.f32 %v861, %v1038
    %v1071 = vadd.f32 %v862, %v1039
    %v1072 = vadd.f32 %v863, %v1040
    %v1073 = vadd.f32 %v864, %v1041
    %v1074 = vadd.f32 %v865, %v1042
    %v1075 = vadd.f32 %v866, %v1043
    %v1076 = vadd.f32 %v867, %v1044
    %v1077 = vadd.f32 %v868, %v1045
    %v1078 = vadd.f32 %v869, %v1046
    %v1079 = vadd.f32 %v870, %v1047
    %v1080 = vadd.f32 %v871, %v1048
    %v1081 = vadd.f32 %v872, %v1049
    %v1082 = vadd.f32 %v873, %v1050
    %v1083 = vadd.f32 %v874, %v1051
    %v1084 = vadd.f32 %v875, %v1052
    %v1085 = vadd.f32 %v876, %v1053
    %v1086 = vadd.f32 %v877, %v1054
    %v1087 = vadd.f32 %v878, %v1055
    %v1088 = vadd.f32 %v879, %v1056
    %v1089 = vadd.f32 %v880, %v1057
    %s1090 = scalar_lea.vmem %s1, 640
    %v1091 = vld [vmem:[%s1090] sm:$0xff]
    %v1092 = vld [vmem:[%s1090 + $0x8] sm:$0xff]
    %v1093 = vld [vmem:[%s1090 + $0x10] sm:$0xff]
    %v1094 = vld [vmem:[%s1090 + $0x18] sm:$0xff]
    %v1095 = vld [vmem:[%s1090 + $0x20] sm:$0xff]
    %v1096 = vld [vmem:[%s1090 + $0x28] sm:$0xff]
    %v1097 = vld [vmem:[%s1090 + $0x30] sm:$0xff]
    %v1098 = vld [vmem:[%s1090 + $0x38] sm:$0xff]
    %v1099 = vld [vmem:[%s1090 + $0x40] sm:$0xff]
    %v1100 = vld [vmem:[%s1090 + $0x48] sm:$0xff]
    %v1101 = vld [vmem:[%s1090 + $0x50] sm:$0xff]
    %v1102 = vld [vmem:[%s1090 + $0x58] sm:$0xff]
    %v1103 = vld [vmem:[%s1090 + $0x60] sm:$0xff]
    %v1104 = vld [vmem:[%s1090 + $0x68] sm:$0xff]
    %v1105 = vld [vmem:[%s1090 + $0x70] sm:$0xff]
    %v1106 = vld [vmem:[%s1090 + $0x78] sm:$0xff]
    %1107 = vset.pattern.permute.xlu0 5
    %1108 = vperm.xlu0 %1107, %v14
    %v1109 = vpop.permute.xlu0 %1108
    %1111 = vset.pattern.permute.xlu0 5
    %1112 = vperm.xlu0 %1111, %v15
    %v1113 = vpop.permute.xlu0 %1112
    %1115 = vset.pattern.permute.xlu0 5
    %1116 = vperm.xlu0 %1115, %v16
    %v1117 = vpop.permute.xlu0 %1116
    %1119 = vset.pattern.permute.xlu0 5
    %1120 = vperm.xlu0 %1119, %v17
    %v1121 = vpop.permute.xlu0 %1120
    %1123 = vset.pattern.permute.xlu0 5
    %1124 = vperm.xlu0 %1123, %v18
    %v1125 = vpop.permute.xlu0 %1124
    %1127 = vset.pattern.permute.xlu0 5
    %1128 = vperm.xlu0 %1127, %v19
    %v1129 = vpop.permute.xlu0 %1128
    %1131 = vset.pattern.permute.xlu0 5
    %1132 = vperm.xlu0 %1131, %v20
    %v1133 = vpop.permute.xlu0 %1132
    %1135 = vset.pattern.permute.xlu0 5
    %1136 = vperm.xlu0 %1135, %v21
    %v1137 = vpop.permute.xlu0 %1136
    %1139 = vset.pattern.permute.xlu0 5
    %1140 = vperm.xlu0 %1139, %v22
    %v1141 = vpop.permute.xlu0 %1140
    %1143 = vset.pattern.permute.xlu0 5
    %1144 = vperm.xlu0 %1143, %v23
    %v1145 = vpop.permute.xlu0 %1144
    %1147 = vset.pattern.permute.xlu0 5
    %1148 = vperm.xlu0 %1147, %v24
    %v1149 = vpop.permute.xlu0 %1148
    %1151 = vset.pattern.permute.xlu0 5
    %1152 = vperm.xlu0 %1151, %v25
    %v1153 = vpop.permute.xlu0 %1152
    %1155 = vset.pattern.permute.xlu0 5
    %1156 = vperm.xlu0 %1155, %v26
    %v1157 = vpop.permute.xlu0 %1156
    %1159 = vset.pattern.permute.xlu0 5
    %1160 = vperm.xlu0 %1159, %v27
    %v1161 = vpop.permute.xlu0 %1160
    %1163 = vset.pattern.permute.xlu0 5
    %1164 = vperm.xlu0 %1163, %v28
    %v1165 = vpop.permute.xlu0 %1164
    %1167 = vset.pattern.permute.xlu0 5
    %1168 = vperm.xlu0 %1167, %v29
    %v1169 = vpop.permute.xlu0 %1168
    %1171 = vset.pattern.permute.xlu0 5
    %1172 = vperm.xlu0 %1171, %v30
    %v1173 = vpop.permute.xlu0 %1172
    %1175 = vset.pattern.permute.xlu0 5
    %1176 = vperm.xlu0 %1175, %v31
    %v1177 = vpop.permute.xlu0 %1176
    %1179 = vset.pattern.permute.xlu0 5
    %1180 = vperm.xlu0 %1179, %v32
    %v1181 = vpop.permute.xlu0 %1180
    %1183 = vset.pattern.permute.xlu0 5
    %1184 = vperm.xlu0 %1183, %v33
    %v1185 = vpop.permute.xlu0 %1184
    %1187 = vset.pattern.permute.xlu0 5
    %1188 = vperm.xlu0 %1187, %v34
    %v1189 = vpop.permute.xlu0 %1188
    %1191 = vset.pattern.permute.xlu0 5
    %1192 = vperm.xlu0 %1191, %v35
    %v1193 = vpop.permute.xlu0 %1192
    %1195 = vset.pattern.permute.xlu0 5
    %1196 = vperm.xlu0 %1195, %v36
    %v1197 = vpop.permute.xlu0 %1196
    %1199 = vset.pattern.permute.xlu0 5
    %1200 = vperm.xlu0 %1199, %v37
    %v1201 = vpop.permute.xlu0 %1200
    %1203 = vset.pattern.permute.xlu0 5
    %1204 = vperm.xlu0 %1203, %v38
    %v1205 = vpop.permute.xlu0 %1204
    %1207 = vset.pattern.permute.xlu0 5
    %1208 = vperm.xlu0 %1207, %v39
    %v1209 = vpop.permute.xlu0 %1208
    %1211 = vset.pattern.permute.xlu0 5
    %1212 = vperm.xlu0 %1211, %v40
    %v1213 = vpop.permute.xlu0 %1212
    %1215 = vset.pattern.permute.xlu0 5
    %1216 = vperm.xlu0 %1215, %v41
    %v1217 = vpop.permute.xlu0 %1216
    %1219 = vset.pattern.permute.xlu0 5
    %1220 = vperm.xlu0 %1219, %v42
    %v1221 = vpop.permute.xlu0 %1220
    %1223 = vset.pattern.permute.xlu0 5
    %1224 = vperm.xlu0 %1223, %v43
    %v1225 = vpop.permute.xlu0 %1224
    %1227 = vset.pattern.permute.xlu0 5
    %1228 = vperm.xlu0 %1227, %v44
    %v1229 = vpop.permute.xlu0 %1228
    %1231 = vset.pattern.permute.xlu0 5
    %1232 = vperm.xlu0 %1231, %v45
    %v1233 = vpop.permute.xlu0 %1232
    %v1235 = vmul.f32 %v1109, %v1091
    %v1236 = vmul.f32 %v1113, %v1092
    %v1237 = vmul.f32 %v1117, %v1093
    %v1238 = vmul.f32 %v1121, %v1094
    %v1239 = vmul.f32 %v1125, %v1095
    %v1240 = vmul.f32 %v1129, %v1096
    %v1241 = vmul.f32 %v1133, %v1097
    %v1242 = vmul.f32 %v1137, %v1098
    %v1243 = vmul.f32 %v1141, %v1099
    %v1244 = vmul.f32 %v1145, %v1100
    %v1245 = vmul.f32 %v1149, %v1101
    %v1246 = vmul.f32 %v1153, %v1102
    %v1247 = vmul.f32 %v1157, %v1103
    %v1248 = vmul.f32 %v1161, %v1104
    %v1249 = vmul.f32 %v1165, %v1105
    %v1250 = vmul.f32 %v1169, %v1106
    %v1251 = vmul.f32 %v1173, %v1091
    %v1252 = vmul.f32 %v1177, %v1092
    %v1253 = vmul.f32 %v1181, %v1093
    %v1254 = vmul.f32 %v1185, %v1094
    %v1255 = vmul.f32 %v1189, %v1095
    %v1256 = vmul.f32 %v1193, %v1096
    %v1257 = vmul.f32 %v1197, %v1097
    %v1258 = vmul.f32 %v1201, %v1098
    %v1259 = vmul.f32 %v1205, %v1099
    %v1260 = vmul.f32 %v1209, %v1100
    %v1261 = vmul.f32 %v1213, %v1101
    %v1262 = vmul.f32 %v1217, %v1102
    %v1263 = vmul.f32 %v1221, %v1103
    %v1264 = vmul.f32 %v1225, %v1104
    %v1265 = vmul.f32 %v1229, %v1105
    %v1266 = vmul.f32 %v1233, %v1106
    %v1267 = vadd.f32 %v1058, %v1235
    %v1268 = vadd.f32 %v1059, %v1236
    %v1269 = vadd.f32 %v1060, %v1237
    %v1270 = vadd.f32 %v1061, %v1238
    %v1271 = vadd.f32 %v1062, %v1239
    %v1272 = vadd.f32 %v1063, %v1240
    %v1273 = vadd.f32 %v1064, %v1241
    %v1274 = vadd.f32 %v1065, %v1242
    %v1275 = vadd.f32 %v1066, %v1243
    %v1276 = vadd.f32 %v1067, %v1244
    %v1277 = vadd.f32 %v1068, %v1245
    %v1278 = vadd.f32 %v1069, %v1246
    %v1279 = vadd.f32 %v1070, %v1247
    %v1280 = vadd.f32 %v1071, %v1248
    %v1281 = vadd.f32 %v1072, %v1249
    %v1282 = vadd.f32 %v1073, %v1250
    %v1283 = vadd.f32 %v1074, %v1251
    %v1284 = vadd.f32 %v1075, %v1252
    %v1285 = vadd.f32 %v1076, %v1253
    %v1286 = vadd.f32 %v1077, %v1254
    %v1287 = vadd.f32 %v1078, %v1255
    %v1288 = vadd.f32 %v1079, %v1256
    %v1289 = vadd.f32 %v1080, %v1257
    %v1290 = vadd.f32 %v1081, %v1258
    %v1291 = vadd.f32 %v1082, %v1259
    %v1292 = vadd.f32 %v1083, %v1260
    %v1293 = vadd.f32 %v1084, %v1261
    %v1294 = vadd.f32 %v1085, %v1262
    %v1295 = vadd.f32 %v1086, %v1263
    %v1296 = vadd.f32 %v1087, %v1264
    %v1297 = vadd.f32 %v1088, %v1265
    %v1298 = vadd.f32 %v1089, %v1266
    %s1299 = scalar_lea.vmem %s1, 768
    %v1300 = vld [vmem:[%s1299] sm:$0xff]
    %v1301 = vld [vmem:[%s1299 + $0x8] sm:$0xff]
    %v1302 = vld [vmem:[%s1299 + $0x10] sm:$0xff]
    %v1303 = vld [vmem:[%s1299 + $0x18] sm:$0xff]
    %v1304 = vld [vmem:[%s1299 + $0x20] sm:$0xff]
    %v1305 = vld [vmem:[%s1299 + $0x28] sm:$0xff]
    %v1306 = vld [vmem:[%s1299 + $0x30] sm:$0xff]
    %v1307 = vld [vmem:[%s1299 + $0x38] sm:$0xff]
    %v1308 = vld [vmem:[%s1299 + $0x40] sm:$0xff]
    %v1309 = vld [vmem:[%s1299 + $0x48] sm:$0xff]
    %v1310 = vld [vmem:[%s1299 + $0x50] sm:$0xff]
    %v1311 = vld [vmem:[%s1299 + $0x58] sm:$0xff]
    %v1312 = vld [vmem:[%s1299 + $0x60] sm:$0xff]
    %v1313 = vld [vmem:[%s1299 + $0x68] sm:$0xff]
    %v1314 = vld [vmem:[%s1299 + $0x70] sm:$0xff]
    %v1315 = vld [vmem:[%s1299 + $0x78] sm:$0xff]
    %1316 = vset.pattern.permute.xlu0 6
    %1317 = vperm.xlu0 %1316, %v14
    %v1318 = vpop.permute.xlu0 %1317
    %1320 = vset.pattern.permute.xlu0 6
    %1321 = vperm.xlu0 %1320, %v15
    %v1322 = vpop.permute.xlu0 %1321
    %1324 = vset.pattern.permute.xlu0 6
    %1325 = vperm.xlu0 %1324, %v16
    %v1326 = vpop.permute.xlu0 %1325
    %1328 = vset.pattern.permute.xlu0 6
    %1329 = vperm.xlu0 %1328, %v17
    %v1330 = vpop.permute.xlu0 %1329
    %1332 = vset.pattern.permute.xlu0 6
    %1333 = vperm.xlu0 %1332, %v18
    %v1334 = vpop.permute.xlu0 %1333
    %1336 = vset.pattern.permute.xlu0 6
    %1337 = vperm.xlu0 %1336, %v19
    %v1338 = vpop.permute.xlu0 %1337
    %1340 = vset.pattern.permute.xlu0 6
    %1341 = vperm.xlu0 %1340, %v20
    %v1342 = vpop.permute.xlu0 %1341
    %1344 = vset.pattern.permute.xlu0 6
    %1345 = vperm.xlu0 %1344, %v21
    %v1346 = vpop.permute.xlu0 %1345
    %1348 = vset.pattern.permute.xlu0 6
    %1349 = vperm.xlu0 %1348, %v22
    %v1350 = vpop.permute.xlu0 %1349
    %1352 = vset.pattern.permute.xlu0 6
    %1353 = vperm.xlu0 %1352, %v23
    %v1354 = vpop.permute.xlu0 %1353
    %1356 = vset.pattern.permute.xlu0 6
    %1357 = vperm.xlu0 %1356, %v24
    %v1358 = vpop.permute.xlu0 %1357
    %1360 = vset.pattern.permute.xlu0 6
    %1361 = vperm.xlu0 %1360, %v25
    %v1362 = vpop.permute.xlu0 %1361
    %1364 = vset.pattern.permute.xlu0 6
    %1365 = vperm.xlu0 %1364, %v26
    %v1366 = vpop.permute.xlu0 %1365
    %1368 = vset.pattern.permute.xlu0 6
    %1369 = vperm.xlu0 %1368, %v27
    %v1370 = vpop.permute.xlu0 %1369
    %1372 = vset.pattern.permute.xlu0 6
    %1373 = vperm.xlu0 %1372, %v28
    %v1374 = vpop.permute.xlu0 %1373
    %1376 = vset.pattern.permute.xlu0 6
    %1377 = vperm.xlu0 %1376, %v29
    %v1378 = vpop.permute.xlu0 %1377
    %1380 = vset.pattern.permute.xlu0 6
    %1381 = vperm.xlu0 %1380, %v30
    %v1382 = vpop.permute.xlu0 %1381
    %1384 = vset.pattern.permute.xlu0 6
    %1385 = vperm.xlu0 %1384, %v31
    %v1386 = vpop.permute.xlu0 %1385
    %1388 = vset.pattern.permute.xlu0 6
    %1389 = vperm.xlu0 %1388, %v32
    %v1390 = vpop.permute.xlu0 %1389
    %1392 = vset.pattern.permute.xlu0 6
    %1393 = vperm.xlu0 %1392, %v33
    %v1394 = vpop.permute.xlu0 %1393
    %1396 = vset.pattern.permute.xlu0 6
    %1397 = vperm.xlu0 %1396, %v34
    %v1398 = vpop.permute.xlu0 %1397
    %1400 = vset.pattern.permute.xlu0 6
    %1401 = vperm.xlu0 %1400, %v35
    %v1402 = vpop.permute.xlu0 %1401
    %1404 = vset.pattern.permute.xlu0 6
    %1405 = vperm.xlu0 %1404, %v36
    %v1406 = vpop.permute.xlu0 %1405
    %1408 = vset.pattern.permute.xlu0 6
    %1409 = vperm.xlu0 %1408, %v37
    %v1410 = vpop.permute.xlu0 %1409
    %1412 = vset.pattern.permute.xlu0 6
    %1413 = vperm.xlu0 %1412, %v38
    %v1414 = vpop.permute.xlu0 %1413
    %1416 = vset.pattern.permute.xlu0 6
    %1417 = vperm.xlu0 %1416, %v39
    %v1418 = vpop.permute.xlu0 %1417
    %1420 = vset.pattern.permute.xlu0 6
    %1421 = vperm.xlu0 %1420, %v40
    %v1422 = vpop.permute.xlu0 %1421
    %1424 = vset.pattern.permute.xlu0 6
    %1425 = vperm.xlu0 %1424, %v41
    %v1426 = vpop.permute.xlu0 %1425
    %1428 = vset.pattern.permute.xlu0 6
    %1429 = vperm.xlu0 %1428, %v42
    %v1430 = vpop.permute.xlu0 %1429
    %1432 = vset.pattern.permute.xlu0 6
    %1433 = vperm.xlu0 %1432, %v43
    %v1434 = vpop.permute.xlu0 %1433
    %1436 = vset.pattern.permute.xlu0 6
    %1437 = vperm.xlu0 %1436, %v44
    %v1438 = vpop.permute.xlu0 %1437
    %1440 = vset.pattern.permute.xlu0 6
    %1441 = vperm.xlu0 %1440, %v45
    %v1442 = vpop.permute.xlu0 %1441
    %v1444 = vmul.f32 %v1318, %v1300
    %v1445 = vmul.f32 %v1322, %v1301
    %v1446 = vmul.f32 %v1326, %v1302
    %v1447 = vmul.f32 %v1330, %v1303
    %v1448 = vmul.f32 %v1334, %v1304
    %v1449 = vmul.f32 %v1338, %v1305
    %v1450 = vmul.f32 %v1342, %v1306
    %v1451 = vmul.f32 %v1346, %v1307
    %v1452 = vmul.f32 %v1350, %v1308
    %v1453 = vmul.f32 %v1354, %v1309
    %v1454 = vmul.f32 %v1358, %v1310
    %v1455 = vmul.f32 %v1362, %v1311
    %v1456 = vmul.f32 %v1366, %v1312
    %v1457 = vmul.f32 %v1370, %v1313
    %v1458 = vmul.f32 %v1374, %v1314
    %v1459 = vmul.f32 %v1378, %v1315
    %v1460 = vmul.f32 %v1382, %v1300
    %v1461 = vmul.f32 %v1386, %v1301
    %v1462 = vmul.f32 %v1390, %v1302
    %v1463 = vmul.f32 %v1394, %v1303
    %v1464 = vmul.f32 %v1398, %v1304
    %v1465 = vmul.f32 %v1402, %v1305
    %v1466 = vmul.f32 %v1406, %v1306
    %v1467 = vmul.f32 %v1410, %v1307
    %v1468 = vmul.f32 %v1414, %v1308
    %v1469 = vmul.f32 %v1418, %v1309
    %v1470 = vmul.f32 %v1422, %v1310
    %v1471 = vmul.f32 %v1426, %v1311
    %v1472 = vmul.f32 %v1430, %v1312
    %v1473 = vmul.f32 %v1434, %v1313
    %v1474 = vmul.f32 %v1438, %v1314
    %v1475 = vmul.f32 %v1442, %v1315
    %v1476 = vadd.f32 %v1267, %v1444
    %v1477 = vadd.f32 %v1268, %v1445
    %v1478 = vadd.f32 %v1269, %v1446
    %v1479 = vadd.f32 %v1270, %v1447
    %v1480 = vadd.f32 %v1271, %v1448
    %v1481 = vadd.f32 %v1272, %v1449
    %v1482 = vadd.f32 %v1273, %v1450
    %v1483 = vadd.f32 %v1274, %v1451
    %v1484 = vadd.f32 %v1275, %v1452
    %v1485 = vadd.f32 %v1276, %v1453
    %v1486 = vadd.f32 %v1277, %v1454
    %v1487 = vadd.f32 %v1278, %v1455
    %v1488 = vadd.f32 %v1279, %v1456
    %v1489 = vadd.f32 %v1280, %v1457
    %v1490 = vadd.f32 %v1281, %v1458
    %v1491 = vadd.f32 %v1282, %v1459
    %v1492 = vadd.f32 %v1283, %v1460
    %v1493 = vadd.f32 %v1284, %v1461
    %v1494 = vadd.f32 %v1285, %v1462
    %v1495 = vadd.f32 %v1286, %v1463
    %v1496 = vadd.f32 %v1287, %v1464
    %v1497 = vadd.f32 %v1288, %v1465
    %v1498 = vadd.f32 %v1289, %v1466
    %v1499 = vadd.f32 %v1290, %v1467
    %v1500 = vadd.f32 %v1291, %v1468
    %v1501 = vadd.f32 %v1292, %v1469
    %v1502 = vadd.f32 %v1293, %v1470
    %v1503 = vadd.f32 %v1294, %v1471
    %v1504 = vadd.f32 %v1295, %v1472
    %v1505 = vadd.f32 %v1296, %v1473
    %v1506 = vadd.f32 %v1297, %v1474
    %v1507 = vadd.f32 %v1298, %v1475
    %s1508 = scalar_lea.vmem %s1, 896
    %v1509 = vld [vmem:[%s1508] sm:$0xff]
    %v1510 = vld [vmem:[%s1508 + $0x8] sm:$0xff]
    %v1511 = vld [vmem:[%s1508 + $0x10] sm:$0xff]
    %v1512 = vld [vmem:[%s1508 + $0x18] sm:$0xff]
    %v1513 = vld [vmem:[%s1508 + $0x20] sm:$0xff]
    %v1514 = vld [vmem:[%s1508 + $0x28] sm:$0xff]
    %v1515 = vld [vmem:[%s1508 + $0x30] sm:$0xff]
    %v1516 = vld [vmem:[%s1508 + $0x38] sm:$0xff]
    %v1517 = vld [vmem:[%s1508 + $0x40] sm:$0xff]
    %v1518 = vld [vmem:[%s1508 + $0x48] sm:$0xff]
    %v1519 = vld [vmem:[%s1508 + $0x50] sm:$0xff]
    %v1520 = vld [vmem:[%s1508 + $0x58] sm:$0xff]
    %v1521 = vld [vmem:[%s1508 + $0x60] sm:$0xff]
    %v1522 = vld [vmem:[%s1508 + $0x68] sm:$0xff]
    %v1523 = vld [vmem:[%s1508 + $0x70] sm:$0xff]
    %v1524 = vld [vmem:[%s1508 + $0x78] sm:$0xff]
    %1525 = vset.pattern.permute.xlu0 7
    %1526 = vperm.xlu0 %1525, %v14
    %v1527 = vpop.permute.xlu0 %1526
    %1529 = vset.pattern.permute.xlu0 7
    %1530 = vperm.xlu0 %1529, %v15
    %v1531 = vpop.permute.xlu0 %1530
    %1533 = vset.pattern.permute.xlu0 7
    %1534 = vperm.xlu0 %1533, %v16
    %v1535 = vpop.permute.xlu0 %1534
    %1537 = vset.pattern.permute.xlu0 7
    %1538 = vperm.xlu0 %1537, %v17
    %v1539 = vpop.permute.xlu0 %1538
    %1541 = vset.pattern.permute.xlu0 7
    %1542 = vperm.xlu0 %1541, %v18
    %v1543 = vpop.permute.xlu0 %1542
    %1545 = vset.pattern.permute.xlu0 7
    %1546 = vperm.xlu0 %1545, %v19
    %v1547 = vpop.permute.xlu0 %1546
    %1549 = vset.pattern.permute.xlu0 7
    %1550 = vperm.xlu0 %1549, %v20
    %v1551 = vpop.permute.xlu0 %1550
    %1553 = vset.pattern.permute.xlu0 7
    %1554 = vperm.xlu0 %1553, %v21
    %v1555 = vpop.permute.xlu0 %1554
    %1557 = vset.pattern.permute.xlu0 7
    %1558 = vperm.xlu0 %1557, %v22
    %v1559 = vpop.permute.xlu0 %1558
    %1561 = vset.pattern.permute.xlu0 7
    %1562 = vperm.xlu0 %1561, %v23
    %v1563 = vpop.permute.xlu0 %1562
    %1565 = vset.pattern.permute.xlu0 7
    %1566 = vperm.xlu0 %1565, %v24
    %v1567 = vpop.permute.xlu0 %1566
    %1569 = vset.pattern.permute.xlu0 7
    %1570 = vperm.xlu0 %1569, %v25
    %v1571 = vpop.permute.xlu0 %1570
    %1573 = vset.pattern.permute.xlu0 7
    %1574 = vperm.xlu0 %1573, %v26
    %v1575 = vpop.permute.xlu0 %1574
    %1577 = vset.pattern.permute.xlu0 7
    %1578 = vperm.xlu0 %1577, %v27
    %v1579 = vpop.permute.xlu0 %1578
    %1581 = vset.pattern.permute.xlu0 7
    %1582 = vperm.xlu0 %1581, %v28
    %v1583 = vpop.permute.xlu0 %1582
    %1585 = vset.pattern.permute.xlu0 7
    %1586 = vperm.xlu0 %1585, %v29
    %v1587 = vpop.permute.xlu0 %1586
    %1589 = vset.pattern.permute.xlu0 7
    %1590 = vperm.xlu0 %1589, %v30
    %v1591 = vpop.permute.xlu0 %1590
    %1593 = vset.pattern.permute.xlu0 7
    %1594 = vperm.xlu0 %1593, %v31
    %v1595 = vpop.permute.xlu0 %1594
    %1597 = vset.pattern.permute.xlu0 7
    %1598 = vperm.xlu0 %1597, %v32
    %v1599 = vpop.permute.xlu0 %1598
    %1601 = vset.pattern.permute.xlu0 7
    %1602 = vperm.xlu0 %1601, %v33
    %v1603 = vpop.permute.xlu0 %1602
    %1605 = vset.pattern.permute.xlu0 7
    %1606 = vperm.xlu0 %1605, %v34
    %v1607 = vpop.permute.xlu0 %1606
    %1609 = vset.pattern.permute.xlu0 7
    %1610 = vperm.xlu0 %1609, %v35
    %v1611 = vpop.permute.xlu0 %1610
    %1613 = vset.pattern.permute.xlu0 7
    %1614 = vperm.xlu0 %1613, %v36
    %v1615 = vpop.permute.xlu0 %1614
    %1617 = vset.pattern.permute.xlu0 7
    %1618 = vperm.xlu0 %1617, %v37
    %v1619 = vpop.permute.xlu0 %1618
    %1621 = vset.pattern.permute.xlu0 7
    %1622 = vperm.xlu0 %1621, %v38
    %v1623 = vpop.permute.xlu0 %1622
    %1625 = vset.pattern.permute.xlu0 7
    %1626 = vperm.xlu0 %1625, %v39
    %v1627 = vpop.permute.xlu0 %1626
    %1629 = vset.pattern.permute.xlu0 7
    %1630 = vperm.xlu0 %1629, %v40
    %v1631 = vpop.permute.xlu0 %1630
    %1633 = vset.pattern.permute.xlu0 7
    %1634 = vperm.xlu0 %1633, %v41
    %v1635 = vpop.permute.xlu0 %1634
    %1637 = vset.pattern.permute.xlu0 7
    %1638 = vperm.xlu0 %1637, %v42
    %v1639 = vpop.permute.xlu0 %1638
    %1641 = vset.pattern.permute.xlu0 7
    %1642 = vperm.xlu0 %1641, %v43
    %v1643 = vpop.permute.xlu0 %1642
    %1645 = vset.pattern.permute.xlu0 7
    %1646 = vperm.xlu0 %1645, %v44
    %v1647 = vpop.permute.xlu0 %1646
    %1649 = vset.pattern.permute.xlu0 7
    %1650 = vperm.xlu0 %1649, %v45
    %v1651 = vpop.permute.xlu0 %1650
    %v1653 = vmul.f32 %v1527, %v1509
    %v1654 = vmul.f32 %v1531, %v1510
    %v1655 = vmul.f32 %v1535, %v1511
    %v1656 = vmul.f32 %v1539, %v1512
    %v1657 = vmul.f32 %v1543, %v1513
    %v1658 = vmul.f32 %v1547, %v1514
    %v1659 = vmul.f32 %v1551, %v1515
    %v1660 = vmul.f32 %v1555, %v1516
    %v1661 = vmul.f32 %v1559, %v1517
    %v1662 = vmul.f32 %v1563, %v1518
    %v1663 = vmul.f32 %v1567, %v1519
    %v1664 = vmul.f32 %v1571, %v1520
    %v1665 = vmul.f32 %v1575, %v1521
    %v1666 = vmul.f32 %v1579, %v1522
    %v1667 = vmul.f32 %v1583, %v1523
    %v1668 = vmul.f32 %v1587, %v1524
    %v1669 = vmul.f32 %v1591, %v1509
    %v1670 = vmul.f32 %v1595, %v1510
    %v1671 = vmul.f32 %v1599, %v1511
    %v1672 = vmul.f32 %v1603, %v1512
    %v1673 = vmul.f32 %v1607, %v1513
    %v1674 = vmul.f32 %v1611, %v1514
    %v1675 = vmul.f32 %v1615, %v1515
    %v1676 = vmul.f32 %v1619, %v1516
    %v1677 = vmul.f32 %v1623, %v1517
    %v1678 = vmul.f32 %v1627, %v1518
    %v1679 = vmul.f32 %v1631, %v1519
    %v1680 = vmul.f32 %v1635, %v1520
    %v1681 = vmul.f32 %v1639, %v1521
    %v1682 = vmul.f32 %v1643, %v1522
    %v1683 = vmul.f32 %v1647, %v1523
    %v1684 = vmul.f32 %v1651, %v1524
    %v1685 = vadd.f32 %v1476, %v1653
    %v1686 = vadd.f32 %v1477, %v1654
    %v1687 = vadd.f32 %v1478, %v1655
    %v1688 = vadd.f32 %v1479, %v1656
    %v1689 = vadd.f32 %v1480, %v1657
    %v1690 = vadd.f32 %v1481, %v1658
    %v1691 = vadd.f32 %v1482, %v1659
    %v1692 = vadd.f32 %v1483, %v1660
    %v1693 = vadd.f32 %v1484, %v1661
    %v1694 = vadd.f32 %v1485, %v1662
    %v1695 = vadd.f32 %v1486, %v1663
    %v1696 = vadd.f32 %v1487, %v1664
    %v1697 = vadd.f32 %v1488, %v1665
    %v1698 = vadd.f32 %v1489, %v1666
    %v1699 = vadd.f32 %v1490, %v1667
    %v1700 = vadd.f32 %v1491, %v1668
    %v1701 = vadd.f32 %v1492, %v1669
    %v1702 = vadd.f32 %v1493, %v1670
    %v1703 = vadd.f32 %v1494, %v1671
    %v1704 = vadd.f32 %v1495, %v1672
    %v1705 = vadd.f32 %v1496, %v1673
    %v1706 = vadd.f32 %v1497, %v1674
    %v1707 = vadd.f32 %v1498, %v1675
    %v1708 = vadd.f32 %v1499, %v1676
    %v1709 = vadd.f32 %v1500, %v1677
    %v1710 = vadd.f32 %v1501, %v1678
    %v1711 = vadd.f32 %v1502, %v1679
    %v1712 = vadd.f32 %v1503, %v1680
    %v1713 = vadd.f32 %v1504, %v1681
    %v1714 = vadd.f32 %v1505, %v1682
    %v1715 = vadd.f32 %v1506, %v1683
    %v1716 = vadd.f32 %v1507, %v1684
    %s1717 = scalar_lea.vmem %s1, 1024
    %v1718 = vld [vmem:[%s1717] sm:$0xff]
    %v1719 = vld [vmem:[%s1717 + $0x8] sm:$0xff]
    %v1720 = vld [vmem:[%s1717 + $0x10] sm:$0xff]
    %v1721 = vld [vmem:[%s1717 + $0x18] sm:$0xff]
    %v1722 = vld [vmem:[%s1717 + $0x20] sm:$0xff]
    %v1723 = vld [vmem:[%s1717 + $0x28] sm:$0xff]
    %v1724 = vld [vmem:[%s1717 + $0x30] sm:$0xff]
    %v1725 = vld [vmem:[%s1717 + $0x38] sm:$0xff]
    %v1726 = vld [vmem:[%s1717 + $0x40] sm:$0xff]
    %v1727 = vld [vmem:[%s1717 + $0x48] sm:$0xff]
    %v1728 = vld [vmem:[%s1717 + $0x50] sm:$0xff]
    %v1729 = vld [vmem:[%s1717 + $0x58] sm:$0xff]
    %v1730 = vld [vmem:[%s1717 + $0x60] sm:$0xff]
    %v1731 = vld [vmem:[%s1717 + $0x68] sm:$0xff]
    %v1732 = vld [vmem:[%s1717 + $0x70] sm:$0xff]
    %v1733 = vld [vmem:[%s1717 + $0x78] sm:$0xff]
    %1734 = vset.pattern.permute.xlu0 8
    %1735 = vperm.xlu0 %1734, %v14
    %v1736 = vpop.permute.xlu0 %1735
    %1738 = vset.pattern.permute.xlu0 8
    %1739 = vperm.xlu0 %1738, %v15
    %v1740 = vpop.permute.xlu0 %1739
    %1742 = vset.pattern.permute.xlu0 8
    %1743 = vperm.xlu0 %1742, %v16
    %v1744 = vpop.permute.xlu0 %1743
    %1746 = vset.pattern.permute.xlu0 8
    %1747 = vperm.xlu0 %1746, %v17
    %v1748 = vpop.permute.xlu0 %1747
    %1750 = vset.pattern.permute.xlu0 8
    %1751 = vperm.xlu0 %1750, %v18
    %v1752 = vpop.permute.xlu0 %1751
    %1754 = vset.pattern.permute.xlu0 8
    %1755 = vperm.xlu0 %1754, %v19
    %v1756 = vpop.permute.xlu0 %1755
    %1758 = vset.pattern.permute.xlu0 8
    %1759 = vperm.xlu0 %1758, %v20
    %v1760 = vpop.permute.xlu0 %1759
    %1762 = vset.pattern.permute.xlu0 8
    %1763 = vperm.xlu0 %1762, %v21
    %v1764 = vpop.permute.xlu0 %1763
    %1766 = vset.pattern.permute.xlu0 8
    %1767 = vperm.xlu0 %1766, %v22
    %v1768 = vpop.permute.xlu0 %1767
    %1770 = vset.pattern.permute.xlu0 8
    %1771 = vperm.xlu0 %1770, %v23
    %v1772 = vpop.permute.xlu0 %1771
    %1774 = vset.pattern.permute.xlu0 8
    %1775 = vperm.xlu0 %1774, %v24
    %v1776 = vpop.permute.xlu0 %1775
    %1778 = vset.pattern.permute.xlu0 8
    %1779 = vperm.xlu0 %1778, %v25
    %v1780 = vpop.permute.xlu0 %1779
    %1782 = vset.pattern.permute.xlu0 8
    %1783 = vperm.xlu0 %1782, %v26
    %v1784 = vpop.permute.xlu0 %1783
    %1786 = vset.pattern.permute.xlu0 8
    %1787 = vperm.xlu0 %1786, %v27
    %v1788 = vpop.permute.xlu0 %1787
    %1790 = vset.pattern.permute.xlu0 8
    %1791 = vperm.xlu0 %1790, %v28
    %v1792 = vpop.permute.xlu0 %1791
    %1794 = vset.pattern.permute.xlu0 8
    %1795 = vperm.xlu0 %1794, %v29
    %v1796 = vpop.permute.xlu0 %1795
    %1798 = vset.pattern.permute.xlu0 8
    %1799 = vperm.xlu0 %1798, %v30
    %v1800 = vpop.permute.xlu0 %1799
    %1802 = vset.pattern.permute.xlu0 8
    %1803 = vperm.xlu0 %1802, %v31
    %v1804 = vpop.permute.xlu0 %1803
    %1806 = vset.pattern.permute.xlu0 8
    %1807 = vperm.xlu0 %1806, %v32
    %v1808 = vpop.permute.xlu0 %1807
    %1810 = vset.pattern.permute.xlu0 8
    %1811 = vperm.xlu0 %1810, %v33
    %v1812 = vpop.permute.xlu0 %1811
    %1814 = vset.pattern.permute.xlu0 8
    %1815 = vperm.xlu0 %1814, %v34
    %v1816 = vpop.permute.xlu0 %1815
    %1818 = vset.pattern.permute.xlu0 8
    %1819 = vperm.xlu0 %1818, %v35
    %v1820 = vpop.permute.xlu0 %1819
    %1822 = vset.pattern.permute.xlu0 8
    %1823 = vperm.xlu0 %1822, %v36
    %v1824 = vpop.permute.xlu0 %1823
    %1826 = vset.pattern.permute.xlu0 8
    %1827 = vperm.xlu0 %1826, %v37
    %v1828 = vpop.permute.xlu0 %1827
    %1830 = vset.pattern.permute.xlu0 8
    %1831 = vperm.xlu0 %1830, %v38
    %v1832 = vpop.permute.xlu0 %1831
    %1834 = vset.pattern.permute.xlu0 8
    %1835 = vperm.xlu0 %1834, %v39
    %v1836 = vpop.permute.xlu0 %1835
    %1838 = vset.pattern.permute.xlu0 8
    %1839 = vperm.xlu0 %1838, %v40
    %v1840 = vpop.permute.xlu0 %1839
    %1842 = vset.pattern.permute.xlu0 8
    %1843 = vperm.xlu0 %1842, %v41
    %v1844 = vpop.permute.xlu0 %1843
    %1846 = vset.pattern.permute.xlu0 8
    %1847 = vperm.xlu0 %1846, %v42
    %v1848 = vpop.permute.xlu0 %1847
    %1850 = vset.pattern.permute.xlu0 8
    %1851 = vperm.xlu0 %1850, %v43
    %v1852 = vpop.permute.xlu0 %1851
    %1854 = vset.pattern.permute.xlu0 8
    %1855 = vperm.xlu0 %1854, %v44
    %v1856 = vpop.permute.xlu0 %1855
    %1858 = vset.pattern.permute.xlu0 8
    %1859 = vperm.xlu0 %1858, %v45
    %v1860 = vpop.permute.xlu0 %1859
    %v1862 = vmul.f32 %v1736, %v1718
    %v1863 = vmul.f32 %v1740, %v1719
    %v1864 = vmul.f32 %v1744, %v1720
    %v1865 = vmul.f32 %v1748, %v1721
    %v1866 = vmul.f32 %v1752, %v1722
    %v1867 = vmul.f32 %v1756, %v1723
    %v1868 = vmul.f32 %v1760, %v1724
    %v1869 = vmul.f32 %v1764, %v1725
    %v1870 = vmul.f32 %v1768, %v1726
    %v1871 = vmul.f32 %v1772, %v1727
    %v1872 = vmul.f32 %v1776, %v1728
    %v1873 = vmul.f32 %v1780, %v1729
    %v1874 = vmul.f32 %v1784, %v1730
    %v1875 = vmul.f32 %v1788, %v1731
    %v1876 = vmul.f32 %v1792, %v1732
    %v1877 = vmul.f32 %v1796, %v1733
    %v1878 = vmul.f32 %v1800, %v1718
    %v1879 = vmul.f32 %v1804, %v1719
    %v1880 = vmul.f32 %v1808, %v1720
    %v1881 = vmul.f32 %v1812, %v1721
    %v1882 = vmul.f32 %v1816, %v1722
    %v1883 = vmul.f32 %v1820, %v1723
    %v1884 = vmul.f32 %v1824, %v1724
    %v1885 = vmul.f32 %v1828, %v1725
    %v1886 = vmul.f32 %v1832, %v1726
    %v1887 = vmul.f32 %v1836, %v1727
    %v1888 = vmul.f32 %v1840, %v1728
    %v1889 = vmul.f32 %v1844, %v1729
    %v1890 = vmul.f32 %v1848, %v1730
    %v1891 = vmul.f32 %v1852, %v1731
    %v1892 = vmul.f32 %v1856, %v1732
    %v1893 = vmul.f32 %v1860, %v1733
    %v1894 = vadd.f32 %v1685, %v1862
    %v1895 = vadd.f32 %v1686, %v1863
    %v1896 = vadd.f32 %v1687, %v1864
    %v1897 = vadd.f32 %v1688, %v1865
    %v1898 = vadd.f32 %v1689, %v1866
    %v1899 = vadd.f32 %v1690, %v1867
    %v1900 = vadd.f32 %v1691, %v1868
    %v1901 = vadd.f32 %v1692, %v1869
    %v1902 = vadd.f32 %v1693, %v1870
    %v1903 = vadd.f32 %v1694, %v1871
    %v1904 = vadd.f32 %v1695, %v1872
    %v1905 = vadd.f32 %v1696, %v1873
    %v1906 = vadd.f32 %v1697, %v1874
    %v1907 = vadd.f32 %v1698, %v1875
    %v1908 = vadd.f32 %v1699, %v1876
    %v1909 = vadd.f32 %v1700, %v1877
    %v1910 = vadd.f32 %v1701, %v1878
    %v1911 = vadd.f32 %v1702, %v1879
    %v1912 = vadd.f32 %v1703, %v1880
    %v1913 = vadd.f32 %v1704, %v1881
    %v1914 = vadd.f32 %v1705, %v1882
    %v1915 = vadd.f32 %v1706, %v1883
    %v1916 = vadd.f32 %v1707, %v1884
    %v1917 = vadd.f32 %v1708, %v1885
    %v1918 = vadd.f32 %v1709, %v1886
    %v1919 = vadd.f32 %v1710, %v1887
    %v1920 = vadd.f32 %v1711, %v1888
    %v1921 = vadd.f32 %v1712, %v1889
    %v1922 = vadd.f32 %v1713, %v1890
    %v1923 = vadd.f32 %v1714, %v1891
    %v1924 = vadd.f32 %v1715, %v1892
    %v1925 = vadd.f32 %v1716, %v1893
    %s1926 = scalar_lea.vmem %s1, 1152
    %v1927 = vld [vmem:[%s1926] sm:$0xff]
    %v1928 = vld [vmem:[%s1926 + $0x8] sm:$0xff]
    %v1929 = vld [vmem:[%s1926 + $0x10] sm:$0xff]
    %v1930 = vld [vmem:[%s1926 + $0x18] sm:$0xff]
    %v1931 = vld [vmem:[%s1926 + $0x20] sm:$0xff]
    %v1932 = vld [vmem:[%s1926 + $0x28] sm:$0xff]
    %v1933 = vld [vmem:[%s1926 + $0x30] sm:$0xff]
    %v1934 = vld [vmem:[%s1926 + $0x38] sm:$0xff]
    %v1935 = vld [vmem:[%s1926 + $0x40] sm:$0xff]
    %v1936 = vld [vmem:[%s1926 + $0x48] sm:$0xff]
    %v1937 = vld [vmem:[%s1926 + $0x50] sm:$0xff]
    %v1938 = vld [vmem:[%s1926 + $0x58] sm:$0xff]
    %v1939 = vld [vmem:[%s1926 + $0x60] sm:$0xff]
    %v1940 = vld [vmem:[%s1926 + $0x68] sm:$0xff]
    %v1941 = vld [vmem:[%s1926 + $0x70] sm:$0xff]
    %v1942 = vld [vmem:[%s1926 + $0x78] sm:$0xff]
    %1943 = vset.pattern.permute.xlu0 9
    %1944 = vperm.xlu0 %1943, %v14
    %v1945 = vpop.permute.xlu0 %1944
    %1947 = vset.pattern.permute.xlu0 9
    %1948 = vperm.xlu0 %1947, %v15
    %v1949 = vpop.permute.xlu0 %1948
    %1951 = vset.pattern.permute.xlu0 9
    %1952 = vperm.xlu0 %1951, %v16
    %v1953 = vpop.permute.xlu0 %1952
    %1955 = vset.pattern.permute.xlu0 9
    %1956 = vperm.xlu0 %1955, %v17
    %v1957 = vpop.permute.xlu0 %1956
    %1959 = vset.pattern.permute.xlu0 9
    %1960 = vperm.xlu0 %1959, %v18
    %v1961 = vpop.permute.xlu0 %1960
    %1963 = vset.pattern.permute.xlu0 9
    %1964 = vperm.xlu0 %1963, %v19
    %v1965 = vpop.permute.xlu0 %1964
    %1967 = vset.pattern.permute.xlu0 9
    %1968 = vperm.xlu0 %1967, %v20
    %v1969 = vpop.permute.xlu0 %1968
    %1971 = vset.pattern.permute.xlu0 9
    %1972 = vperm.xlu0 %1971, %v21
    %v1973 = vpop.permute.xlu0 %1972
    %1975 = vset.pattern.permute.xlu0 9
    %1976 = vperm.xlu0 %1975, %v22
    %v1977 = vpop.permute.xlu0 %1976
    %1979 = vset.pattern.permute.xlu0 9
    %1980 = vperm.xlu0 %1979, %v23
    %v1981 = vpop.permute.xlu0 %1980
    %1983 = vset.pattern.permute.xlu0 9
    %1984 = vperm.xlu0 %1983, %v24
    %v1985 = vpop.permute.xlu0 %1984
    %1987 = vset.pattern.permute.xlu0 9
    %1988 = vperm.xlu0 %1987, %v25
    %v1989 = vpop.permute.xlu0 %1988
    %1991 = vset.pattern.permute.xlu0 9
    %1992 = vperm.xlu0 %1991, %v26
    %v1993 = vpop.permute.xlu0 %1992
    %1995 = vset.pattern.permute.xlu0 9
    %1996 = vperm.xlu0 %1995, %v27
    %v1997 = vpop.permute.xlu0 %1996
    %1999 = vset.pattern.permute.xlu0 9
    %2000 = vperm.xlu0 %1999, %v28
    %v2001 = vpop.permute.xlu0 %2000
    %2003 = vset.pattern.permute.xlu0 9
    %2004 = vperm.xlu0 %2003, %v29
    %v2005 = vpop.permute.xlu0 %2004
    %2007 = vset.pattern.permute.xlu0 9
    %2008 = vperm.xlu0 %2007, %v30
    %v2009 = vpop.permute.xlu0 %2008
    %2011 = vset.pattern.permute.xlu0 9
    %2012 = vperm.xlu0 %2011, %v31
    %v2013 = vpop.permute.xlu0 %2012
    %2015 = vset.pattern.permute.xlu0 9
    %2016 = vperm.xlu0 %2015, %v32
    %v2017 = vpop.permute.xlu0 %2016
    %2019 = vset.pattern.permute.xlu0 9
    %2020 = vperm.xlu0 %2019, %v33
    %v2021 = vpop.permute.xlu0 %2020
    %2023 = vset.pattern.permute.xlu0 9
    %2024 = vperm.xlu0 %2023, %v34
    %v2025 = vpop.permute.xlu0 %2024
    %2027 = vset.pattern.permute.xlu0 9
    %2028 = vperm.xlu0 %2027, %v35
    %v2029 = vpop.permute.xlu0 %2028
    %2031 = vset.pattern.permute.xlu0 9
    %2032 = vperm.xlu0 %2031, %v36
    %v2033 = vpop.permute.xlu0 %2032
    %2035 = vset.pattern.permute.xlu0 9
    %2036 = vperm.xlu0 %2035, %v37
    %v2037 = vpop.permute.xlu0 %2036
    %2039 = vset.pattern.permute.xlu0 9
    %2040 = vperm.xlu0 %2039, %v38
    %v2041 = vpop.permute.xlu0 %2040
    %2043 = vset.pattern.permute.xlu0 9
    %2044 = vperm.xlu0 %2043, %v39
    %v2045 = vpop.permute.xlu0 %2044
    %2047 = vset.pattern.permute.xlu0 9
    %2048 = vperm.xlu0 %2047, %v40
    %v2049 = vpop.permute.xlu0 %2048
    %2051 = vset.pattern.permute.xlu0 9
    %2052 = vperm.xlu0 %2051, %v41
    %v2053 = vpop.permute.xlu0 %2052
    %2055 = vset.pattern.permute.xlu0 9
    %2056 = vperm.xlu0 %2055, %v42
    %v2057 = vpop.permute.xlu0 %2056
    %2059 = vset.pattern.permute.xlu0 9
    %2060 = vperm.xlu0 %2059, %v43
    %v2061 = vpop.permute.xlu0 %2060
    %2063 = vset.pattern.permute.xlu0 9
    %2064 = vperm.xlu0 %2063, %v44
    %v2065 = vpop.permute.xlu0 %2064
    %2067 = vset.pattern.permute.xlu0 9
    %2068 = vperm.xlu0 %2067, %v45
    %v2069 = vpop.permute.xlu0 %2068
    %v2071 = vmul.f32 %v1945, %v1927
    %v2072 = vmul.f32 %v1949, %v1928
    %v2073 = vmul.f32 %v1953, %v1929
    %v2074 = vmul.f32 %v1957, %v1930
    %v2075 = vmul.f32 %v1961, %v1931
    %v2076 = vmul.f32 %v1965, %v1932
    %v2077 = vmul.f32 %v1969, %v1933
    %v2078 = vmul.f32 %v1973, %v1934
    %v2079 = vmul.f32 %v1977, %v1935
    %v2080 = vmul.f32 %v1981, %v1936
    %v2081 = vmul.f32 %v1985, %v1937
    %v2082 = vmul.f32 %v1989, %v1938
    %v2083 = vmul.f32 %v1993, %v1939
    %v2084 = vmul.f32 %v1997, %v1940
    %v2085 = vmul.f32 %v2001, %v1941
    %v2086 = vmul.f32 %v2005, %v1942
    %v2087 = vmul.f32 %v2009, %v1927
    %v2088 = vmul.f32 %v2013, %v1928
    %v2089 = vmul.f32 %v2017, %v1929
    %v2090 = vmul.f32 %v2021, %v1930
    %v2091 = vmul.f32 %v2025, %v1931
    %v2092 = vmul.f32 %v2029, %v1932
    %v2093 = vmul.f32 %v2033, %v1933
    %v2094 = vmul.f32 %v2037, %v1934
    %v2095 = vmul.f32 %v2041, %v1935
    %v2096 = vmul.f32 %v2045, %v1936
    %v2097 = vmul.f32 %v2049, %v1937
    %v2098 = vmul.f32 %v2053, %v1938
    %v2099 = vmul.f32 %v2057, %v1939
    %v2100 = vmul.f32 %v2061, %v1940
    %v2101 = vmul.f32 %v2065, %v1941
    %v2102 = vmul.f32 %v2069, %v1942
    %v2103 = vadd.f32 %v1894, %v2071
    %v2104 = vadd.f32 %v1895, %v2072
    %v2105 = vadd.f32 %v1896, %v2073
    %v2106 = vadd.f32 %v1897, %v2074
    %v2107 = vadd.f32 %v1898, %v2075
    %v2108 = vadd.f32 %v1899, %v2076
    %v2109 = vadd.f32 %v1900, %v2077
    %v2110 = vadd.f32 %v1901, %v2078
    %v2111 = vadd.f32 %v1902, %v2079
    %v2112 = vadd.f32 %v1903, %v2080
    %v2113 = vadd.f32 %v1904, %v2081
    %v2114 = vadd.f32 %v1905, %v2082
    %v2115 = vadd.f32 %v1906, %v2083
    %v2116 = vadd.f32 %v1907, %v2084
    %v2117 = vadd.f32 %v1908, %v2085
    %v2118 = vadd.f32 %v1909, %v2086
    %v2119 = vadd.f32 %v1910, %v2087
    %v2120 = vadd.f32 %v1911, %v2088
    %v2121 = vadd.f32 %v1912, %v2089
    %v2122 = vadd.f32 %v1913, %v2090
    %v2123 = vadd.f32 %v1914, %v2091
    %v2124 = vadd.f32 %v1915, %v2092
    %v2125 = vadd.f32 %v1916, %v2093
    %v2126 = vadd.f32 %v1917, %v2094
    %v2127 = vadd.f32 %v1918, %v2095
    %v2128 = vadd.f32 %v1919, %v2096
    %v2129 = vadd.f32 %v1920, %v2097
    %v2130 = vadd.f32 %v1921, %v2098
    %v2131 = vadd.f32 %v1922, %v2099
    %v2132 = vadd.f32 %v1923, %v2100
    %v2133 = vadd.f32 %v1924, %v2101
    %v2134 = vadd.f32 %v1925, %v2102
    %s2135 = scalar_lea.vmem %s1, 1280
    %v2136 = vld [vmem:[%s2135] sm:$0xff]
    %v2137 = vld [vmem:[%s2135 + $0x8] sm:$0xff]
    %v2138 = vld [vmem:[%s2135 + $0x10] sm:$0xff]
    %v2139 = vld [vmem:[%s2135 + $0x18] sm:$0xff]
    %v2140 = vld [vmem:[%s2135 + $0x20] sm:$0xff]
    %v2141 = vld [vmem:[%s2135 + $0x28] sm:$0xff]
    %v2142 = vld [vmem:[%s2135 + $0x30] sm:$0xff]
    %v2143 = vld [vmem:[%s2135 + $0x38] sm:$0xff]
    %v2144 = vld [vmem:[%s2135 + $0x40] sm:$0xff]
    %v2145 = vld [vmem:[%s2135 + $0x48] sm:$0xff]
    %v2146 = vld [vmem:[%s2135 + $0x50] sm:$0xff]
    %v2147 = vld [vmem:[%s2135 + $0x58] sm:$0xff]
    %v2148 = vld [vmem:[%s2135 + $0x60] sm:$0xff]
    %v2149 = vld [vmem:[%s2135 + $0x68] sm:$0xff]
    %v2150 = vld [vmem:[%s2135 + $0x70] sm:$0xff]
    %v2151 = vld [vmem:[%s2135 + $0x78] sm:$0xff]
    %2152 = vset.pattern.permute.xlu0 10
    %2153 = vperm.xlu0 %2152, %v14
    %v2154 = vpop.permute.xlu0 %2153
    %2156 = vset.pattern.permute.xlu0 10
    %2157 = vperm.xlu0 %2156, %v15
    %v2158 = vpop.permute.xlu0 %2157
    %2160 = vset.pattern.permute.xlu0 10
    %2161 = vperm.xlu0 %2160, %v16
    %v2162 = vpop.permute.xlu0 %2161
    %2164 = vset.pattern.permute.xlu0 10
    %2165 = vperm.xlu0 %2164, %v17
    %v2166 = vpop.permute.xlu0 %2165
    %2168 = vset.pattern.permute.xlu0 10
    %2169 = vperm.xlu0 %2168, %v18
    %v2170 = vpop.permute.xlu0 %2169
    %2172 = vset.pattern.permute.xlu0 10
    %2173 = vperm.xlu0 %2172, %v19
    %v2174 = vpop.permute.xlu0 %2173
    %2176 = vset.pattern.permute.xlu0 10
    %2177 = vperm.xlu0 %2176, %v20
    %v2178 = vpop.permute.xlu0 %2177
    %2180 = vset.pattern.permute.xlu0 10
    %2181 = vperm.xlu0 %2180, %v21
    %v2182 = vpop.permute.xlu0 %2181
    %2184 = vset.pattern.permute.xlu0 10
    %2185 = vperm.xlu0 %2184, %v22
    %v2186 = vpop.permute.xlu0 %2185
    %2188 = vset.pattern.permute.xlu0 10
    %2189 = vperm.xlu0 %2188, %v23
    %v2190 = vpop.permute.xlu0 %2189
    %2192 = vset.pattern.permute.xlu0 10
    %2193 = vperm.xlu0 %2192, %v24
    %v2194 = vpop.permute.xlu0 %2193
    %2196 = vset.pattern.permute.xlu0 10
    %2197 = vperm.xlu0 %2196, %v25
    %v2198 = vpop.permute.xlu0 %2197
    %2200 = vset.pattern.permute.xlu0 10
    %2201 = vperm.xlu0 %2200, %v26
    %v2202 = vpop.permute.xlu0 %2201
    %2204 = vset.pattern.permute.xlu0 10
    %2205 = vperm.xlu0 %2204, %v27
    %v2206 = vpop.permute.xlu0 %2205
    %2208 = vset.pattern.permute.xlu0 10
    %2209 = vperm.xlu0 %2208, %v28
    %v2210 = vpop.permute.xlu0 %2209
    %2212 = vset.pattern.permute.xlu0 10
    %2213 = vperm.xlu0 %2212, %v29
    %v2214 = vpop.permute.xlu0 %2213
    %2216 = vset.pattern.permute.xlu0 10
    %2217 = vperm.xlu0 %2216, %v30
    %v2218 = vpop.permute.xlu0 %2217
    %2220 = vset.pattern.permute.xlu0 10
    %2221 = vperm.xlu0 %2220, %v31
    %v2222 = vpop.permute.xlu0 %2221
    %2224 = vset.pattern.permute.xlu0 10
    %2225 = vperm.xlu0 %2224, %v32
    %v2226 = vpop.permute.xlu0 %2225
    %2228 = vset.pattern.permute.xlu0 10
    %2229 = vperm.xlu0 %2228, %v33
    %v2230 = vpop.permute.xlu0 %2229
    %2232 = vset.pattern.permute.xlu0 10
    %2233 = vperm.xlu0 %2232, %v34
    %v2234 = vpop.permute.xlu0 %2233
    %2236 = vset.pattern.permute.xlu0 10
    %2237 = vperm.xlu0 %2236, %v35
    %v2238 = vpop.permute.xlu0 %2237
    %2240 = vset.pattern.permute.xlu0 10
    %2241 = vperm.xlu0 %2240, %v36
    %v2242 = vpop.permute.xlu0 %2241
    %2244 = vset.pattern.permute.xlu0 10
    %2245 = vperm.xlu0 %2244, %v37
    %v2246 = vpop.permute.xlu0 %2245
    %2248 = vset.pattern.permute.xlu0 10
    %2249 = vperm.xlu0 %2248, %v38
    %v2250 = vpop.permute.xlu0 %2249
    %2252 = vset.pattern.permute.xlu0 10
    %2253 = vperm.xlu0 %2252, %v39
    %v2254 = vpop.permute.xlu0 %2253
    %2256 = vset.pattern.permute.xlu0 10
    %2257 = vperm.xlu0 %2256, %v40
    %v2258 = vpop.permute.xlu0 %2257
    %2260 = vset.pattern.permute.xlu0 10
    %2261 = vperm.xlu0 %2260, %v41
    %v2262 = vpop.permute.xlu0 %2261
    %2264 = vset.pattern.permute.xlu0 10
    %2265 = vperm.xlu0 %2264, %v42
    %v2266 = vpop.permute.xlu0 %2265
    %2268 = vset.pattern.permute.xlu0 10
    %2269 = vperm.xlu0 %2268, %v43
    %v2270 = vpop.permute.xlu0 %2269
    %2272 = vset.pattern.permute.xlu0 10
    %2273 = vperm.xlu0 %2272, %v44
    %v2274 = vpop.permute.xlu0 %2273
    %2276 = vset.pattern.permute.xlu0 10
    %2277 = vperm.xlu0 %2276, %v45
    %v2278 = vpop.permute.xlu0 %2277
    %v2280 = vmul.f32 %v2154, %v2136
    %v2281 = vmul.f32 %v2158, %v2137
    %v2282 = vmul.f32 %v2162, %v2138
    %v2283 = vmul.f32 %v2166, %v2139
    %v2284 = vmul.f32 %v2170, %v2140
    %v2285 = vmul.f32 %v2174, %v2141
    %v2286 = vmul.f32 %v2178, %v2142
    %v2287 = vmul.f32 %v2182, %v2143
    %v2288 = vmul.f32 %v2186, %v2144
    %v2289 = vmul.f32 %v2190, %v2145
    %v2290 = vmul.f32 %v2194, %v2146
    %v2291 = vmul.f32 %v2198, %v2147
    %v2292 = vmul.f32 %v2202, %v2148
    %v2293 = vmul.f32 %v2206, %v2149
    %v2294 = vmul.f32 %v2210, %v2150
    %v2295 = vmul.f32 %v2214, %v2151
    %v2296 = vmul.f32 %v2218, %v2136
    %v2297 = vmul.f32 %v2222, %v2137
    %v2298 = vmul.f32 %v2226, %v2138
    %v2299 = vmul.f32 %v2230, %v2139
    %v2300 = vmul.f32 %v2234, %v2140
    %v2301 = vmul.f32 %v2238, %v2141
    %v2302 = vmul.f32 %v2242, %v2142
    %v2303 = vmul.f32 %v2246, %v2143
    %v2304 = vmul.f32 %v2250, %v2144
    %v2305 = vmul.f32 %v2254, %v2145
    %v2306 = vmul.f32 %v2258, %v2146
    %v2307 = vmul.f32 %v2262, %v2147
    %v2308 = vmul.f32 %v2266, %v2148
    %v2309 = vmul.f32 %v2270, %v2149
    %v2310 = vmul.f32 %v2274, %v2150
    %v2311 = vmul.f32 %v2278, %v2151
    %v2312 = vadd.f32 %v2103, %v2280
    %v2313 = vadd.f32 %v2104, %v2281
    %v2314 = vadd.f32 %v2105, %v2282
    %v2315 = vadd.f32 %v2106, %v2283
    %v2316 = vadd.f32 %v2107, %v2284
    %v2317 = vadd.f32 %v2108, %v2285
    %v2318 = vadd.f32 %v2109, %v2286
    %v2319 = vadd.f32 %v2110, %v2287
    %v2320 = vadd.f32 %v2111, %v2288
    %v2321 = vadd.f32 %v2112, %v2289
    %v2322 = vadd.f32 %v2113, %v2290
    %v2323 = vadd.f32 %v2114, %v2291
    %v2324 = vadd.f32 %v2115, %v2292
    %v2325 = vadd.f32 %v2116, %v2293
    %v2326 = vadd.f32 %v2117, %v2294
    %v2327 = vadd.f32 %v2118, %v2295
    %v2328 = vadd.f32 %v2119, %v2296
    %v2329 = vadd.f32 %v2120, %v2297
    %v2330 = vadd.f32 %v2121, %v2298
    %v2331 = vadd.f32 %v2122, %v2299
    %v2332 = vadd.f32 %v2123, %v2300
    %v2333 = vadd.f32 %v2124, %v2301
    %v2334 = vadd.f32 %v2125, %v2302
    %v2335 = vadd.f32 %v2126, %v2303
    %v2336 = vadd.f32 %v2127, %v2304
    %v2337 = vadd.f32 %v2128, %v2305
    %v2338 = vadd.f32 %v2129, %v2306
    %v2339 = vadd.f32 %v2130, %v2307
    %v2340 = vadd.f32 %v2131, %v2308
    %v2341 = vadd.f32 %v2132, %v2309
    %v2342 = vadd.f32 %v2133, %v2310
    %v2343 = vadd.f32 %v2134, %v2311
    %s2344 = scalar_lea.vmem %s1, 1408
    %v2345 = vld [vmem:[%s2344] sm:$0xff]
    %v2346 = vld [vmem:[%s2344 + $0x8] sm:$0xff]
    %v2347 = vld [vmem:[%s2344 + $0x10] sm:$0xff]
    %v2348 = vld [vmem:[%s2344 + $0x18] sm:$0xff]
    %v2349 = vld [vmem:[%s2344 + $0x20] sm:$0xff]
    %v2350 = vld [vmem:[%s2344 + $0x28] sm:$0xff]
    %v2351 = vld [vmem:[%s2344 + $0x30] sm:$0xff]
    %v2352 = vld [vmem:[%s2344 + $0x38] sm:$0xff]
    %v2353 = vld [vmem:[%s2344 + $0x40] sm:$0xff]
    %v2354 = vld [vmem:[%s2344 + $0x48] sm:$0xff]
    %v2355 = vld [vmem:[%s2344 + $0x50] sm:$0xff]
    %v2356 = vld [vmem:[%s2344 + $0x58] sm:$0xff]
    %v2357 = vld [vmem:[%s2344 + $0x60] sm:$0xff]
    %v2358 = vld [vmem:[%s2344 + $0x68] sm:$0xff]
    %v2359 = vld [vmem:[%s2344 + $0x70] sm:$0xff]
    %v2360 = vld [vmem:[%s2344 + $0x78] sm:$0xff]
    %2361 = vset.pattern.permute.xlu0 11
    %2362 = vperm.xlu0 %2361, %v14
    %v2363 = vpop.permute.xlu0 %2362
    %2365 = vset.pattern.permute.xlu0 11
    %2366 = vperm.xlu0 %2365, %v15
    %v2367 = vpop.permute.xlu0 %2366
    %2369 = vset.pattern.permute.xlu0 11
    %2370 = vperm.xlu0 %2369, %v16
    %v2371 = vpop.permute.xlu0 %2370
    %2373 = vset.pattern.permute.xlu0 11
    %2374 = vperm.xlu0 %2373, %v17
    %v2375 = vpop.permute.xlu0 %2374
    %2377 = vset.pattern.permute.xlu0 11
    %2378 = vperm.xlu0 %2377, %v18
    %v2379 = vpop.permute.xlu0 %2378
    %2381 = vset.pattern.permute.xlu0 11
    %2382 = vperm.xlu0 %2381, %v19
    %v2383 = vpop.permute.xlu0 %2382
    %2385 = vset.pattern.permute.xlu0 11
    %2386 = vperm.xlu0 %2385, %v20
    %v2387 = vpop.permute.xlu0 %2386
    %2389 = vset.pattern.permute.xlu0 11
    %2390 = vperm.xlu0 %2389, %v21
    %v2391 = vpop.permute.xlu0 %2390
    %2393 = vset.pattern.permute.xlu0 11
    %2394 = vperm.xlu0 %2393, %v22
    %v2395 = vpop.permute.xlu0 %2394
    %2397 = vset.pattern.permute.xlu0 11
    %2398 = vperm.xlu0 %2397, %v23
    %v2399 = vpop.permute.xlu0 %2398
    %2401 = vset.pattern.permute.xlu0 11
    %2402 = vperm.xlu0 %2401, %v24
    %v2403 = vpop.permute.xlu0 %2402
    %2405 = vset.pattern.permute.xlu0 11
    %2406 = vperm.xlu0 %2405, %v25
    %v2407 = vpop.permute.xlu0 %2406
    %2409 = vset.pattern.permute.xlu0 11
    %2410 = vperm.xlu0 %2409, %v26
    %v2411 = vpop.permute.xlu0 %2410
    %2413 = vset.pattern.permute.xlu0 11
    %2414 = vperm.xlu0 %2413, %v27
    %v2415 = vpop.permute.xlu0 %2414
    %2417 = vset.pattern.permute.xlu0 11
    %2418 = vperm.xlu0 %2417, %v28
    %v2419 = vpop.permute.xlu0 %2418
    %2421 = vset.pattern.permute.xlu0 11
    %2422 = vperm.xlu0 %2421, %v29
    %v2423 = vpop.permute.xlu0 %2422
    %2425 = vset.pattern.permute.xlu0 11
    %2426 = vperm.xlu0 %2425, %v30
    %v2427 = vpop.permute.xlu0 %2426
    %2429 = vset.pattern.permute.xlu0 11
    %2430 = vperm.xlu0 %2429, %v31
    %v2431 = vpop.permute.xlu0 %2430
    %2433 = vset.pattern.permute.xlu0 11
    %2434 = vperm.xlu0 %2433, %v32
    %v2435 = vpop.permute.xlu0 %2434
    %2437 = vset.pattern.permute.xlu0 11
    %2438 = vperm.xlu0 %2437, %v33
    %v2439 = vpop.permute.xlu0 %2438
    %2441 = vset.pattern.permute.xlu0 11
    %2442 = vperm.xlu0 %2441, %v34
    %v2443 = vpop.permute.xlu0 %2442
    %2445 = vset.pattern.permute.xlu0 11
    %2446 = vperm.xlu0 %2445, %v35
    %v2447 = vpop.permute.xlu0 %2446
    %2449 = vset.pattern.permute.xlu0 11
    %2450 = vperm.xlu0 %2449, %v36
    %v2451 = vpop.permute.xlu0 %2450
    %2453 = vset.pattern.permute.xlu0 11
    %2454 = vperm.xlu0 %2453, %v37
    %v2455 = vpop.permute.xlu0 %2454
    %2457 = vset.pattern.permute.xlu0 11
    %2458 = vperm.xlu0 %2457, %v38
    %v2459 = vpop.permute.xlu0 %2458
    %2461 = vset.pattern.permute.xlu0 11
    %2462 = vperm.xlu0 %2461, %v39
    %v2463 = vpop.permute.xlu0 %2462
    %2465 = vset.pattern.permute.xlu0 11
    %2466 = vperm.xlu0 %2465, %v40
    %v2467 = vpop.permute.xlu0 %2466
    %2469 = vset.pattern.permute.xlu0 11
    %2470 = vperm.xlu0 %2469, %v41
    %v2471 = vpop.permute.xlu0 %2470
    %2473 = vset.pattern.permute.xlu0 11
    %2474 = vperm.xlu0 %2473, %v42
    %v2475 = vpop.permute.xlu0 %2474
    %2477 = vset.pattern.permute.xlu0 11
    %2478 = vperm.xlu0 %2477, %v43
    %v2479 = vpop.permute.xlu0 %2478
    %2481 = vset.pattern.permute.xlu0 11
    %2482 = vperm.xlu0 %2481, %v44
    %v2483 = vpop.permute.xlu0 %2482
    %2485 = vset.pattern.permute.xlu0 11
    %2486 = vperm.xlu0 %2485, %v45
    %v2487 = vpop.permute.xlu0 %2486
    %v2489 = vmul.f32 %v2363, %v2345
    %v2490 = vmul.f32 %v2367, %v2346
    %v2491 = vmul.f32 %v2371, %v2347
    %v2492 = vmul.f32 %v2375, %v2348
    %v2493 = vmul.f32 %v2379, %v2349
    %v2494 = vmul.f32 %v2383, %v2350
    %v2495 = vmul.f32 %v2387, %v2351
    %v2496 = vmul.f32 %v2391, %v2352
    %v2497 = vmul.f32 %v2395, %v2353
    %v2498 = vmul.f32 %v2399, %v2354
    %v2499 = vmul.f32 %v2403, %v2355
    %v2500 = vmul.f32 %v2407, %v2356
    %v2501 = vmul.f32 %v2411, %v2357
    %v2502 = vmul.f32 %v2415, %v2358
    %v2503 = vmul.f32 %v2419, %v2359
    %v2504 = vmul.f32 %v2423, %v2360
    %v2505 = vmul.f32 %v2427, %v2345
    %v2506 = vmul.f32 %v2431, %v2346
    %v2507 = vmul.f32 %v2435, %v2347
    %v2508 = vmul.f32 %v2439, %v2348
    %v2509 = vmul.f32 %v2443, %v2349
    %v2510 = vmul.f32 %v2447, %v2350
    %v2511 = vmul.f32 %v2451, %v2351
    %v2512 = vmul.f32 %v2455, %v2352
    %v2513 = vmul.f32 %v2459, %v2353
    %v2514 = vmul.f32 %v2463, %v2354
    %v2515 = vmul.f32 %v2467, %v2355
    %v2516 = vmul.f32 %v2471, %v2356
    %v2517 = vmul.f32 %v2475, %v2357
    %v2518 = vmul.f32 %v2479, %v2358
    %v2519 = vmul.f32 %v2483, %v2359
    %v2520 = vmul.f32 %v2487, %v2360
    %v2521 = vadd.f32 %v2312, %v2489
    %v2522 = vadd.f32 %v2313, %v2490
    %v2523 = vadd.f32 %v2314, %v2491
    %v2524 = vadd.f32 %v2315, %v2492
    %v2525 = vadd.f32 %v2316, %v2493
    %v2526 = vadd.f32 %v2317, %v2494
    %v2527 = vadd.f32 %v2318, %v2495
    %v2528 = vadd.f32 %v2319, %v2496
    %v2529 = vadd.f32 %v2320, %v2497
    %v2530 = vadd.f32 %v2321, %v2498
    %v2531 = vadd.f32 %v2322, %v2499
    %v2532 = vadd.f32 %v2323, %v2500
    %v2533 = vadd.f32 %v2324, %v2501
    %v2534 = vadd.f32 %v2325, %v2502
    %v2535 = vadd.f32 %v2326, %v2503
    %v2536 = vadd.f32 %v2327, %v2504
    %v2537 = vadd.f32 %v2328, %v2505
    %v2538 = vadd.f32 %v2329, %v2506
    %v2539 = vadd.f32 %v2330, %v2507
    %v2540 = vadd.f32 %v2331, %v2508
    %v2541 = vadd.f32 %v2332, %v2509
    %v2542 = vadd.f32 %v2333, %v2510
    %v2543 = vadd.f32 %v2334, %v2511
    %v2544 = vadd.f32 %v2335, %v2512
    %v2545 = vadd.f32 %v2336, %v2513
    %v2546 = vadd.f32 %v2337, %v2514
    %v2547 = vadd.f32 %v2338, %v2515
    %v2548 = vadd.f32 %v2339, %v2516
    %v2549 = vadd.f32 %v2340, %v2517
    %v2550 = vadd.f32 %v2341, %v2518
    %v2551 = vadd.f32 %v2342, %v2519
    %v2552 = vadd.f32 %v2343, %v2520
    %s2553 = scalar_lea.vmem %s1, 1536
    %v2554 = vld [vmem:[%s2553] sm:$0xff]
    %v2555 = vld [vmem:[%s2553 + $0x8] sm:$0xff]
    %v2556 = vld [vmem:[%s2553 + $0x10] sm:$0xff]
    %v2557 = vld [vmem:[%s2553 + $0x18] sm:$0xff]
    %v2558 = vld [vmem:[%s2553 + $0x20] sm:$0xff]
    %v2559 = vld [vmem:[%s2553 + $0x28] sm:$0xff]
    %v2560 = vld [vmem:[%s2553 + $0x30] sm:$0xff]
    %v2561 = vld [vmem:[%s2553 + $0x38] sm:$0xff]
    %v2562 = vld [vmem:[%s2553 + $0x40] sm:$0xff]
    %v2563 = vld [vmem:[%s2553 + $0x48] sm:$0xff]
    %v2564 = vld [vmem:[%s2553 + $0x50] sm:$0xff]
    %v2565 = vld [vmem:[%s2553 + $0x58] sm:$0xff]
    %v2566 = vld [vmem:[%s2553 + $0x60] sm:$0xff]
    %v2567 = vld [vmem:[%s2553 + $0x68] sm:$0xff]
    %v2568 = vld [vmem:[%s2553 + $0x70] sm:$0xff]
    %v2569 = vld [vmem:[%s2553 + $0x78] sm:$0xff]
    %2570 = vset.pattern.permute.xlu0 12
    %2571 = vperm.xlu0 %2570, %v14
    %v2572 = vpop.permute.xlu0 %2571
    %2574 = vset.pattern.permute.xlu0 12
    %2575 = vperm.xlu0 %2574, %v15
    %v2576 = vpop.permute.xlu0 %2575
    %2578 = vset.pattern.permute.xlu0 12
    %2579 = vperm.xlu0 %2578, %v16
    %v2580 = vpop.permute.xlu0 %2579
    %2582 = vset.pattern.permute.xlu0 12
    %2583 = vperm.xlu0 %2582, %v17
    %v2584 = vpop.permute.xlu0 %2583
    %2586 = vset.pattern.permute.xlu0 12
    %2587 = vperm.xlu0 %2586, %v18
    %v2588 = vpop.permute.xlu0 %2587
    %2590 = vset.pattern.permute.xlu0 12
    %2591 = vperm.xlu0 %2590, %v19
    %v2592 = vpop.permute.xlu0 %2591
    %2594 = vset.pattern.permute.xlu0 12
    %2595 = vperm.xlu0 %2594, %v20
    %v2596 = vpop.permute.xlu0 %2595
    %2598 = vset.pattern.permute.xlu0 12
    %2599 = vperm.xlu0 %2598, %v21
    %v2600 = vpop.permute.xlu0 %2599
    %2602 = vset.pattern.permute.xlu0 12
    %2603 = vperm.xlu0 %2602, %v22
    %v2604 = vpop.permute.xlu0 %2603
    %2606 = vset.pattern.permute.xlu0 12
    %2607 = vperm.xlu0 %2606, %v23
    %v2608 = vpop.permute.xlu0 %2607
    %2610 = vset.pattern.permute.xlu0 12
    %2611 = vperm.xlu0 %2610, %v24
    %v2612 = vpop.permute.xlu0 %2611
    %2614 = vset.pattern.permute.xlu0 12
    %2615 = vperm.xlu0 %2614, %v25
    %v2616 = vpop.permute.xlu0 %2615
    %2618 = vset.pattern.permute.xlu0 12
    %2619 = vperm.xlu0 %2618, %v26
    %v2620 = vpop.permute.xlu0 %2619
    %2622 = vset.pattern.permute.xlu0 12
    %2623 = vperm.xlu0 %2622, %v27
    %v2624 = vpop.permute.xlu0 %2623
    %2626 = vset.pattern.permute.xlu0 12
    %2627 = vperm.xlu0 %2626, %v28
    %v2628 = vpop.permute.xlu0 %2627
    %2630 = vset.pattern.permute.xlu0 12
    %2631 = vperm.xlu0 %2630, %v29
    %v2632 = vpop.permute.xlu0 %2631
    %2634 = vset.pattern.permute.xlu0 12
    %2635 = vperm.xlu0 %2634, %v30
    %v2636 = vpop.permute.xlu0 %2635
    %2638 = vset.pattern.permute.xlu0 12
    %2639 = vperm.xlu0 %2638, %v31
    %v2640 = vpop.permute.xlu0 %2639
    %2642 = vset.pattern.permute.xlu0 12
    %2643 = vperm.xlu0 %2642, %v32
    %v2644 = vpop.permute.xlu0 %2643
    %2646 = vset.pattern.permute.xlu0 12
    %2647 = vperm.xlu0 %2646, %v33
    %v2648 = vpop.permute.xlu0 %2647
    %2650 = vset.pattern.permute.xlu0 12
    %2651 = vperm.xlu0 %2650, %v34
    %v2652 = vpop.permute.xlu0 %2651
    %2654 = vset.pattern.permute.xlu0 12
    %2655 = vperm.xlu0 %2654, %v35
    %v2656 = vpop.permute.xlu0 %2655
    %2658 = vset.pattern.permute.xlu0 12
    %2659 = vperm.xlu0 %2658, %v36
    %v2660 = vpop.permute.xlu0 %2659
    %2662 = vset.pattern.permute.xlu0 12
    %2663 = vperm.xlu0 %2662, %v37
    %v2664 = vpop.permute.xlu0 %2663
    %2666 = vset.pattern.permute.xlu0 12
    %2667 = vperm.xlu0 %2666, %v38
    %v2668 = vpop.permute.xlu0 %2667
    %2670 = vset.pattern.permute.xlu0 12
    %2671 = vperm.xlu0 %2670, %v39
    %v2672 = vpop.permute.xlu0 %2671
    %2674 = vset.pattern.permute.xlu0 12
    %2675 = vperm.xlu0 %2674, %v40
    %v2676 = vpop.permute.xlu0 %2675
    %2678 = vset.pattern.permute.xlu0 12
    %2679 = vperm.xlu0 %2678, %v41
    %v2680 = vpop.permute.xlu0 %2679
    %2682 = vset.pattern.permute.xlu0 12
    %2683 = vperm.xlu0 %2682, %v42
    %v2684 = vpop.permute.xlu0 %2683
    %2686 = vset.pattern.permute.xlu0 12
    %2687 = vperm.xlu0 %2686, %v43
    %v2688 = vpop.permute.xlu0 %2687
    %2690 = vset.pattern.permute.xlu0 12
    %2691 = vperm.xlu0 %2690, %v44
    %v2692 = vpop.permute.xlu0 %2691
    %2694 = vset.pattern.permute.xlu0 12
    %2695 = vperm.xlu0 %2694, %v45
    %v2696 = vpop.permute.xlu0 %2695
    %v2698 = vmul.f32 %v2572, %v2554
    %v2699 = vmul.f32 %v2576, %v2555
    %v2700 = vmul.f32 %v2580, %v2556
    %v2701 = vmul.f32 %v2584, %v2557
    %v2702 = vmul.f32 %v2588, %v2558
    %v2703 = vmul.f32 %v2592, %v2559
    %v2704 = vmul.f32 %v2596, %v2560
    %v2705 = vmul.f32 %v2600, %v2561
    %v2706 = vmul.f32 %v2604, %v2562
    %v2707 = vmul.f32 %v2608, %v2563
    %v2708 = vmul.f32 %v2612, %v2564
    %v2709 = vmul.f32 %v2616, %v2565
    %v2710 = vmul.f32 %v2620, %v2566
    %v2711 = vmul.f32 %v2624, %v2567
    %v2712 = vmul.f32 %v2628, %v2568
    %v2713 = vmul.f32 %v2632, %v2569
    %v2714 = vmul.f32 %v2636, %v2554
    %v2715 = vmul.f32 %v2640, %v2555
    %v2716 = vmul.f32 %v2644, %v2556
    %v2717 = vmul.f32 %v2648, %v2557
    %v2718 = vmul.f32 %v2652, %v2558
    %v2719 = vmul.f32 %v2656, %v2559
    %v2720 = vmul.f32 %v2660, %v2560
    %v2721 = vmul.f32 %v2664, %v2561
    %v2722 = vmul.f32 %v2668, %v2562
    %v2723 = vmul.f32 %v2672, %v2563
    %v2724 = vmul.f32 %v2676, %v2564
    %v2725 = vmul.f32 %v2680, %v2565
    %v2726 = vmul.f32 %v2684, %v2566
    %v2727 = vmul.f32 %v2688, %v2567
    %v2728 = vmul.f32 %v2692, %v2568
    %v2729 = vmul.f32 %v2696, %v2569
    %v2730 = vadd.f32 %v2521, %v2698
    %v2731 = vadd.f32 %v2522, %v2699
    %v2732 = vadd.f32 %v2523, %v2700
    %v2733 = vadd.f32 %v2524, %v2701
    %v2734 = vadd.f32 %v2525, %v2702
    %v2735 = vadd.f32 %v2526, %v2703
    %v2736 = vadd.f32 %v2527, %v2704
    %v2737 = vadd.f32 %v2528, %v2705
    %v2738 = vadd.f32 %v2529, %v2706
    %v2739 = vadd.f32 %v2530, %v2707
    %v2740 = vadd.f32 %v2531, %v2708
    %v2741 = vadd.f32 %v2532, %v2709
    %v2742 = vadd.f32 %v2533, %v2710
    %v2743 = vadd.f32 %v2534, %v2711
    %v2744 = vadd.f32 %v2535, %v2712
    %v2745 = vadd.f32 %v2536, %v2713
    %v2746 = vadd.f32 %v2537, %v2714
    %v2747 = vadd.f32 %v2538, %v2715
    %v2748 = vadd.f32 %v2539, %v2716
    %v2749 = vadd.f32 %v2540, %v2717
    %v2750 = vadd.f32 %v2541, %v2718
    %v2751 = vadd.f32 %v2542, %v2719
    %v2752 = vadd.f32 %v2543, %v2720
    %v2753 = vadd.f32 %v2544, %v2721
    %v2754 = vadd.f32 %v2545, %v2722
    %v2755 = vadd.f32 %v2546, %v2723
    %v2756 = vadd.f32 %v2547, %v2724
    %v2757 = vadd.f32 %v2548, %v2725
    %v2758 = vadd.f32 %v2549, %v2726
    %v2759 = vadd.f32 %v2550, %v2727
    %v2760 = vadd.f32 %v2551, %v2728
    %v2761 = vadd.f32 %v2552, %v2729
    %s2762 = scalar_lea.vmem %s1, 1664
    %v2763 = vld [vmem:[%s2762] sm:$0xff]
    %v2764 = vld [vmem:[%s2762 + $0x8] sm:$0xff]
    %v2765 = vld [vmem:[%s2762 + $0x10] sm:$0xff]
    %v2766 = vld [vmem:[%s2762 + $0x18] sm:$0xff]
    %v2767 = vld [vmem:[%s2762 + $0x20] sm:$0xff]
    %v2768 = vld [vmem:[%s2762 + $0x28] sm:$0xff]
    %v2769 = vld [vmem:[%s2762 + $0x30] sm:$0xff]
    %v2770 = vld [vmem:[%s2762 + $0x38] sm:$0xff]
    %v2771 = vld [vmem:[%s2762 + $0x40] sm:$0xff]
    %v2772 = vld [vmem:[%s2762 + $0x48] sm:$0xff]
    %v2773 = vld [vmem:[%s2762 + $0x50] sm:$0xff]
    %v2774 = vld [vmem:[%s2762 + $0x58] sm:$0xff]
    %v2775 = vld [vmem:[%s2762 + $0x60] sm:$0xff]
    %v2776 = vld [vmem:[%s2762 + $0x68] sm:$0xff]
    %v2777 = vld [vmem:[%s2762 + $0x70] sm:$0xff]
    %v2778 = vld [vmem:[%s2762 + $0x78] sm:$0xff]
    %2779 = vset.pattern.permute.xlu0 13
    %2780 = vperm.xlu0 %2779, %v14
    %v2781 = vpop.permute.xlu0 %2780
    %2783 = vset.pattern.permute.xlu0 13
    %2784 = vperm.xlu0 %2783, %v15
    %v2785 = vpop.permute.xlu0 %2784
    %2787 = vset.pattern.permute.xlu0 13
    %2788 = vperm.xlu0 %2787, %v16
    %v2789 = vpop.permute.xlu0 %2788
    %2791 = vset.pattern.permute.xlu0 13
    %2792 = vperm.xlu0 %2791, %v17
    %v2793 = vpop.permute.xlu0 %2792
    %2795 = vset.pattern.permute.xlu0 13
    %2796 = vperm.xlu0 %2795, %v18
    %v2797 = vpop.permute.xlu0 %2796
    %2799 = vset.pattern.permute.xlu0 13
    %2800 = vperm.xlu0 %2799, %v19
    %v2801 = vpop.permute.xlu0 %2800
    %2803 = vset.pattern.permute.xlu0 13
    %2804 = vperm.xlu0 %2803, %v20
    %v2805 = vpop.permute.xlu0 %2804
    %2807 = vset.pattern.permute.xlu0 13
    %2808 = vperm.xlu0 %2807, %v21
    %v2809 = vpop.permute.xlu0 %2808
    %2811 = vset.pattern.permute.xlu0 13
    %2812 = vperm.xlu0 %2811, %v22
    %v2813 = vpop.permute.xlu0 %2812
    %2815 = vset.pattern.permute.xlu0 13
    %2816 = vperm.xlu0 %2815, %v23
    %v2817 = vpop.permute.xlu0 %2816
    %2819 = vset.pattern.permute.xlu0 13
    %2820 = vperm.xlu0 %2819, %v24
    %v2821 = vpop.permute.xlu0 %2820
    %2823 = vset.pattern.permute.xlu0 13
    %2824 = vperm.xlu0 %2823, %v25
    %v2825 = vpop.permute.xlu0 %2824
    %2827 = vset.pattern.permute.xlu0 13
    %2828 = vperm.xlu0 %2827, %v26
    %v2829 = vpop.permute.xlu0 %2828
    %2831 = vset.pattern.permute.xlu0 13
    %2832 = vperm.xlu0 %2831, %v27
    %v2833 = vpop.permute.xlu0 %2832
    %2835 = vset.pattern.permute.xlu0 13
    %2836 = vperm.xlu0 %2835, %v28
    %v2837 = vpop.permute.xlu0 %2836
    %2839 = vset.pattern.permute.xlu0 13
    %2840 = vperm.xlu0 %2839, %v29
    %v2841 = vpop.permute.xlu0 %2840
    %2843 = vset.pattern.permute.xlu0 13
    %2844 = vperm.xlu0 %2843, %v30
    %v2845 = vpop.permute.xlu0 %2844
    %2847 = vset.pattern.permute.xlu0 13
    %2848 = vperm.xlu0 %2847, %v31
    %v2849 = vpop.permute.xlu0 %2848
    %2851 = vset.pattern.permute.xlu0 13
    %2852 = vperm.xlu0 %2851, %v32
    %v2853 = vpop.permute.xlu0 %2852
    %2855 = vset.pattern.permute.xlu0 13
    %2856 = vperm.xlu0 %2855, %v33
    %v2857 = vpop.permute.xlu0 %2856
    %2859 = vset.pattern.permute.xlu0 13
    %2860 = vperm.xlu0 %2859, %v34
    %v2861 = vpop.permute.xlu0 %2860
    %2863 = vset.pattern.permute.xlu0 13
    %2864 = vperm.xlu0 %2863, %v35
    %v2865 = vpop.permute.xlu0 %2864
    %2867 = vset.pattern.permute.xlu0 13
    %2868 = vperm.xlu0 %2867, %v36
    %v2869 = vpop.permute.xlu0 %2868
    %2871 = vset.pattern.permute.xlu0 13
    %2872 = vperm.xlu0 %2871, %v37
    %v2873 = vpop.permute.xlu0 %2872
    %2875 = vset.pattern.permute.xlu0 13
    %2876 = vperm.xlu0 %2875, %v38
    %v2877 = vpop.permute.xlu0 %2876
    %2879 = vset.pattern.permute.xlu0 13
    %2880 = vperm.xlu0 %2879, %v39
    %v2881 = vpop.permute.xlu0 %2880
    %2883 = vset.pattern.permute.xlu0 13
    %2884 = vperm.xlu0 %2883, %v40
    %v2885 = vpop.permute.xlu0 %2884
    %2887 = vset.pattern.permute.xlu0 13
    %2888 = vperm.xlu0 %2887, %v41
    %v2889 = vpop.permute.xlu0 %2888
    %2891 = vset.pattern.permute.xlu0 13
    %2892 = vperm.xlu0 %2891, %v42
    %v2893 = vpop.permute.xlu0 %2892
    %2895 = vset.pattern.permute.xlu0 13
    %2896 = vperm.xlu0 %2895, %v43
    %v2897 = vpop.permute.xlu0 %2896
    %2899 = vset.pattern.permute.xlu0 13
    %2900 = vperm.xlu0 %2899, %v44
    %v2901 = vpop.permute.xlu0 %2900
    %2903 = vset.pattern.permute.xlu0 13
    %2904 = vperm.xlu0 %2903, %v45
    %v2905 = vpop.permute.xlu0 %2904
    %v2907 = vmul.f32 %v2781, %v2763
    %v2908 = vmul.f32 %v2785, %v2764
    %v2909 = vmul.f32 %v2789, %v2765
    %v2910 = vmul.f32 %v2793, %v2766
    %v2911 = vmul.f32 %v2797, %v2767
    %v2912 = vmul.f32 %v2801, %v2768
    %v2913 = vmul.f32 %v2805, %v2769
    %v2914 = vmul.f32 %v2809, %v2770
    %v2915 = vmul.f32 %v2813, %v2771
    %v2916 = vmul.f32 %v2817, %v2772
    %v2917 = vmul.f32 %v2821, %v2773
    %v2918 = vmul.f32 %v2825, %v2774
    %v2919 = vmul.f32 %v2829, %v2775
    %v2920 = vmul.f32 %v2833, %v2776
    %v2921 = vmul.f32 %v2837, %v2777
    %v2922 = vmul.f32 %v2841, %v2778
    %v2923 = vmul.f32 %v2845, %v2763
    %v2924 = vmul.f32 %v2849, %v2764
    %v2925 = vmul.f32 %v2853, %v2765
    %v2926 = vmul.f32 %v2857, %v2766
    %v2927 = vmul.f32 %v2861, %v2767
    %v2928 = vmul.f32 %v2865, %v2768
    %v2929 = vmul.f32 %v2869, %v2769
    %v2930 = vmul.f32 %v2873, %v2770
    %v2931 = vmul.f32 %v2877, %v2771
    %v2932 = vmul.f32 %v2881, %v2772
    %v2933 = vmul.f32 %v2885, %v2773
    %v2934 = vmul.f32 %v2889, %v2774
    %v2935 = vmul.f32 %v2893, %v2775
    %v2936 = vmul.f32 %v2897, %v2776
    %v2937 = vmul.f32 %v2901, %v2777
    %v2938 = vmul.f32 %v2905, %v2778
    %v2939 = vadd.f32 %v2730, %v2907
    %v2940 = vadd.f32 %v2731, %v2908
    %v2941 = vadd.f32 %v2732, %v2909
    %v2942 = vadd.f32 %v2733, %v2910
    %v2943 = vadd.f32 %v2734, %v2911
    %v2944 = vadd.f32 %v2735, %v2912
    %v2945 = vadd.f32 %v2736, %v2913
    %v2946 = vadd.f32 %v2737, %v2914
    %v2947 = vadd.f32 %v2738, %v2915
    %v2948 = vadd.f32 %v2739, %v2916
    %v2949 = vadd.f32 %v2740, %v2917
    %v2950 = vadd.f32 %v2741, %v2918
    %v2951 = vadd.f32 %v2742, %v2919
    %v2952 = vadd.f32 %v2743, %v2920
    %v2953 = vadd.f32 %v2744, %v2921
    %v2954 = vadd.f32 %v2745, %v2922
    %v2955 = vadd.f32 %v2746, %v2923
    %v2956 = vadd.f32 %v2747, %v2924
    %v2957 = vadd.f32 %v2748, %v2925
    %v2958 = vadd.f32 %v2749, %v2926
    %v2959 = vadd.f32 %v2750, %v2927
    %v2960 = vadd.f32 %v2751, %v2928
    %v2961 = vadd.f32 %v2752, %v2929
    %v2962 = vadd.f32 %v2753, %v2930
    %v2963 = vadd.f32 %v2754, %v2931
    %v2964 = vadd.f32 %v2755, %v2932
    %v2965 = vadd.f32 %v2756, %v2933
    %v2966 = vadd.f32 %v2757, %v2934
    %v2967 = vadd.f32 %v2758, %v2935
    %v2968 = vadd.f32 %v2759, %v2936
    %v2969 = vadd.f32 %v2760, %v2937
    %v2970 = vadd.f32 %v2761, %v2938
    %s2971 = scalar_lea.vmem %s1, 1792
    %v2972 = vld [vmem:[%s2971] sm:$0xff]
    %v2973 = vld [vmem:[%s2971 + $0x8] sm:$0xff]
    %v2974 = vld [vmem:[%s2971 + $0x10] sm:$0xff]
    %v2975 = vld [vmem:[%s2971 + $0x18] sm:$0xff]
    %v2976 = vld [vmem:[%s2971 + $0x20] sm:$0xff]
    %v2977 = vld [vmem:[%s2971 + $0x28] sm:$0xff]
    %v2978 = vld [vmem:[%s2971 + $0x30] sm:$0xff]
    %v2979 = vld [vmem:[%s2971 + $0x38] sm:$0xff]
    %v2980 = vld [vmem:[%s2971 + $0x40] sm:$0xff]
    %v2981 = vld [vmem:[%s2971 + $0x48] sm:$0xff]
    %v2982 = vld [vmem:[%s2971 + $0x50] sm:$0xff]
    %v2983 = vld [vmem:[%s2971 + $0x58] sm:$0xff]
    %v2984 = vld [vmem:[%s2971 + $0x60] sm:$0xff]
    %v2985 = vld [vmem:[%s2971 + $0x68] sm:$0xff]
    %v2986 = vld [vmem:[%s2971 + $0x70] sm:$0xff]
    %v2987 = vld [vmem:[%s2971 + $0x78] sm:$0xff]
    %2988 = vset.pattern.permute.xlu0 14
    %2989 = vperm.xlu0 %2988, %v14
    %v2990 = vpop.permute.xlu0 %2989
    %2992 = vset.pattern.permute.xlu0 14
    %2993 = vperm.xlu0 %2992, %v15
    %v2994 = vpop.permute.xlu0 %2993
    %2996 = vset.pattern.permute.xlu0 14
    %2997 = vperm.xlu0 %2996, %v16
    %v2998 = vpop.permute.xlu0 %2997
    %3000 = vset.pattern.permute.xlu0 14
    %3001 = vperm.xlu0 %3000, %v17
    %v3002 = vpop.permute.xlu0 %3001
    %3004 = vset.pattern.permute.xlu0 14
    %3005 = vperm.xlu0 %3004, %v18
    %v3006 = vpop.permute.xlu0 %3005
    %3008 = vset.pattern.permute.xlu0 14
    %3009 = vperm.xlu0 %3008, %v19
    %v3010 = vpop.permute.xlu0 %3009
    %3012 = vset.pattern.permute.xlu0 14
    %3013 = vperm.xlu0 %3012, %v20
    %v3014 = vpop.permute.xlu0 %3013
    %3016 = vset.pattern.permute.xlu0 14
    %3017 = vperm.xlu0 %3016, %v21
    %v3018 = vpop.permute.xlu0 %3017
    %3020 = vset.pattern.permute.xlu0 14
    %3021 = vperm.xlu0 %3020, %v22
    %v3022 = vpop.permute.xlu0 %3021
    %3024 = vset.pattern.permute.xlu0 14
    %3025 = vperm.xlu0 %3024, %v23
    %v3026 = vpop.permute.xlu0 %3025
    %3028 = vset.pattern.permute.xlu0 14
    %3029 = vperm.xlu0 %3028, %v24
    %v3030 = vpop.permute.xlu0 %3029
    %3032 = vset.pattern.permute.xlu0 14
    %3033 = vperm.xlu0 %3032, %v25
    %v3034 = vpop.permute.xlu0 %3033
    %3036 = vset.pattern.permute.xlu0 14
    %3037 = vperm.xlu0 %3036, %v26
    %v3038 = vpop.permute.xlu0 %3037
    %3040 = vset.pattern.permute.xlu0 14
    %3041 = vperm.xlu0 %3040, %v27
    %v3042 = vpop.permute.xlu0 %3041
    %3044 = vset.pattern.permute.xlu0 14
    %3045 = vperm.xlu0 %3044, %v28
    %v3046 = vpop.permute.xlu0 %3045
    %3048 = vset.pattern.permute.xlu0 14
    %3049 = vperm.xlu0 %3048, %v29
    %v3050 = vpop.permute.xlu0 %3049
    %3052 = vset.pattern.permute.xlu0 14
    %3053 = vperm.xlu0 %3052, %v30
    %v3054 = vpop.permute.xlu0 %3053
    %3056 = vset.pattern.permute.xlu0 14
    %3057 = vperm.xlu0 %3056, %v31
    %v3058 = vpop.permute.xlu0 %3057
    %3060 = vset.pattern.permute.xlu0 14
    %3061 = vperm.xlu0 %3060, %v32
    %v3062 = vpop.permute.xlu0 %3061
    %3064 = vset.pattern.permute.xlu0 14
    %3065 = vperm.xlu0 %3064, %v33
    %v3066 = vpop.permute.xlu0 %3065
    %3068 = vset.pattern.permute.xlu0 14
    %3069 = vperm.xlu0 %3068, %v34
    %v3070 = vpop.permute.xlu0 %3069
    %3072 = vset.pattern.permute.xlu0 14
    %3073 = vperm.xlu0 %3072, %v35
    %v3074 = vpop.permute.xlu0 %3073
    %3076 = vset.pattern.permute.xlu0 14
    %3077 = vperm.xlu0 %3076, %v36
    %v3078 = vpop.permute.xlu0 %3077
    %3080 = vset.pattern.permute.xlu0 14
    %3081 = vperm.xlu0 %3080, %v37
    %v3082 = vpop.permute.xlu0 %3081
    %3084 = vset.pattern.permute.xlu0 14
    %3085 = vperm.xlu0 %3084, %v38
    %v3086 = vpop.permute.xlu0 %3085
    %3088 = vset.pattern.permute.xlu0 14
    %3089 = vperm.xlu0 %3088, %v39
    %v3090 = vpop.permute.xlu0 %3089
    %3092 = vset.pattern.permute.xlu0 14
    %3093 = vperm.xlu0 %3092, %v40
    %v3094 = vpop.permute.xlu0 %3093
    %3096 = vset.pattern.permute.xlu0 14
    %3097 = vperm.xlu0 %3096, %v41
    %v3098 = vpop.permute.xlu0 %3097
    %3100 = vset.pattern.permute.xlu0 14
    %3101 = vperm.xlu0 %3100, %v42
    %v3102 = vpop.permute.xlu0 %3101
    %3104 = vset.pattern.permute.xlu0 14
    %3105 = vperm.xlu0 %3104, %v43
    %v3106 = vpop.permute.xlu0 %3105
    %3108 = vset.pattern.permute.xlu0 14
    %3109 = vperm.xlu0 %3108, %v44
    %v3110 = vpop.permute.xlu0 %3109
    %3112 = vset.pattern.permute.xlu0 14
    %3113 = vperm.xlu0 %3112, %v45
    %v3114 = vpop.permute.xlu0 %3113
    %v3116 = vmul.f32 %v2990, %v2972
    %v3117 = vmul.f32 %v2994, %v2973
    %v3118 = vmul.f32 %v2998, %v2974
    %v3119 = vmul.f32 %v3002, %v2975
    %v3120 = vmul.f32 %v3006, %v2976
    %v3121 = vmul.f32 %v3010, %v2977
    %v3122 = vmul.f32 %v3014, %v2978
    %v3123 = vmul.f32 %v3018, %v2979
    %v3124 = vmul.f32 %v3022, %v2980
    %v3125 = vmul.f32 %v3026, %v2981
    %v3126 = vmul.f32 %v3030, %v2982
    %v3127 = vmul.f32 %v3034, %v2983
    %v3128 = vmul.f32 %v3038, %v2984
    %v3129 = vmul.f32 %v3042, %v2985
    %v3130 = vmul.f32 %v3046, %v2986
    %v3131 = vmul.f32 %v3050, %v2987
    %v3132 = vmul.f32 %v3054, %v2972
    %v3133 = vmul.f32 %v3058, %v2973
    %v3134 = vmul.f32 %v3062, %v2974
    %v3135 = vmul.f32 %v3066, %v2975
    %v3136 = vmul.f32 %v3070, %v2976
    %v3137 = vmul.f32 %v3074, %v2977
    %v3138 = vmul.f32 %v3078, %v2978
    %v3139 = vmul.f32 %v3082, %v2979
    %v3140 = vmul.f32 %v3086, %v2980
    %v3141 = vmul.f32 %v3090, %v2981
    %v3142 = vmul.f32 %v3094, %v2982
    %v3143 = vmul.f32 %v3098, %v2983
    %v3144 = vmul.f32 %v3102, %v2984
    %v3145 = vmul.f32 %v3106, %v2985
    %v3146 = vmul.f32 %v3110, %v2986
    %v3147 = vmul.f32 %v3114, %v2987
    %v3148 = vadd.f32 %v2939, %v3116
    %v3149 = vadd.f32 %v2940, %v3117
    %v3150 = vadd.f32 %v2941, %v3118
    %v3151 = vadd.f32 %v2942, %v3119
    %v3152 = vadd.f32 %v2943, %v3120
    %v3153 = vadd.f32 %v2944, %v3121
    %v3154 = vadd.f32 %v2945, %v3122
    %v3155 = vadd.f32 %v2946, %v3123
    %v3156 = vadd.f32 %v2947, %v3124
    %v3157 = vadd.f32 %v2948, %v3125
    %v3158 = vadd.f32 %v2949, %v3126
    %v3159 = vadd.f32 %v2950, %v3127
    %v3160 = vadd.f32 %v2951, %v3128
    %v3161 = vadd.f32 %v2952, %v3129
    %v3162 = vadd.f32 %v2953, %v3130
    %v3163 = vadd.f32 %v2954, %v3131
    %v3164 = vadd.f32 %v2955, %v3132
    %v3165 = vadd.f32 %v2956, %v3133
    %v3166 = vadd.f32 %v2957, %v3134
    %v3167 = vadd.f32 %v2958, %v3135
    %v3168 = vadd.f32 %v2959, %v3136
    %v3169 = vadd.f32 %v2960, %v3137
    %v3170 = vadd.f32 %v2961, %v3138
    %v3171 = vadd.f32 %v2962, %v3139
    %v3172 = vadd.f32 %v2963, %v3140
    %v3173 = vadd.f32 %v2964, %v3141
    %v3174 = vadd.f32 %v2965, %v3142
    %v3175 = vadd.f32 %v2966, %v3143
    %v3176 = vadd.f32 %v2967, %v3144
    %v3177 = vadd.f32 %v2968, %v3145
    %v3178 = vadd.f32 %v2969, %v3146
    %v3179 = vadd.f32 %v2970, %v3147
    %s3180 = scalar_lea.vmem %s1, 1920
    %v3181 = vld [vmem:[%s3180] sm:$0xff]
    %v3182 = vld [vmem:[%s3180 + $0x8] sm:$0xff]
    %v3183 = vld [vmem:[%s3180 + $0x10] sm:$0xff]
    %v3184 = vld [vmem:[%s3180 + $0x18] sm:$0xff]
    %v3185 = vld [vmem:[%s3180 + $0x20] sm:$0xff]
    %v3186 = vld [vmem:[%s3180 + $0x28] sm:$0xff]
    %v3187 = vld [vmem:[%s3180 + $0x30] sm:$0xff]
    %v3188 = vld [vmem:[%s3180 + $0x38] sm:$0xff]
    %v3189 = vld [vmem:[%s3180 + $0x40] sm:$0xff]
    %v3190 = vld [vmem:[%s3180 + $0x48] sm:$0xff]
    %v3191 = vld [vmem:[%s3180 + $0x50] sm:$0xff]
    %v3192 = vld [vmem:[%s3180 + $0x58] sm:$0xff]
    %v3193 = vld [vmem:[%s3180 + $0x60] sm:$0xff]
    %v3194 = vld [vmem:[%s3180 + $0x68] sm:$0xff]
    %v3195 = vld [vmem:[%s3180 + $0x70] sm:$0xff]
    %v3196 = vld [vmem:[%s3180 + $0x78] sm:$0xff]
    %3197 = vset.pattern.permute.xlu0 15
    %3198 = vperm.xlu0 %3197, %v14
    %v3199 = vpop.permute.xlu0 %3198
    %3201 = vset.pattern.permute.xlu0 15
    %3202 = vperm.xlu0 %3201, %v15
    %v3203 = vpop.permute.xlu0 %3202
    %3205 = vset.pattern.permute.xlu0 15
    %3206 = vperm.xlu0 %3205, %v16
    %v3207 = vpop.permute.xlu0 %3206
    %3209 = vset.pattern.permute.xlu0 15
    %3210 = vperm.xlu0 %3209, %v17
    %v3211 = vpop.permute.xlu0 %3210
    %3213 = vset.pattern.permute.xlu0 15
    %3214 = vperm.xlu0 %3213, %v18
    %v3215 = vpop.permute.xlu0 %3214
    %3217 = vset.pattern.permute.xlu0 15
    %3218 = vperm.xlu0 %3217, %v19
    %v3219 = vpop.permute.xlu0 %3218
    %3221 = vset.pattern.permute.xlu0 15
    %3222 = vperm.xlu0 %3221, %v20
    %v3223 = vpop.permute.xlu0 %3222
    %3225 = vset.pattern.permute.xlu0 15
    %3226 = vperm.xlu0 %3225, %v21
    %v3227 = vpop.permute.xlu0 %3226
    %3229 = vset.pattern.permute.xlu0 15
    %3230 = vperm.xlu0 %3229, %v22
    %v3231 = vpop.permute.xlu0 %3230
    %3233 = vset.pattern.permute.xlu0 15
    %3234 = vperm.xlu0 %3233, %v23
    %v3235 = vpop.permute.xlu0 %3234
    %3237 = vset.pattern.permute.xlu0 15
    %3238 = vperm.xlu0 %3237, %v24
    %v3239 = vpop.permute.xlu0 %3238
    %3241 = vset.pattern.permute.xlu0 15
    %3242 = vperm.xlu0 %3241, %v25
    %v3243 = vpop.permute.xlu0 %3242
    %3245 = vset.pattern.permute.xlu0 15
    %3246 = vperm.xlu0 %3245, %v26
    %v3247 = vpop.permute.xlu0 %3246
    %3249 = vset.pattern.permute.xlu0 15
    %3250 = vperm.xlu0 %3249, %v27
    %v3251 = vpop.permute.xlu0 %3250
    %3253 = vset.pattern.permute.xlu0 15
    %3254 = vperm.xlu0 %3253, %v28
    %v3255 = vpop.permute.xlu0 %3254
    %3257 = vset.pattern.permute.xlu0 15
    %3258 = vperm.xlu0 %3257, %v29
    %v3259 = vpop.permute.xlu0 %3258
    %3261 = vset.pattern.permute.xlu0 15
    %3262 = vperm.xlu0 %3261, %v30
    %v3263 = vpop.permute.xlu0 %3262
    %3265 = vset.pattern.permute.xlu0 15
    %3266 = vperm.xlu0 %3265, %v31
    %v3267 = vpop.permute.xlu0 %3266
    %3269 = vset.pattern.permute.xlu0 15
    %3270 = vperm.xlu0 %3269, %v32
    %v3271 = vpop.permute.xlu0 %3270
    %3273 = vset.pattern.permute.xlu0 15
    %3274 = vperm.xlu0 %3273, %v33
    %v3275 = vpop.permute.xlu0 %3274
    %3277 = vset.pattern.permute.xlu0 15
    %3278 = vperm.xlu0 %3277, %v34
    %v3279 = vpop.permute.xlu0 %3278
    %3281 = vset.pattern.permute.xlu0 15
    %3282 = vperm.xlu0 %3281, %v35
    %v3283 = vpop.permute.xlu0 %3282
    %3285 = vset.pattern.permute.xlu0 15
    %3286 = vperm.xlu0 %3285, %v36
    %v3287 = vpop.permute.xlu0 %3286
    %3289 = vset.pattern.permute.xlu0 15
    %3290 = vperm.xlu0 %3289, %v37
    %v3291 = vpop.permute.xlu0 %3290
    %3293 = vset.pattern.permute.xlu0 15
    %3294 = vperm.xlu0 %3293, %v38
    %v3295 = vpop.permute.xlu0 %3294
    %3297 = vset.pattern.permute.xlu0 15
    %3298 = vperm.xlu0 %3297, %v39
    %v3299 = vpop.permute.xlu0 %3298
    %3301 = vset.pattern.permute.xlu0 15
    %3302 = vperm.xlu0 %3301, %v40
    %v3303 = vpop.permute.xlu0 %3302
    %3305 = vset.pattern.permute.xlu0 15
    %3306 = vperm.xlu0 %3305, %v41
    %v3307 = vpop.permute.xlu0 %3306
    %3309 = vset.pattern.permute.xlu0 15
    %3310 = vperm.xlu0 %3309, %v42
    %v3311 = vpop.permute.xlu0 %3310
    %3313 = vset.pattern.permute.xlu0 15
    %3314 = vperm.xlu0 %3313, %v43
    %v3315 = vpop.permute.xlu0 %3314
    %3317 = vset.pattern.permute.xlu0 15
    %3318 = vperm.xlu0 %3317, %v44
    %v3319 = vpop.permute.xlu0 %3318
    %3321 = vset.pattern.permute.xlu0 15
    %3322 = vperm.xlu0 %3321, %v45
    %v3323 = vpop.permute.xlu0 %3322
    %v3325 = vmul.f32 %v3199, %v3181
    %v3326 = vmul.f32 %v3203, %v3182
    %v3327 = vmul.f32 %v3207, %v3183
    %v3328 = vmul.f32 %v3211, %v3184
    %v3329 = vmul.f32 %v3215, %v3185
    %v3330 = vmul.f32 %v3219, %v3186
    %v3331 = vmul.f32 %v3223, %v3187
    %v3332 = vmul.f32 %v3227, %v3188
    %v3333 = vmul.f32 %v3231, %v3189
    %v3334 = vmul.f32 %v3235, %v3190
    %v3335 = vmul.f32 %v3239, %v3191
    %v3336 = vmul.f32 %v3243, %v3192
    %v3337 = vmul.f32 %v3247, %v3193
    %v3338 = vmul.f32 %v3251, %v3194
    %v3339 = vmul.f32 %v3255, %v3195
    %v3340 = vmul.f32 %v3259, %v3196
    %v3341 = vmul.f32 %v3263, %v3181
    %v3342 = vmul.f32 %v3267, %v3182
    %v3343 = vmul.f32 %v3271, %v3183
    %v3344 = vmul.f32 %v3275, %v3184
    %v3345 = vmul.f32 %v3279, %v3185
    %v3346 = vmul.f32 %v3283, %v3186
    %v3347 = vmul.f32 %v3287, %v3187
    %v3348 = vmul.f32 %v3291, %v3188
    %v3349 = vmul.f32 %v3295, %v3189
    %v3350 = vmul.f32 %v3299, %v3190
    %v3351 = vmul.f32 %v3303, %v3191
    %v3352 = vmul.f32 %v3307, %v3192
    %v3353 = vmul.f32 %v3311, %v3193
    %v3354 = vmul.f32 %v3315, %v3194
    %v3355 = vmul.f32 %v3319, %v3195
    %v3356 = vmul.f32 %v3323, %v3196
    %v3357 = vadd.f32 %v3148, %v3325
    %v3358 = vadd.f32 %v3149, %v3326
    %v3359 = vadd.f32 %v3150, %v3327
    %v3360 = vadd.f32 %v3151, %v3328
    %v3361 = vadd.f32 %v3152, %v3329
    %v3362 = vadd.f32 %v3153, %v3330
    %v3363 = vadd.f32 %v3154, %v3331
    %v3364 = vadd.f32 %v3155, %v3332
    %v3365 = vadd.f32 %v3156, %v3333
    %v3366 = vadd.f32 %v3157, %v3334
    %v3367 = vadd.f32 %v3158, %v3335
    %v3368 = vadd.f32 %v3159, %v3336
    %v3369 = vadd.f32 %v3160, %v3337
    %v3370 = vadd.f32 %v3161, %v3338
    %v3371 = vadd.f32 %v3162, %v3339
    %v3372 = vadd.f32 %v3163, %v3340
    %v3373 = vadd.f32 %v3164, %v3341
    %v3374 = vadd.f32 %v3165, %v3342
    %v3375 = vadd.f32 %v3166, %v3343
    %v3376 = vadd.f32 %v3167, %v3344
    %v3377 = vadd.f32 %v3168, %v3345
    %v3378 = vadd.f32 %v3169, %v3346
    %v3379 = vadd.f32 %v3170, %v3347
    %v3380 = vadd.f32 %v3171, %v3348
    %v3381 = vadd.f32 %v3172, %v3349
    %v3382 = vadd.f32 %v3173, %v3350
    %v3383 = vadd.f32 %v3174, %v3351
    %v3384 = vadd.f32 %v3175, %v3352
    %v3385 = vadd.f32 %v3176, %v3353
    %v3386 = vadd.f32 %v3177, %v3354
    %v3387 = vadd.f32 %v3178, %v3355
    %v3388 = vadd.f32 %v3179, %v3356
    %vm3389 = vcmask 261120
    %v3390 = vsel %vm3389, %v3357, 0.0
    %v3391 = vsel %vm3389, %v3358, 0.0
    %v3392 = vadd.f32 %v3390, %v3391
    %v3393 = vsel %vm3389, %v3359, 0.0
    %v3394 = vadd.f32 %v3392, %v3393
    %v3395 = vsel %vm3389, %v3360, 0.0
    %v3396 = vadd.f32 %v3394, %v3395
    %v3397 = vsel %vm3389, %v3361, 0.0
    %v3398 = vadd.f32 %v3396, %v3397
    %v3399 = vsel %vm3389, %v3362, 0.0
    %v3400 = vadd.f32 %v3398, %v3399
    %v3401 = vsel %vm3389, %v3363, 0.0
    %v3402 = vadd.f32 %v3400, %v3401
    %v3403 = vsel %vm3389, %v3364, 0.0
    %v3404 = vadd.f32 %v3402, %v3403
    %v3405 = vsel %vm3389, %v3365, 0.0
    %v3406 = vadd.f32 %v3404, %v3405
    %v3407 = vsel %vm3389, %v3366, 0.0
    %v3408 = vadd.f32 %v3406, %v3407
    %v3409 = vsel %vm3389, %v3367, 0.0
    %v3410 = vadd.f32 %v3408, %v3409
    %v3411 = vsel %vm3389, %v3368, 0.0
    %v3412 = vadd.f32 %v3410, %v3411
    %v3413 = vsel %vm3389, %v3369, 0.0
    %v3414 = vadd.f32 %v3412, %v3413
    %v3415 = vsel %vm3389, %v3370, 0.0
    %v3416 = vadd.f32 %v3414, %v3415
    %v3417 = vsel %vm3389, %v3371, 0.0
    %v3418 = vadd.f32 %v3416, %v3417
    %v3419 = vsel %vm3389, %v3372, 0.0
    %v3420 = vadd.f32 %v3418, %v3419
    %v3421 = vrot.slane %v3420, 4
    %v3422 = vadd.f32 %v3420, %v3421
    %v3423 = vrot.slane %v3422, 2
    %v3424 = vadd.f32 %v3422, %v3423
    %v3425 = vrot.slane %v3424, 1
    %v3426 = vadd.f32 %v3424, %v3425
    %v3427 = vsel %vm3389, %v3373, 0.0
    %v3428 = vsel %vm3389, %v3374, 0.0
    %v3429 = vadd.f32 %v3427, %v3428
    %v3430 = vsel %vm3389, %v3375, 0.0
    %v3431 = vadd.f32 %v3429, %v3430
    %v3432 = vsel %vm3389, %v3376, 0.0
    %v3433 = vadd.f32 %v3431, %v3432
    %v3434 = vsel %vm3389, %v3377, 0.0
    %v3435 = vadd.f32 %v3433, %v3434
    %v3436 = vsel %vm3389, %v3378, 0.0
    %v3437 = vadd.f32 %v3435, %v3436
    %v3438 = vsel %vm3389, %v3379, 0.0
    %v3439 = vadd.f32 %v3437, %v3438
    %v3440 = vsel %vm3389, %v3380, 0.0
    %v3441 = vadd.f32 %v3439, %v3440
    %v3442 = vsel %vm3389, %v3381, 0.0
    %v3443 = vadd.f32 %v3441, %v3442
    %v3444 = vsel %vm3389, %v3382, 0.0
    %v3445 = vadd.f32 %v3443, %v3444
    %v3446 = vsel %vm3389, %v3383, 0.0
    %v3447 = vadd.f32 %v3445, %v3446
    %v3448 = vsel %vm3389, %v3384, 0.0
    %v3449 = vadd.f32 %v3447, %v3448
    %v3450 = vsel %vm3389, %v3385, 0.0
    %v3451 = vadd.f32 %v3449, %v3450
    %v3452 = vsel %vm3389, %v3386, 0.0
    %v3453 = vadd.f32 %v3451, %v3452
    %v3454 = vsel %vm3389, %v3387, 0.0
    %v3455 = vadd.f32 %v3453, %v3454
    %v3456 = vsel %vm3389, %v3388, 0.0
    %v3457 = vadd.f32 %v3455, %v3456
    %v3458 = vrot.slane %v3457, 4
    %v3459 = vadd.f32 %v3457, %v3458
    %v3460 = vrot.slane %v3459, 2
    %v3461 = vadd.f32 %v3459, %v3460
    %v3462 = vrot.slane %v3461, 1
    %v3463 = vadd.f32 %v3461, %v3462
    %v3464 = vmul.f32 %v3426, 0.0078125
    %v3465 = vmul.f32 %v3463, 0.0078125
    %v3466 = vand.u32 2147483647, %v3464
    %v3467 = vand.u32 2147483647, %v3465
    %v3468 = vmul.f32 %v3464, %v3466
    %v3469 = vmul.f32 %v3465, %v3467
    %v3470 = vmul.f32 %v3464, %v3464
    %v3471 = vmul.f32 %v3465, %v3465
    %v3472 = vadd.f32 %v3470, 1.0
    %v3473 = vadd.f32 %v3471, 1.0
    %v3474 = vrcp.pop %v3472
    %v3475 = vmul.f32 %v3468, %v3474
    %v3476 = vrcp.pop %v3473
    %v3477 = vmul.f32 %v3469, %v3476
    %v3478 = vmul.f32 %v3357, %v3475
    %v3479 = vmul.f32 %v3358, %v3475
    %v3480 = vmul.f32 %v3359, %v3475
    %v3481 = vmul.f32 %v3360, %v3475
    %v3482 = vmul.f32 %v3361, %v3475
    %v3483 = vmul.f32 %v3362, %v3475
    %v3484 = vmul.f32 %v3363, %v3475
    %v3485 = vmul.f32 %v3364, %v3475
    %v3486 = vmul.f32 %v3365, %v3475
    %v3487 = vmul.f32 %v3366, %v3475
    %v3488 = vmul.f32 %v3367, %v3475
    %v3489 = vmul.f32 %v3368, %v3475
    %v3490 = vmul.f32 %v3369, %v3475
    %v3491 = vmul.f32 %v3370, %v3475
    %v3492 = vmul.f32 %v3371, %v3475
    %v3493 = vmul.f32 %v3372, %v3475
    %v3494 = vmul.f32 %v3373, %v3477
    %v3495 = vmul.f32 %v3374, %v3477
    %v3496 = vmul.f32 %v3375, %v3477
    %v3497 = vmul.f32 %v3376, %v3477
    %v3498 = vmul.f32 %v3377, %v3477
    %v3499 = vmul.f32 %v3378, %v3477
    %v3500 = vmul.f32 %v3379, %v3477
    %v3501 = vmul.f32 %v3380, %v3477
    %v3502 = vmul.f32 %v3381, %v3477
    %v3503 = vmul.f32 %v3382, %v3477
    %v3504 = vmul.f32 %v3383, %v3477
    %v3505 = vmul.f32 %v3384, %v3477
    %v3506 = vmul.f32 %v3385, %v3477
    %v3507 = vmul.f32 %v3386, %v3477
    %v3508 = vmul.f32 %v3387, %v3477
    %v3509 = vmul.f32 %v3388, %v3477
    %v3510 = vsel %vm3389, %v3478, 0.0
    %3511 = vadd.xlane.f32.xlu0 %v3510
    %v3512 = vpop.xlane.xlu0 %3511
    %v3513 = vsel %vm3389, %v3479, 0.0
    %3514 = vadd.xlane.f32.xlu0 %v3513
    %v3515 = vpop.xlane.xlu0 %3514
    %v3516 = vsel %vm3389, %v3480, 0.0
    %3517 = vadd.xlane.f32.xlu0 %v3516
    %v3518 = vpop.xlane.xlu0 %3517
    %v3519 = vsel %vm3389, %v3481, 0.0
    %3520 = vadd.xlane.f32.xlu0 %v3519
    %v3521 = vpop.xlane.xlu0 %3520
    %v3522 = vsel %vm3389, %v3482, 0.0
    %3523 = vadd.xlane.f32.xlu0 %v3522
    %v3524 = vpop.xlane.xlu0 %3523
    %v3525 = vsel %vm3389, %v3483, 0.0
    %3526 = vadd.xlane.f32.xlu0 %v3525
    %v3527 = vpop.xlane.xlu0 %3526
    %v3528 = vsel %vm3389, %v3484, 0.0
    %3529 = vadd.xlane.f32.xlu0 %v3528
    %v3530 = vpop.xlane.xlu0 %3529
    %v3531 = vsel %vm3389, %v3485, 0.0
    %3532 = vadd.xlane.f32.xlu0 %v3531
    %v3533 = vpop.xlane.xlu0 %3532
    %v3534 = vsel %vm3389, %v3486, 0.0
    %3535 = vadd.xlane.f32.xlu0 %v3534
    %v3536 = vpop.xlane.xlu0 %3535
    %v3537 = vsel %vm3389, %v3487, 0.0
    %3538 = vadd.xlane.f32.xlu0 %v3537
    %v3539 = vpop.xlane.xlu0 %3538
    %v3540 = vsel %vm3389, %v3488, 0.0
    %3541 = vadd.xlane.f32.xlu0 %v3540
    %v3542 = vpop.xlane.xlu0 %3541
    %v3543 = vsel %vm3389, %v3489, 0.0
    %3544 = vadd.xlane.f32.xlu0 %v3543
    %v3545 = vpop.xlane.xlu0 %3544
    %v3546 = vsel %vm3389, %v3490, 0.0
    %3547 = vadd.xlane.f32.xlu0 %v3546
    %v3548 = vpop.xlane.xlu0 %3547
    %v3549 = vsel %vm3389, %v3491, 0.0
    %3550 = vadd.xlane.f32.xlu0 %v3549
    %v3551 = vpop.xlane.xlu0 %3550
    %v3552 = vsel %vm3389, %v3492, 0.0
    %3553 = vadd.xlane.f32.xlu0 %v3552
    %v3554 = vpop.xlane.xlu0 %3553
    %v3555 = vsel %vm3389, %v3493, 0.0
    %3556 = vadd.xlane.f32.xlu0 %v3555
    %v3557 = vpop.xlane.xlu0 %3556
    %v3558 = vsel %vm3389, %v3494, 0.0
    %3559 = vadd.xlane.f32.xlu0 %v3558
    %v3560 = vpop.xlane.xlu0 %3559
    %v3561 = vsel %vm3389, %v3495, 0.0
    %3562 = vadd.xlane.f32.xlu0 %v3561
    %v3563 = vpop.xlane.xlu0 %3562
    %v3564 = vsel %vm3389, %v3496, 0.0
    %3565 = vadd.xlane.f32.xlu0 %v3564
    %v3566 = vpop.xlane.xlu0 %3565
    %v3567 = vsel %vm3389, %v3497, 0.0
    %3568 = vadd.xlane.f32.xlu0 %v3567
    %v3569 = vpop.xlane.xlu0 %3568
    %v3570 = vsel %vm3389, %v3498, 0.0
    %3571 = vadd.xlane.f32.xlu0 %v3570
    %v3572 = vpop.xlane.xlu0 %3571
    %v3573 = vsel %vm3389, %v3499, 0.0
    %3574 = vadd.xlane.f32.xlu0 %v3573
    %v3575 = vpop.xlane.xlu0 %3574
    %v3576 = vsel %vm3389, %v3500, 0.0
    %3577 = vadd.xlane.f32.xlu0 %v3576
    %v3578 = vpop.xlane.xlu0 %3577
    %v3579 = vsel %vm3389, %v3501, 0.0
    %3580 = vadd.xlane.f32.xlu0 %v3579
    %v3581 = vpop.xlane.xlu0 %3580
    %v3582 = vsel %vm3389, %v3502, 0.0
    %3583 = vadd.xlane.f32.xlu0 %v3582
    %v3584 = vpop.xlane.xlu0 %3583
    %v3585 = vsel %vm3389, %v3503, 0.0
    %3586 = vadd.xlane.f32.xlu0 %v3585
    %v3587 = vpop.xlane.xlu0 %3586
    %v3588 = vsel %vm3389, %v3504, 0.0
    %3589 = vadd.xlane.f32.xlu0 %v3588
    %v3590 = vpop.xlane.xlu0 %3589
    %v3591 = vsel %vm3389, %v3505, 0.0
    %3592 = vadd.xlane.f32.xlu0 %v3591
    %v3593 = vpop.xlane.xlu0 %3592
    %v3594 = vsel %vm3389, %v3506, 0.0
    %3595 = vadd.xlane.f32.xlu0 %v3594
    %v3596 = vpop.xlane.xlu0 %3595
    %v3597 = vsel %vm3389, %v3507, 0.0
    %3598 = vadd.xlane.f32.xlu0 %v3597
    %v3599 = vpop.xlane.xlu0 %3598
    %v3600 = vsel %vm3389, %v3508, 0.0
    %3601 = vadd.xlane.f32.xlu0 %v3600
    %v3602 = vpop.xlane.xlu0 %3601
    %v3603 = vsel %vm3389, %v3509, 0.0
    %3604 = vadd.xlane.f32.xlu0 %v3603
    %v3605 = vpop.xlane.xlu0 %3604
    %v3606 = vadd.f32 %v3512, %v3560
    %v3607 = vadd.f32 %v3515, %v3563
    %v3608 = vadd.f32 %v3518, %v3566
    %v3609 = vadd.f32 %v3521, %v3569
    %v3610 = vadd.f32 %v3524, %v3572
    %v3611 = vadd.f32 %v3527, %v3575
    %v3612 = vadd.f32 %v3530, %v3578
    %v3613 = vadd.f32 %v3533, %v3581
    %v3614 = vadd.f32 %v3536, %v3584
    %v3615 = vadd.f32 %v3539, %v3587
    %v3616 = vadd.f32 %v3542, %v3590
    %v3617 = vadd.f32 %v3545, %v3593
    %v3618 = vadd.f32 %v3548, %v3596
    %v3619 = vadd.f32 %v3551, %v3599
    %v3620 = vadd.f32 %v3554, %v3602
    %v3621 = vadd.f32 %v3557, %v3605
    %v3622 = vmul.f32 %v3606, 0.5
    %v3623 = vmul.f32 %v3607, 0.5
    %v3624 = vmul.f32 %v3608, 0.5
    %v3625 = vmul.f32 %v3609, 0.5
    %v3626 = vmul.f32 %v3610, 0.5
    %v3627 = vmul.f32 %v3611, 0.5
    %v3628 = vmul.f32 %v3612, 0.5
    %v3629 = vmul.f32 %v3613, 0.5
    %v3630 = vmul.f32 %v3614, 0.5
    %v3631 = vmul.f32 %v3615, 0.5
    %v3632 = vmul.f32 %v3616, 0.5
    %v3633 = vmul.f32 %v3617, 0.5
    %v3634 = vmul.f32 %v3618, 0.5
    %v3635 = vmul.f32 %v3619, 0.5
    %v3636 = vmul.f32 %v3620, 0.5
    %v3637 = vmul.f32 %v3621, 0.5
    %v3638 = vadd.f32 %v3622, 0.0
    %v3639 = vadd.f32 %v3623, 0.0
    %v3640 = vadd.f32 %v3624, 0.0
    %v3641 = vadd.f32 %v3625, 0.0
    %v3642 = vadd.f32 %v3626, 0.0
    %v3643 = vadd.f32 %v3627, 0.0
    %v3644 = vadd.f32 %v3628, 0.0
    %v3645 = vadd.f32 %v3629, 0.0
    %v3646 = vadd.f32 %v3630, 0.0
    %v3647 = vadd.f32 %v3631, 0.0
    %v3648 = vadd.f32 %v3632, 0.0
    %v3649 = vadd.f32 %v3633, 0.0
    %v3650 = vadd.f32 %v3634, 0.0
    %v3651 = vadd.f32 %v3635, 0.0
    %v3652 = vadd.f32 %v3636, 0.0
    %v3653 = vadd.f32 %v3637, 0.0
    %v3654 = vmax.f32 %v3638, %v3642
    %v3655 = vmax.f32 %v3639, %v3643
    %v3656 = vmax.f32 %v3640, %v3644
    %v3657 = vmax.f32 %v3641, %v3645
    %v3658 = vmax.f32 %v3654, %v3646
    %v3659 = vmax.f32 %v3655, %v3647
    %v3660 = vmax.f32 %v3656, %v3648
    %v3661 = vmax.f32 %v3657, %v3649
    %v3662 = vmax.f32 %v3658, %v3650
    %v3663 = vmax.f32 %v3659, %v3651
    %v3664 = vmax.f32 %v3660, %v3652
    %v3665 = vmax.f32 %v3661, %v3653
    %v3666 = vmax.f32 %v3662, %v3663
    %v3667 = vmax.f32 %v3664, %v3665
    %v3668 = vmax.f32 %v3666, %v3667
    %v3669 = vrot.slane %v3668, 4
    %v3670 = vmax.f32 %v3668, %v3669
    %v3671 = vrot.slane %v3670, 2
    %v3672 = vmax.f32 %v3670, %v3671
    %v3673 = vrot.slane %v3672, 1
    %v3674 = vmax.f32 %v3672, %v3673
    %v3675 = vsub.f32 %v3638, %v3674
    %v3676 = vsub.f32 %v3639, %v3674
    %v3677 = vsub.f32 %v3640, %v3674
    %v3678 = vsub.f32 %v3641, %v3674
    %v3679 = vsub.f32 %v3642, %v3674
    %v3680 = vsub.f32 %v3643, %v3674
    %v3681 = vsub.f32 %v3644, %v3674
    %v3682 = vsub.f32 %v3645, %v3674
    %v3683 = vsub.f32 %v3646, %v3674
    %v3684 = vsub.f32 %v3647, %v3674
    %v3685 = vsub.f32 %v3648, %v3674
    %v3686 = vsub.f32 %v3649, %v3674
    %v3687 = vsub.f32 %v3650, %v3674
    %v3688 = vsub.f32 %v3651, %v3674
    %v3689 = vsub.f32 %v3652, %v3674
    %v3690 = vsub.f32 %v3653, %v3674
    %v3691 = vmul.f32 %v3675, 1.442695
    %v3692 = vpow.pop %v3691
    %v3693 = vmul.f32 %v3676, 1.442695
    %v3694 = vpow.pop %v3693
    %v3695 = vmul.f32 %v3677, 1.442695
    %v3696 = vpow.pop %v3695
    %v3697 = vmul.f32 %v3678, 1.442695
    %v3698 = vpow.pop %v3697
    %v3699 = vmul.f32 %v3679, 1.442695
    %v3700 = vpow.pop %v3699
    %v3701 = vmul.f32 %v3680, 1.442695
    %v3702 = vpow.pop %v3701
    %v3703 = vmul.f32 %v3681, 1.442695
    %v3704 = vpow.pop %v3703
    %v3705 = vmul.f32 %v3682, 1.442695
    %v3706 = vpow.pop %v3705
    %v3707 = vmul.f32 %v3683, 1.442695
    %v3708 = vpow.pop %v3707
    %v3709 = vmul.f32 %v3684, 1.442695
    %v3710 = vpow.pop %v3709
    %v3711 = vmul.f32 %v3685, 1.442695
    %v3712 = vpow.pop %v3711
    %v3713 = vmul.f32 %v3686, 1.442695
    %v3714 = vpow.pop %v3713
    %v3715 = vmul.f32 %v3687, 1.442695
    %v3716 = vpow.pop %v3715
    %v3717 = vmul.f32 %v3688, 1.442695
    %v3718 = vpow.pop %v3717
    %v3719 = vmul.f32 %v3689, 1.442695
    %v3720 = vpow.pop %v3719
    %v3721 = vmul.f32 %v3690, 1.442695
    %v3722 = vpow.pop %v3721
    %v3723 = vadd.f32 %v3692, %v3694
    %v3724 = vadd.f32 %v3723, %v3696
    %v3725 = vadd.f32 %v3724, %v3698
    %v3726 = vadd.f32 %v3725, %v3700
    %v3727 = vadd.f32 %v3726, %v3702
    %v3728 = vadd.f32 %v3727, %v3704
    %v3729 = vadd.f32 %v3728, %v3706
    %v3730 = vadd.f32 %v3729, %v3708
    %v3731 = vadd.f32 %v3730, %v3710
    %v3732 = vadd.f32 %v3731, %v3712
    %v3733 = vadd.f32 %v3732, %v3714
    %v3734 = vadd.f32 %v3733, %v3716
    %v3735 = vadd.f32 %v3734, %v3718
    %v3736 = vadd.f32 %v3735, %v3720
    %v3737 = vadd.f32 %v3736, %v3722
    %v3738 = vrot.slane %v3737, 4
    %v3739 = vadd.f32 %v3737, %v3738
    %v3740 = vrot.slane %v3739, 2
    %v3741 = vadd.f32 %v3739, %v3740
    %v3742 = vrot.slane %v3741, 1
    %v3743 = vadd.f32 %v3741, %v3742
    %v3744 = vrcp.pop %v3743
    %v3745 = vmul.f32 %v3692, %v3744
    %v3746 = vmul.f32 %v3694, %v3744
    %v3747 = vmul.f32 %v3696, %v3744
    %v3748 = vmul.f32 %v3698, %v3744
    %v3749 = vmul.f32 %v3700, %v3744
    %v3750 = vmul.f32 %v3702, %v3744
    %v3751 = vmul.f32 %v3704, %v3744
    %v3752 = vmul.f32 %v3706, %v3744
    %v3753 = vmul.f32 %v3708, %v3744
    %v3754 = vmul.f32 %v3710, %v3744
    %v3755 = vmul.f32 %v3712, %v3744
    %v3756 = vmul.f32 %v3714, %v3744
    %v3757 = vmul.f32 %v3716, %v3744
    %v3758 = vmul.f32 %v3718, %v3744
    %v3759 = vmul.f32 %v3720, %v3744
    %v3760 = vmul.f32 %v3722, %v3744
    %v3761 = vmul.f32 %v3745, %v3357
    %v3762 = vmul.f32 %v3746, %v3358
    %v3763 = vmul.f32 %v3747, %v3359
    %v3764 = vmul.f32 %v3748, %v3360
    %v3765 = vmul.f32 %v3749, %v3361
    %v3766 = vmul.f32 %v3750, %v3362
    %v3767 = vmul.f32 %v3751, %v3363
    %v3768 = vmul.f32 %v3752, %v3364
    %v3769 = vmul.f32 %v3753, %v3365
    %v3770 = vmul.f32 %v3754, %v3366
    %v3771 = vmul.f32 %v3755, %v3367
    %v3772 = vmul.f32 %v3756, %v3368
    %v3773 = vmul.f32 %v3757, %v3369
    %v3774 = vmul.f32 %v3758, %v3370
    %v3775 = vmul.f32 %v3759, %v3371
    %v3776 = vmul.f32 %v3760, %v3372
    %v3777 = vmul.f32 %v3745, %v3373
    %v3778 = vmul.f32 %v3746, %v3374
    %v3779 = vmul.f32 %v3747, %v3375
    %v3780 = vmul.f32 %v3748, %v3376
    %v3781 = vmul.f32 %v3749, %v3377
    %v3782 = vmul.f32 %v3750, %v3378
    %v3783 = vmul.f32 %v3751, %v3379
    %v3784 = vmul.f32 %v3752, %v3380
    %v3785 = vmul.f32 %v3753, %v3381
    %v3786 = vmul.f32 %v3754, %v3382
    %v3787 = vmul.f32 %v3755, %v3383
    %v3788 = vmul.f32 %v3756, %v3384
    %v3789 = vmul.f32 %v3757, %v3385
    %v3790 = vmul.f32 %v3758, %v3386
    %v3791 = vmul.f32 %v3759, %v3387
    %v3792 = vmul.f32 %v3760, %v3388
    %v3793 = vsel %vm3389, %v3761, 0.0
    %v3794 = vsel %vm3389, %v3762, 0.0
    %v3795 = vadd.f32 %v3793, %v3794
    %v3796 = vsel %vm3389, %v3763, 0.0
    %v3797 = vadd.f32 %v3795, %v3796
    %v3798 = vsel %vm3389, %v3764, 0.0
    %v3799 = vadd.f32 %v3797, %v3798
    %v3800 = vsel %vm3389, %v3765, 0.0
    %v3801 = vadd.f32 %v3799, %v3800
    %v3802 = vsel %vm3389, %v3766, 0.0
    %v3803 = vadd.f32 %v3801, %v3802
    %v3804 = vsel %vm3389, %v3767, 0.0
    %v3805 = vadd.f32 %v3803, %v3804
    %v3806 = vsel %vm3389, %v3768, 0.0
    %v3807 = vadd.f32 %v3805, %v3806
    %v3808 = vsel %vm3389, %v3769, 0.0
    %v3809 = vadd.f32 %v3807, %v3808
    %v3810 = vsel %vm3389, %v3770, 0.0
    %v3811 = vadd.f32 %v3809, %v3810
    %v3812 = vsel %vm3389, %v3771, 0.0
    %v3813 = vadd.f32 %v3811, %v3812
    %v3814 = vsel %vm3389, %v3772, 0.0
    %v3815 = vadd.f32 %v3813, %v3814
    %v3816 = vsel %vm3389, %v3773, 0.0
    %v3817 = vadd.f32 %v3815, %v3816
    %v3818 = vsel %vm3389, %v3774, 0.0
    %v3819 = vadd.f32 %v3817, %v3818
    %v3820 = vsel %vm3389, %v3775, 0.0
    %v3821 = vadd.f32 %v3819, %v3820
    %v3822 = vsel %vm3389, %v3776, 0.0
    %v3823 = vadd.f32 %v3821, %v3822
    %v3824 = vrot.slane %v3823, 4
    %v3825 = vadd.f32 %v3823, %v3824
    %v3826 = vrot.slane %v3825, 2
    %v3827 = vadd.f32 %v3825, %v3826
    %v3828 = vrot.slane %v3827, 1
    %v3829 = vadd.f32 %v3827, %v3828
    %v3830 = vsel %vm3389, %v3777, 0.0
    %v3831 = vsel %vm3389, %v3778, 0.0
    %v3832 = vadd.f32 %v3830, %v3831
    %v3833 = vsel %vm3389, %v3779, 0.0
    %v3834 = vadd.f32 %v3832, %v3833
    %v3835 = vsel %vm3389, %v3780, 0.0
    %v3836 = vadd.f32 %v3834, %v3835
    %v3837 = vsel %vm3389, %v3781, 0.0
    %v3838 = vadd.f32 %v3836, %v3837
    %v3839 = vsel %vm3389, %v3782, 0.0
    %v3840 = vadd.f32 %v3838, %v3839
    %v3841 = vsel %vm3389, %v3783, 0.0
    %v3842 = vadd.f32 %v3840, %v3841
    %v3843 = vsel %vm3389, %v3784, 0.0
    %v3844 = vadd.f32 %v3842, %v3843
    %v3845 = vsel %vm3389, %v3785, 0.0
    %v3846 = vadd.f32 %v3844, %v3845
    %v3847 = vsel %vm3389, %v3786, 0.0
    %v3848 = vadd.f32 %v3846, %v3847
    %v3849 = vsel %vm3389, %v3787, 0.0
    %v3850 = vadd.f32 %v3848, %v3849
    %v3851 = vsel %vm3389, %v3788, 0.0
    %v3852 = vadd.f32 %v3850, %v3851
    %v3853 = vsel %vm3389, %v3789, 0.0
    %v3854 = vadd.f32 %v3852, %v3853
    %v3855 = vsel %vm3389, %v3790, 0.0
    %v3856 = vadd.f32 %v3854, %v3855
    %v3857 = vsel %vm3389, %v3791, 0.0
    %v3858 = vadd.f32 %v3856, %v3857
    %v3859 = vsel %vm3389, %v3792, 0.0
    %v3860 = vadd.f32 %v3858, %v3859
    %v3861 = vrot.slane %v3860, 4
    %v3862 = vadd.f32 %v3860, %v3861
    %v3863 = vrot.slane %v3862, 2
    %v3864 = vadd.f32 %v3862, %v3863
    %v3865 = vrot.slane %v3864, 1
    %v3866 = vadd.f32 %v3864, %v3865
    %v3867 = vand.u32 2147483647, %v3829
    %v3868 = vand.u32 2147483647, %v3866
    %v3869 = vmul.f32 %v3829, %v3867
    %v3870 = vmul.f32 %v3866, %v3868
    %v3871 = vmul.f32 %v3829, %v3829
    %v3872 = vmul.f32 %v3866, %v3866
    %v3873 = vadd.f32 %v3871, 1.0
    %v3874 = vadd.f32 %v3872, 1.0
    %v3875 = vrcp.pop %v3873
    %v3876 = vmul.f32 %v3869, %v3875
    %v3877 = vrcp.pop %v3874
    %v3878 = vmul.f32 %v3870, %v3877
    %v3879 = vmul.f32 %v3357, %v3876
    %v3880 = vmul.f32 %v3358, %v3876
    %v3881 = vmul.f32 %v3359, %v3876
    %v3882 = vmul.f32 %v3360, %v3876
    %v3883 = vmul.f32 %v3361, %v3876
    %v3884 = vmul.f32 %v3362, %v3876
    %v3885 = vmul.f32 %v3363, %v3876
    %v3886 = vmul.f32 %v3364, %v3876
    %v3887 = vmul.f32 %v3365, %v3876
    %v3888 = vmul.f32 %v3366, %v3876
    %v3889 = vmul.f32 %v3367, %v3876
    %v3890 = vmul.f32 %v3368, %v3876
    %v3891 = vmul.f32 %v3369, %v3876
    %v3892 = vmul.f32 %v3370, %v3876
    %v3893 = vmul.f32 %v3371, %v3876
    %v3894 = vmul.f32 %v3372, %v3876
    %v3895 = vmul.f32 %v3373, %v3878
    %v3896 = vmul.f32 %v3374, %v3878
    %v3897 = vmul.f32 %v3375, %v3878
    %v3898 = vmul.f32 %v3376, %v3878
    %v3899 = vmul.f32 %v3377, %v3878
    %v3900 = vmul.f32 %v3378, %v3878
    %v3901 = vmul.f32 %v3379, %v3878
    %v3902 = vmul.f32 %v3380, %v3878
    %v3903 = vmul.f32 %v3381, %v3878
    %v3904 = vmul.f32 %v3382, %v3878
    %v3905 = vmul.f32 %v3383, %v3878
    %v3906 = vmul.f32 %v3384, %v3878
    %v3907 = vmul.f32 %v3385, %v3878
    %v3908 = vmul.f32 %v3386, %v3878
    %v3909 = vmul.f32 %v3387, %v3878
    %v3910 = vmul.f32 %v3388, %v3878
    %v3911 = vsel %vm3389, %v3879, 0.0
    %3912 = vadd.xlane.f32.xlu0 %v3911
    %v3913 = vpop.xlane.xlu0 %3912
    %v3914 = vsel %vm3389, %v3880, 0.0
    %3915 = vadd.xlane.f32.xlu0 %v3914
    %v3916 = vpop.xlane.xlu0 %3915
    %v3917 = vsel %vm3389, %v3881, 0.0
    %3918 = vadd.xlane.f32.xlu0 %v3917
    %v3919 = vpop.xlane.xlu0 %3918
    %v3920 = vsel %vm3389, %v3882, 0.0
    %3921 = vadd.xlane.f32.xlu0 %v3920
    %v3922 = vpop.xlane.xlu0 %3921
    %v3923 = vsel %vm3389, %v3883, 0.0
    %3924 = vadd.xlane.f32.xlu0 %v3923
    %v3925 = vpop.xlane.xlu0 %3924
    %v3926 = vsel %vm3389, %v3884, 0.0
    %3927 = vadd.xlane.f32.xlu0 %v3926
    %v3928 = vpop.xlane.xlu0 %3927
    %v3929 = vsel %vm3389, %v3885, 0.0
    %3930 = vadd.xlane.f32.xlu0 %v3929
    %v3931 = vpop.xlane.xlu0 %3930
    %v3932 = vsel %vm3389, %v3886, 0.0
    %3933 = vadd.xlane.f32.xlu0 %v3932
    %v3934 = vpop.xlane.xlu0 %3933
    %v3935 = vsel %vm3389, %v3887, 0.0
    %3936 = vadd.xlane.f32.xlu0 %v3935
    %v3937 = vpop.xlane.xlu0 %3936
    %v3938 = vsel %vm3389, %v3888, 0.0
    %3939 = vadd.xlane.f32.xlu0 %v3938
    %v3940 = vpop.xlane.xlu0 %3939
    %v3941 = vsel %vm3389, %v3889, 0.0
    %3942 = vadd.xlane.f32.xlu0 %v3941
    %v3943 = vpop.xlane.xlu0 %3942
    %v3944 = vsel %vm3389, %v3890, 0.0
    %3945 = vadd.xlane.f32.xlu0 %v3944
    %v3946 = vpop.xlane.xlu0 %3945
    %v3947 = vsel %vm3389, %v3891, 0.0
    %3948 = vadd.xlane.f32.xlu0 %v3947
    %v3949 = vpop.xlane.xlu0 %3948
    %v3950 = vsel %vm3389, %v3892, 0.0
    %3951 = vadd.xlane.f32.xlu0 %v3950
    %v3952 = vpop.xlane.xlu0 %3951
    %v3953 = vsel %vm3389, %v3893, 0.0
    %3954 = vadd.xlane.f32.xlu0 %v3953
    %v3955 = vpop.xlane.xlu0 %3954
    %v3956 = vsel %vm3389, %v3894, 0.0
    %3957 = vadd.xlane.f32.xlu0 %v3956
    %v3958 = vpop.xlane.xlu0 %3957
    %v3959 = vsel %vm3389, %v3895, 0.0
    %3960 = vadd.xlane.f32.xlu0 %v3959
    %v3961 = vpop.xlane.xlu0 %3960
    %v3962 = vsel %vm3389, %v3896, 0.0
    %3963 = vadd.xlane.f32.xlu0 %v3962
    %v3964 = vpop.xlane.xlu0 %3963
    %v3965 = vsel %vm3389, %v3897, 0.0
    %3966 = vadd.xlane.f32.xlu0 %v3965
    %v3967 = vpop.xlane.xlu0 %3966
    %v3968 = vsel %vm3389, %v3898, 0.0
    %3969 = vadd.xlane.f32.xlu0 %v3968
    %v3970 = vpop.xlane.xlu0 %3969
    %v3971 = vsel %vm3389, %v3899, 0.0
    %3972 = vadd.xlane.f32.xlu0 %v3971
    %v3973 = vpop.xlane.xlu0 %3972
    %v3974 = vsel %vm3389, %v3900, 0.0
    %3975 = vadd.xlane.f32.xlu0 %v3974
    %v3976 = vpop.xlane.xlu0 %3975
    %v3977 = vsel %vm3389, %v3901, 0.0
    %3978 = vadd.xlane.f32.xlu0 %v3977
    %v3979 = vpop.xlane.xlu0 %3978
    %v3980 = vsel %vm3389, %v3902, 0.0
    %3981 = vadd.xlane.f32.xlu0 %v3980
    %v3982 = vpop.xlane.xlu0 %3981
    %v3983 = vsel %vm3389, %v3903, 0.0
    %3984 = vadd.xlane.f32.xlu0 %v3983
    %v3985 = vpop.xlane.xlu0 %3984
    %v3986 = vsel %vm3389, %v3904, 0.0
    %3987 = vadd.xlane.f32.xlu0 %v3986
    %v3988 = vpop.xlane.xlu0 %3987
    %v3989 = vsel %vm3389, %v3905, 0.0
    %3990 = vadd.xlane.f32.xlu0 %v3989
    %v3991 = vpop.xlane.xlu0 %3990
    %v3992 = vsel %vm3389, %v3906, 0.0
    %3993 = vadd.xlane.f32.xlu0 %v3992
    %v3994 = vpop.xlane.xlu0 %3993
    %v3995 = vsel %vm3389, %v3907, 0.0
    %3996 = vadd.xlane.f32.xlu0 %v3995
    %v3997 = vpop.xlane.xlu0 %3996
    %v3998 = vsel %vm3389, %v3908, 0.0
    %3999 = vadd.xlane.f32.xlu0 %v3998
    %v4000 = vpop.xlane.xlu0 %3999
    %v4001 = vsel %vm3389, %v3909, 0.0
    %4002 = vadd.xlane.f32.xlu0 %v4001
    %v4003 = vpop.xlane.xlu0 %4002
    %v4004 = vsel %vm3389, %v3910, 0.0
    %4005 = vadd.xlane.f32.xlu0 %v4004
    %v4006 = vpop.xlane.xlu0 %4005
    %v4007 = vadd.f32 %v3913, %v3961
    %v4008 = vadd.f32 %v3916, %v3964
    %v4009 = vadd.f32 %v3919, %v3967
    %v4010 = vadd.f32 %v3922, %v3970
    %v4011 = vadd.f32 %v3925, %v3973
    %v4012 = vadd.f32 %v3928, %v3976
    %v4013 = vadd.f32 %v3931, %v3979
    %v4014 = vadd.f32 %v3934, %v3982
    %v4015 = vadd.f32 %v3937, %v3985
    %v4016 = vadd.f32 %v3940, %v3988
    %v4017 = vadd.f32 %v3943, %v3991
    %v4018 = vadd.f32 %v3946, %v3994
    %v4019 = vadd.f32 %v3949, %v3997
    %v4020 = vadd.f32 %v3952, %v4000
    %v4021 = vadd.f32 %v3955, %v4003
    %v4022 = vadd.f32 %v3958, %v4006
    %v4023 = vmul.f32 %v4007, 0.5
    %v4024 = vmul.f32 %v4008, 0.5
    %v4025 = vmul.f32 %v4009, 0.5
    %v4026 = vmul.f32 %v4010, 0.5
    %v4027 = vmul.f32 %v4011, 0.5
    %v4028 = vmul.f32 %v4012, 0.5
    %v4029 = vmul.f32 %v4013, 0.5
    %v4030 = vmul.f32 %v4014, 0.5
    %v4031 = vmul.f32 %v4015, 0.5
    %v4032 = vmul.f32 %v4016, 0.5
    %v4033 = vmul.f32 %v4017, 0.5
    %v4034 = vmul.f32 %v4018, 0.5
    %v4035 = vmul.f32 %v4019, 0.5
    %v4036 = vmul.f32 %v4020, 0.5
    %v4037 = vmul.f32 %v4021, 0.5
    %v4038 = vmul.f32 %v4022, 0.5
    %v4039 = vadd.f32 %v3638, %v4023
    %v4040 = vadd.f32 %v3639, %v4024
    %v4041 = vadd.f32 %v3640, %v4025
    %v4042 = vadd.f32 %v3641, %v4026
    %v4043 = vadd.f32 %v3642, %v4027
    %v4044 = vadd.f32 %v3643, %v4028
    %v4045 = vadd.f32 %v3644, %v4029
    %v4046 = vadd.f32 %v3645, %v4030
    %v4047 = vadd.f32 %v3646, %v4031
    %v4048 = vadd.f32 %v3647, %v4032
    %v4049 = vadd.f32 %v3648, %v4033
    %v4050 = vadd.f32 %v3649, %v4034
    %v4051 = vadd.f32 %v3650, %v4035
    %v4052 = vadd.f32 %v3651, %v4036
    %v4053 = vadd.f32 %v3652, %v4037
    %v4054 = vadd.f32 %v3653, %v4038
    %v4055 = vmax.f32 %v4039, %v4043
    %v4056 = vmax.f32 %v4040, %v4044
    %v4057 = vmax.f32 %v4041, %v4045
    %v4058 = vmax.f32 %v4042, %v4046
    %v4059 = vmax.f32 %v4055, %v4047
    %v4060 = vmax.f32 %v4056, %v4048
    %v4061 = vmax.f32 %v4057, %v4049
    %v4062 = vmax.f32 %v4058, %v4050
    %v4063 = vmax.f32 %v4059, %v4051
    %v4064 = vmax.f32 %v4060, %v4052
    %v4065 = vmax.f32 %v4061, %v4053
    %v4066 = vmax.f32 %v4062, %v4054
    %v4067 = vmax.f32 %v4063, %v4064
    %v4068 = vmax.f32 %v4065, %v4066
    %v4069 = vmax.f32 %v4067, %v4068
    %v4070 = vrot.slane %v4069, 4
    %v4071 = vmax.f32 %v4069, %v4070
    %v4072 = vrot.slane %v4071, 2
    %v4073 = vmax.f32 %v4071, %v4072
    %v4074 = vrot.slane %v4073, 1
    %v4075 = vmax.f32 %v4073, %v4074
    %v4076 = vsub.f32 %v4039, %v4075
    %v4077 = vsub.f32 %v4040, %v4075
    %v4078 = vsub.f32 %v4041, %v4075
    %v4079 = vsub.f32 %v4042, %v4075
    %v4080 = vsub.f32 %v4043, %v4075
    %v4081 = vsub.f32 %v4044, %v4075
    %v4082 = vsub.f32 %v4045, %v4075
    %v4083 = vsub.f32 %v4046, %v4075
    %v4084 = vsub.f32 %v4047, %v4075
    %v4085 = vsub.f32 %v4048, %v4075
    %v4086 = vsub.f32 %v4049, %v4075
    %v4087 = vsub.f32 %v4050, %v4075
    %v4088 = vsub.f32 %v4051, %v4075
    %v4089 = vsub.f32 %v4052, %v4075
    %v4090 = vsub.f32 %v4053, %v4075
    %v4091 = vsub.f32 %v4054, %v4075
    %v4092 = vmul.f32 %v4076, 1.442695
    %v4093 = vpow.pop %v4092
    %v4094 = vmul.f32 %v4077, 1.442695
    %v4095 = vpow.pop %v4094
    %v4096 = vmul.f32 %v4078, 1.442695
    %v4097 = vpow.pop %v4096
    %v4098 = vmul.f32 %v4079, 1.442695
    %v4099 = vpow.pop %v4098
    %v4100 = vmul.f32 %v4080, 1.442695
    %v4101 = vpow.pop %v4100
    %v4102 = vmul.f32 %v4081, 1.442695
    %v4103 = vpow.pop %v4102
    %v4104 = vmul.f32 %v4082, 1.442695
    %v4105 = vpow.pop %v4104
    %v4106 = vmul.f32 %v4083, 1.442695
    %v4107 = vpow.pop %v4106
    %v4108 = vmul.f32 %v4084, 1.442695
    %v4109 = vpow.pop %v4108
    %v4110 = vmul.f32 %v4085, 1.442695
    %v4111 = vpow.pop %v4110
    %v4112 = vmul.f32 %v4086, 1.442695
    %v4113 = vpow.pop %v4112
    %v4114 = vmul.f32 %v4087, 1.442695
    %v4115 = vpow.pop %v4114
    %v4116 = vmul.f32 %v4088, 1.442695
    %v4117 = vpow.pop %v4116
    %v4118 = vmul.f32 %v4089, 1.442695
    %v4119 = vpow.pop %v4118
    %v4120 = vmul.f32 %v4090, 1.442695
    %v4121 = vpow.pop %v4120
    %v4122 = vmul.f32 %v4091, 1.442695
    %v4123 = vpow.pop %v4122
    %v4124 = vadd.f32 %v4093, %v4095
    %v4125 = vadd.f32 %v4124, %v4097
    %v4126 = vadd.f32 %v4125, %v4099
    %v4127 = vadd.f32 %v4126, %v4101
    %v4128 = vadd.f32 %v4127, %v4103
    %v4129 = vadd.f32 %v4128, %v4105
    %v4130 = vadd.f32 %v4129, %v4107
    %v4131 = vadd.f32 %v4130, %v4109
    %v4132 = vadd.f32 %v4131, %v4111
    %v4133 = vadd.f32 %v4132, %v4113
    %v4134 = vadd.f32 %v4133, %v4115
    %v4135 = vadd.f32 %v4134, %v4117
    %v4136 = vadd.f32 %v4135, %v4119
    %v4137 = vadd.f32 %v4136, %v4121
    %v4138 = vadd.f32 %v4137, %v4123
    %v4139 = vrot.slane %v4138, 4
    %v4140 = vadd.f32 %v4138, %v4139
    %v4141 = vrot.slane %v4140, 2
    %v4142 = vadd.f32 %v4140, %v4141
    %v4143 = vrot.slane %v4142, 1
    %v4144 = vadd.f32 %v4142, %v4143
    %v4145 = vrcp.pop %v4144
    %v4146 = vmul.f32 %v4093, %v4145
    %v4147 = vmul.f32 %v4095, %v4145
    %v4148 = vmul.f32 %v4097, %v4145
    %v4149 = vmul.f32 %v4099, %v4145
    %v4150 = vmul.f32 %v4101, %v4145
    %v4151 = vmul.f32 %v4103, %v4145
    %v4152 = vmul.f32 %v4105, %v4145
    %v4153 = vmul.f32 %v4107, %v4145
    %v4154 = vmul.f32 %v4109, %v4145
    %v4155 = vmul.f32 %v4111, %v4145
    %v4156 = vmul.f32 %v4113, %v4145
    %v4157 = vmul.f32 %v4115, %v4145
    %v4158 = vmul.f32 %v4117, %v4145
    %v4159 = vmul.f32 %v4119, %v4145
    %v4160 = vmul.f32 %v4121, %v4145
    %v4161 = vmul.f32 %v4123, %v4145
    %v4162 = vmul.f32 %v4146, %v3357
    %v4163 = vmul.f32 %v4147, %v3358
    %v4164 = vmul.f32 %v4148, %v3359
    %v4165 = vmul.f32 %v4149, %v3360
    %v4166 = vmul.f32 %v4150, %v3361
    %v4167 = vmul.f32 %v4151, %v3362
    %v4168 = vmul.f32 %v4152, %v3363
    %v4169 = vmul.f32 %v4153, %v3364
    %v4170 = vmul.f32 %v4154, %v3365
    %v4171 = vmul.f32 %v4155, %v3366
    %v4172 = vmul.f32 %v4156, %v3367
    %v4173 = vmul.f32 %v4157, %v3368
    %v4174 = vmul.f32 %v4158, %v3369
    %v4175 = vmul.f32 %v4159, %v3370
    %v4176 = vmul.f32 %v4160, %v3371
    %v4177 = vmul.f32 %v4161, %v3372
    %v4178 = vmul.f32 %v4146, %v3373
    %v4179 = vmul.f32 %v4147, %v3374
    %v4180 = vmul.f32 %v4148, %v3375
    %v4181 = vmul.f32 %v4149, %v3376
    %v4182 = vmul.f32 %v4150, %v3377
    %v4183 = vmul.f32 %v4151, %v3378
    %v4184 = vmul.f32 %v4152, %v3379
    %v4185 = vmul.f32 %v4153, %v3380
    %v4186 = vmul.f32 %v4154, %v3381
    %v4187 = vmul.f32 %v4155, %v3382
    %v4188 = vmul.f32 %v4156, %v3383
    %v4189 = vmul.f32 %v4157, %v3384
    %v4190 = vmul.f32 %v4158, %v3385
    %v4191 = vmul.f32 %v4159, %v3386
    %v4192 = vmul.f32 %v4160, %v3387
    %v4193 = vmul.f32 %v4161, %v3388
    %v4194 = vsel %vm3389, %v4162, 0.0
    %v4195 = vsel %vm3389, %v4163, 0.0
    %v4196 = vadd.f32 %v4194, %v4195
    %v4197 = vsel %vm3389, %v4164, 0.0
    %v4198 = vadd.f32 %v4196, %v4197
    %v4199 = vsel %vm3389, %v4165, 0.0
    %v4200 = vadd.f32 %v4198, %v4199
    %v4201 = vsel %vm3389, %v4166, 0.0
    %v4202 = vadd.f32 %v4200, %v4201
    %v4203 = vsel %vm3389, %v4167, 0.0
    %v4204 = vadd.f32 %v4202, %v4203
    %v4205 = vsel %vm3389, %v4168, 0.0
    %v4206 = vadd.f32 %v4204, %v4205
    %v4207 = vsel %vm3389, %v4169, 0.0
    %v4208 = vadd.f32 %v4206, %v4207
    %v4209 = vsel %vm3389, %v4170, 0.0
    %v4210 = vadd.f32 %v4208, %v4209
    %v4211 = vsel %vm3389, %v4171, 0.0
    %v4212 = vadd.f32 %v4210, %v4211
    %v4213 = vsel %vm3389, %v4172, 0.0
    %v4214 = vadd.f32 %v4212, %v4213
    %v4215 = vsel %vm3389, %v4173, 0.0
    %v4216 = vadd.f32 %v4214, %v4215
    %v4217 = vsel %vm3389, %v4174, 0.0
    %v4218 = vadd.f32 %v4216, %v4217
    %v4219 = vsel %vm3389, %v4175, 0.0
    %v4220 = vadd.f32 %v4218, %v4219
    %v4221 = vsel %vm3389, %v4176, 0.0
    %v4222 = vadd.f32 %v4220, %v4221
    %v4223 = vsel %vm3389, %v4177, 0.0
    %v4224 = vadd.f32 %v4222, %v4223
    %v4225 = vrot.slane %v4224, 4
    %v4226 = vadd.f32 %v4224, %v4225
    %v4227 = vrot.slane %v4226, 2
    %v4228 = vadd.f32 %v4226, %v4227
    %v4229 = vrot.slane %v4228, 1
    %v4230 = vadd.f32 %v4228, %v4229
    %v4231 = vsel %vm3389, %v4178, 0.0
    %v4232 = vsel %vm3389, %v4179, 0.0
    %v4233 = vadd.f32 %v4231, %v4232
    %v4234 = vsel %vm3389, %v4180, 0.0
    %v4235 = vadd.f32 %v4233, %v4234
    %v4236 = vsel %vm3389, %v4181, 0.0
    %v4237 = vadd.f32 %v4235, %v4236
    %v4238 = vsel %vm3389, %v4182, 0.0
    %v4239 = vadd.f32 %v4237, %v4238
    %v4240 = vsel %vm3389, %v4183, 0.0
    %v4241 = vadd.f32 %v4239, %v4240
    %v4242 = vsel %vm3389, %v4184, 0.0
    %v4243 = vadd.f32 %v4241, %v4242
    %v4244 = vsel %vm3389, %v4185, 0.0
    %v4245 = vadd.f32 %v4243, %v4244
    %v4246 = vsel %vm3389, %v4186, 0.0
    %v4247 = vadd.f32 %v4245, %v4246
    %v4248 = vsel %vm3389, %v4187, 0.0
    %v4249 = vadd.f32 %v4247, %v4248
    %v4250 = vsel %vm3389, %v4188, 0.0
    %v4251 = vadd.f32 %v4249, %v4250
    %v4252 = vsel %vm3389, %v4189, 0.0
    %v4253 = vadd.f32 %v4251, %v4252
    %v4254 = vsel %vm3389, %v4190, 0.0
    %v4255 = vadd.f32 %v4253, %v4254
    %v4256 = vsel %vm3389, %v4191, 0.0
    %v4257 = vadd.f32 %v4255, %v4256
    %v4258 = vsel %vm3389, %v4192, 0.0
    %v4259 = vadd.f32 %v4257, %v4258
    %v4260 = vsel %vm3389, %v4193, 0.0
    %v4261 = vadd.f32 %v4259, %v4260
    %v4262 = vrot.slane %v4261, 4
    %v4263 = vadd.f32 %v4261, %v4262
    %v4264 = vrot.slane %v4263, 2
    %v4265 = vadd.f32 %v4263, %v4264
    %v4266 = vrot.slane %v4265, 1
    %v4267 = vadd.f32 %v4265, %v4266
    %v4268 = vand.u32 2147483647, %v4230
    %v4269 = vand.u32 2147483647, %v4267
    %v4270 = vmul.f32 %v4230, %v4268
    %v4271 = vmul.f32 %v4267, %v4269
    %v4272 = vmul.f32 %v4230, %v4230
    %v4273 = vmul.f32 %v4267, %v4267
    %v4274 = vadd.f32 %v4272, 1.0
    %v4275 = vadd.f32 %v4273, 1.0
    %v4276 = vrcp.pop %v4274
    %v4277 = vmul.f32 %v4270, %v4276
    %v4278 = vrcp.pop %v4275
    %v4279 = vmul.f32 %v4271, %v4278
    %4280 = vst.msk [vmem:[%s3] sm:$0xff] %vm3389, %v4162
    %4281 = vst.msk [vmem:[%s3 + $0x8] sm:$0xff] %vm3389, %v4163
    %4282 = vst.msk [vmem:[%s3 + $0x10] sm:$0xff] %vm3389, %v4164
    %4283 = vst.msk [vmem:[%s3 + $0x18] sm:$0xff] %vm3389, %v4165
    %4284 = vst.msk [vmem:[%s3 + $0x20] sm:$0xff] %vm3389, %v4166
    %4285 = vst.msk [vmem:[%s3 + $0x28] sm:$0xff] %vm3389, %v4167
    %4286 = vst.msk [vmem:[%s3 + $0x30] sm:$0xff] %vm3389, %v4168
    %4287 = vst.msk [vmem:[%s3 + $0x38] sm:$0xff] %vm3389, %v4169
    %4288 = vst.msk [vmem:[%s3 + $0x40] sm:$0xff] %vm3389, %v4170
    %4289 = vst.msk [vmem:[%s3 + $0x48] sm:$0xff] %vm3389, %v4171
    %4290 = vst.msk [vmem:[%s3 + $0x50] sm:$0xff] %vm3389, %v4172
    %4291 = vst.msk [vmem:[%s3 + $0x58] sm:$0xff] %vm3389, %v4173
    %4292 = vst.msk [vmem:[%s3 + $0x60] sm:$0xff] %vm3389, %v4174
    %4293 = vst.msk [vmem:[%s3 + $0x68] sm:$0xff] %vm3389, %v4175
    %4294 = vst.msk [vmem:[%s3 + $0x70] sm:$0xff] %vm3389, %v4176
    %4295 = vst.msk [vmem:[%s3 + $0x78] sm:$0xff] %vm3389, %v4177
    %4296 = vst.msk [vmem:[%s3 + $0x80] sm:$0xff] %vm3389, %v4178
    %4297 = vst.msk [vmem:[%s3 + $0x88] sm:$0xff] %vm3389, %v4179
    %4298 = vst.msk [vmem:[%s3 + $0x90] sm:$0xff] %vm3389, %v4180
    %4299 = vst.msk [vmem:[%s3 + $0x98] sm:$0xff] %vm3389, %v4181
    %4300 = vst.msk [vmem:[%s3 + $0xa0] sm:$0xff] %vm3389, %v4182
    %4301 = vst.msk [vmem:[%s3 + $0xa8] sm:$0xff] %vm3389, %v4183
    %4302 = vst.msk [vmem:[%s3 + $0xb0] sm:$0xff] %vm3389, %v4184
    %4303 = vst.msk [vmem:[%s3 + $0xb8] sm:$0xff] %vm3389, %v4185
    %4304 = vst.msk [vmem:[%s3 + $0xc0] sm:$0xff] %vm3389, %v4186
    %4305 = vst.msk [vmem:[%s3 + $0xc8] sm:$0xff] %vm3389, %v4187
    %4306 = vst.msk [vmem:[%s3 + $0xd0] sm:$0xff] %vm3389, %v4188
    %4307 = vst.msk [vmem:[%s3 + $0xd8] sm:$0xff] %vm3389, %v4189
    %4308 = vst.msk [vmem:[%s3 + $0xe0] sm:$0xff] %vm3389, %v4190
    %4309 = vst.msk [vmem:[%s3 + $0xe8] sm:$0xff] %vm3389, %v4191
    %4310 = vst.msk [vmem:[%s3 + $0xf0] sm:$0xff] %vm3389, %v4192
    %4311 = vst.msk [vmem:[%s3 + $0xf8] sm:$0xff] %vm3389, %v4193
    %vm4314 = vcmask 1041409
    %v4315 = vsel %vm4314, %v4279, %v4277
    %vm4317 = vcmask 254976
    %4318 = vst.msk [vmem:[#allocation2] sm:$0x3] %vm4317, %v4315
    // Predicated region
    $region10: #{digitcaps_forward.1} parent=1 // pred_check
      _
    $region11: #{digitcaps_forward.1} parent=1 // pred_check_branch
      %4320 = sbr.rel (0) target = $region13
    $region12: #{digitcaps_forward.1} parent=1 // pred_region
      %s4322 = ssub.s32 32, 32
      %4323 = vsyncadd [#allocation3], %s4322
      %s4325 = sshll.u32 [#allocation2], 4
      %s4326 = int_to_ptr.vmem [resolvable:$true] %s4325
      %4328 = dma.vmem_to_hbm [thread:$0]  %s4326, 32, %s2, [#allocation3]
    $region13: #{digitcaps_forward.1} parent=1 // pred_fallthru
      _
    // Predicated region
    $region14: #{digitcaps_forward.1} parent=1 // pred_check
      _
    $region15: #{digitcaps_forward.1} parent=1 // pred_check_branch
      %4330 = sbr.rel (0) target = $region17
    $region16: #{digitcaps_forward.1} parent=1 // pred_region
      _
    $region17: #{digitcaps_forward.1} parent=1 // pred_fallthru
      _
    // Predicated region
    $region18: #{digitcaps_forward.1} parent=1 // pred_check
      _
    $region19: #{digitcaps_forward.1} parent=1 // pred_check_branch
      %4332 = sbr.rel (0) target = $region21
    $region20: #{digitcaps_forward.1} parent=1 // pred_region
      %4333 = dma.done [#allocation3], 32
    $region21: #{digitcaps_forward.1} parent=1 // pred_fallthru
      _
    // Predicated region
    $region22: #{digitcaps_forward.1} parent=1 // pred_check
      _
    $region23: #{digitcaps_forward.1} parent=1 // pred_check_branch
      %4335 = sbr.rel (0) target = $region25
    $region24: #{digitcaps_forward.1} parent=1 // pred_region
      _
    $region25: #{digitcaps_forward.1} parent=1 // pred_fallthru
      _
    %4336 = vsyncpa [#allocation3], 1

</llo_original>
